<compile_context>
chip_gen: v5e
topology: v5e:2x2
jax: 0.10.0
libtpu: 0.0.40
codegen_flags: <defaults>
</compile_context>

<pallas_src>
import functools

import jax
import jax.numpy as jnp
from jax import lax
from jax.experimental import pallas as pl
from jax.experimental.pallas import tpu as pltpu

USE_BF16 = True    # bf16 MXU operands for conv2/fc, f32 accumulation everywhere

N_O = 110          # valid flat positions per parity plane, pitch 16: o = i*16 + j (i<7, j<14)
PITCH = 16         # row pitch of the flattened parity planes
LANE = 128         # lane-aligned per-channel feature width (110 valid + 18 zero lanes)
N_CLS = 19


# ---------------------------------------------------------------------------
# The single fused kernel: whole forward pass for TB images per grid step.
# ---------------------------------------------------------------------------
def fused_forward_kernel(xf_ref, w1_ref, b1_ref, w2_ref, b2_ref,
                         wf1_ref, bf1_ref, wf2_ref, bf2_ref, wf3_ref, bf3_ref,
                         out_ref, z2s_ref):
    f32 = jnp.float32
    mm = wf1_ref.dtype                 # MXU operand dtype (bf16 or f32)
    tb = xf_ref.shape[0]               # images per grid step (static)

    # -- constants / weights hoisted out of the per-image loop (no re-broadcasts) --
    o_idx = lax.broadcasted_iota(jnp.int32, (1, N_O), 1)
    valid = (jnp.bitwise_and(o_idx, 15) < 14).astype(f32)    # zero pitch-16 pad cols j in {14,15}
    zpad1 = jnp.zeros((9, LANE - N_O), f32)                  # conv1 tap lane padding
    zpad2 = jnp.zeros((9 * 16, LANE - N_O), f32)             # conv2 tap lane padding
    zbord = jnp.zeros((16, PITCH + 1), f32)                  # z1f zero border (conv2 padding)
    w1 = w1_ref[...]                                         # (16, 9)    f32
    b1 = b1_ref[...]                                         # (16, 1)    f32
    w2 = w2_ref[...]                                         # (32, 144)  mm
    b2 = b2_ref[...]                                         # (32, 1)    f32

    def _max4(res):                    # max over four lane-aligned 128-wide chunks
        return jnp.maximum(jnp.maximum(res[:, 0:128], res[:, 128:256]),
                           jnp.maximum(res[:, 256:384], res[:, 384:512]))

    # ---------------- per-image conv stage (fori_loop over the TB images) ----------------
    def per_image(b, carry):
        xplanes = xf_ref[b]            # (16, 128): mod-4 parity planes of the padded image

        # conv1 + ReLU + 2x2 max-pool: one MXU matmul per output parity (sp, sq),
        # the 4 pooling phases lane-concatenated into N = 4*128.
        z1f = []
        for sp in range(2):
            for sq in range(2):
                chunks = []
                for di in range(2):                  # pooling phase
                    for dj in range(2):
                        rows = []
                        for kh in range(3):          # conv taps
                            for kw in range(3):
                                ar = 2 * sp + di + kh
                                ac = 2 * sq + dj + kw
                                plane = (ar % 4) * 4 + (ac % 4)
                                shift = (ar // 4) * PITCH + (ac // 4)
                                rows.append(xplanes[plane:plane + 1, shift:shift + N_O])
                        stack = jnp.concatenate(rows, axis=0)                  # (9, 110)
                        chunks.append(jnp.concatenate([stack, zpad1], axis=1))  # (9, 128)
                taps = jnp.concatenate(chunks, axis=1)                          # (9, 512)
                res = jnp.dot(w1, taps, preferred_element_type=f32)             # (16, 512)
                pooled = jnp.maximum(_max4(res)[:, :N_O] + b1, 0.0) * valid     # (16, 110)
                # zero-padded pitch-16 plane: conv2's padding=1 lives in the zero border
                z1f.append(jnp.concatenate([zbord, pooled, zbord], axis=1))     # (16, 144)

        # conv2 + ReLU + 2x2 max-pool: ONE fused MXU matmul over all 4 pooling phases.
        chunks = []
        for di in range(2):
            for dj in range(2):
                rows = []
                for kh in range(3):
                    for kw in range(3):
                        ar = di + kh
                        ac = dj + kw
                        sp = (ar - 1) % 2
                        sq = (ac - 1) % 2
                        shift = ((ar - 1) // 2 + 1) * PITCH + ((ac - 1) // 2 + 1)
                        rows.append(z1f[sp * 2 + sq][:, shift:shift + N_O])     # (16, 110)
                stack = jnp.concatenate(rows, axis=0)                           # (144, 110)
                chunks.append(jnp.concatenate([stack, zpad2], axis=1))          # (144, 128)
        taps = jnp.concatenate(chunks, axis=1).astype(mm)                       # (144, 512)
        res = jnp.dot(w2, taps, preferred_element_type=f32)                     # (32, 512)
        z2 = jnp.maximum(_max4(res) + b2, 0.0)                                  # (32, 128)
        # garbage lanes (j in {14,15} and o >= 110) hit zero rows of the fc1 weight.
        z2s_ref[b] = z2.astype(z2s_ref.dtype)
        return carry

    lax.fori_loop(0, tb, per_image, 0)

    # ---------------- batched fc1 (channel-accumulated) -> fc2 -> fc3 -> softmax ----------------
    z2all = z2s_ref[...]                                     # (tb, 32, 128)
    hacc = jnp.zeros((tb, 128), f32)
    for ch in range(32):
        hacc = hacc + jnp.dot(z2all[:, ch, :], wf1_ref[ch],
                              preferred_element_type=f32)    # (tb,128)@(128,128)
    h = jnp.maximum(hacc + bf1_ref[...], 0.0)
    h = jnp.dot(h.astype(mm), wf2_ref[...], preferred_element_type=f32) + bf2_ref[...]
    h = jnp.maximum(h, 0.0)
    z = jnp.dot(h.astype(mm), wf3_ref[...], preferred_element_type=f32) + bf3_ref[...]
    z = z - jnp.max(z, axis=-1, keepdims=True)               # numerically stable softmax
    e = jnp.exp(z)
    out_ref[...] = (e / jnp.sum(e, axis=-1, keepdims=True)).astype(out_ref.dtype)


def _const_spec(shape):
    return pl.BlockSpec(shape, lambda *_: (0,) * len(shape))


def _fused_forward(xplanes, kp, tb):
    bp = xplanes.shape[0]
    n_cls = kp['wf3'].shape[1]
    return pl.pallas_call(
        fused_forward_kernel,
        out_shape=jax.ShapeDtypeStruct((bp, n_cls), jnp.float32),
        grid=(bp // tb,),
        in_specs=[
            pl.BlockSpec((tb, 16, 128), lambda i: (i, 0, 0)),   # space-to-depth input
            _const_spec((16, 9)), _const_spec((16, 1)),         # conv1
            _const_spec((32, 144)), _const_spec((32, 1)),       # conv2
            _const_spec((32, 128, 128)), _const_spec((1, 128)),  # fc1 (channel-blocked)
            _const_spec((128, 64)), _const_spec((1, 64)),        # fc2
            _const_spec((64, n_cls)), _const_spec((1, n_cls)),   # fc3
        ],
        out_specs=pl.BlockSpec((tb, n_cls), lambda i: (i, 0)),
        scratch_shapes=[pltpu.VMEM((tb, 32, 128), kp['wf1'].dtype)],  # per-image features
        compiler_params=pltpu.CompilerParams(
            dimension_semantics=("parallel",)),
    )(xplanes, kp['w1'], kp['b1'], kp['w2'], kp['b2'],
      kp['wf1'], kp['bf1'], kp['wf2'], kp['bf2'], kp['wf3'], kp['bf3'])


# ---------------------------------------------------------------------------
# Wrapper-side input relabelling (tiny, same byte count as the input):
# pad the 28x56 image to 32x64, decompose mod-4 in both spatial dims into 16
# planes of shape (8, 16) and flatten each row-major -> (B, 16, 128).
# ---------------------------------------------------------------------------
def _space_to_depth4(x_nchw):
    B = x_nchw.shape[0]
    xp = jnp.pad(x_nchw[:, 0], ((0, 0), (1, 3), (1, 3)))      # (B, 32, 60): conv pad=1 border
    xp = jnp.pad(xp, ((0, 0), (0, 0), (0, 4)))                # (B, 32, 64): 16 cols per residue
    xp = xp.reshape(B, 8, 4, 16, 4)                           # [b, m, r%4, n, c%4]
    xp = jnp.transpose(xp, (0, 2, 4, 1, 3))                   # (B, 4, 4, 8, 16)
    return xp.reshape(B, 16, 128)


def _choose_tb(B):
    # power-of-two batch tile, >= 8 (sublane-aligned), <= 64, and aiming for >= 2
    # grid steps when the batch allows it (v7x megacore split).
    half = max(1, (B + 1) // 2)
    tb = 1 << (half - 1).bit_length() if half > 1 else 1
    return max(8, min(64, tb))


@functools.partial(jax.jit, static_argnames=("tb",))
def mnist_addition_cnn(x_nchw, kparams, tb=None):
    B = x_nchw.shape[0]
    if tb is None:
        tb = _choose_tb(B)
    bp = ((B + tb - 1) // tb) * tb
    if bp != B:                                    # pad the batch tail with zero images
        x_nchw = jnp.pad(x_nchw, ((0, bp - B), (0, 0), (0, 0), (0, 0)))
    xplanes = _space_to_depth4(x_nchw)             # layout plumbing only
    out = _fused_forward(xplanes, kparams, tb)     # (bp, 19)
    return out[:B]


# ---------------------------------------------------------------------------
# Parameters: PyTorch-layout init + one-time kernel re-layout.
# ---------------------------------------------------------------------------
def init_params(key):
    ks = jax.random.split(key, 10)

    def u(k, shape, scale):
        return jax.random.uniform(k, shape, jnp.float32, -1.0, 1.0) * scale

    return dict(
        conv1_w=u(ks[0], (3, 3, 1, 16), 0.3),      # HWIO
        conv1_b=u(ks[1], (1, 16), 0.1),
        conv2_w=u(ks[2], (3, 3, 16, 32), 0.1),     # HWIO
        conv2_b=u(ks[3], (1, 32), 0.1),
        fc1_w=u(ks[4], (32 * 7 * 14, 128), 0.02),  # rows in PyTorch (C,H,W)-flatten order
        fc1_b=u(ks[5], (1, 128), 0.02),
        fc2_w=u(ks[6], (128, 64), 0.05),
        fc2_b=u(ks[7], (1, 64), 0.05),
        fc3_w=u(ks[8], (64, 19), 0.1),
        fc3_b=u(ks[9], (1, 19), 0.1),
    )


def prepare_kernel_params(params, use_bf16=USE_BF16):
    """One-time re-layout of the weights for the fused kernel."""
    mm = jnp.bfloat16 if use_bf16 else jnp.float32
    w1 = params['conv1_w'].reshape(9, 16).T                    # (16, 9)
    b1 = params['conv1_b'].reshape(16, 1)
    w2 = params['conv2_w'].reshape(9 * 16, 32).T               # (32, 144)
    b2 = params['conv2_b'].reshape(32, 1)
    # fc1: fold the PyTorch (C,H,W) flatten, the pitch-16 padding columns and the
    # 128-lane channel alignment into zero rows of a (32, 128, 128) blocked weight.
    wf1 = params['fc1_w'].reshape(32, 7, 14, 128)
    wf1 = jnp.pad(wf1, ((0, 0), (0, 0), (0, 2), (0, 0)))       # j pad 14 -> 16
    wf1 = wf1.reshape(32, 112, 128)
    wf1 = jnp.pad(wf1, ((0, 0), (0, 16), (0, 0)))              # lane pad 112 -> 128
    return dict(
        w1=w1, b1=b1,
        w2=w2.astype(mm), b2=b2,
        wf1=wf1.astype(mm), bf1=params['fc1_b'],
        wf2=params['fc2_w'].astype(mm), bf2=params['fc2_b'],
        wf3=params['fc3_w'].astype(mm), bf3=params['fc3_b'],
    )


# ---------------------------------------------------------------------------
# Pure-JAX reference (mirrors the PyTorch forward) for correctness checking.
# ---------------------------------------------------------------------------
def reference_forward(x_nchw, params):
    hp = jax.lax.Precision.HIGHEST

    def conv(x, w_hwio, b):
        y = jax.lax.conv_general_dilated(
            x, w_hwio, window_strides=(1, 1), padding=((1, 1), (1, 1)),
            dimension_numbers=('NCHW', 'HWIO', 'NCHW'), precision=hp)
        return y + b.reshape(1, -1, 1, 1)

    def pool(x):
        return jax.lax.reduce_window(x, -jnp.inf, jax.lax.max,
                                     (1, 1, 2, 2), (1, 1, 2, 2), 'VALID')

    x = pool(jax.nn.relu(conv(x_nchw, params['conv1_w'], params['conv1_b'])))
    x = pool(jax.nn.relu(conv(x, params['conv2_w'], params['conv2_b'])))
    x = x.reshape(x.shape[0], -1)
    x = jax.nn.relu(jnp.dot(x, params['fc1_w'], precision=hp) + params['fc1_b'])
    x = jax.nn.relu(jnp.dot(x, params['fc2_w'], precision=hp) + params['fc2_b'])
    z = jnp.dot(x, params['fc3_w'], precision=hp) + params['fc3_b']
    return jax.nn.softmax(z, axis=1)


if __name__ == "__main__":
    key = jax.random.PRNGKey(0)
    k_x, k_p = jax.random.split(key)
    params = init_params(k_p)
    kparams = prepare_kernel_params(params, use_bf16=USE_BF16)

    # MNIST-addition input: two 28x28 digits side by side -> (B, 1, 28, 56), NCHW.
    x = jax.random.uniform(k_x, (2, 1, 28, 56), jnp.float32)

    out = jax.block_until_ready(mnist_addition_cnn(x, kparams))

    assert out.shape == (2, N_CLS)
    assert bool(jnp.allclose(jnp.sum(out, axis=1), 1.0, atol=1e-5))
    ref = reference_forward(x, params)
    tol = 2e-2 if USE_BF16 else 2e-3
    assert bool(jnp.allclose(out, ref, atol=tol, rtol=tol)), \
        float(jnp.max(jnp.abs(out - ref)))
    print("KERNEL_OK")
</pallas_src>

<mosaic_0001>
module attributes {stable_mosaic.version = 11 : i64} {
  func.func @fused_forward_kernel(%arg0: i32, %arg1: memref<8x16x128xf32, #tpu.memory_space<vmem>>, %arg2: memref<16x9xf32, #tpu.memory_space<vmem>>, %arg3: memref<16x1xf32, #tpu.memory_space<vmem>>, %arg4: memref<32x144xbf16, #tpu.memory_space<vmem>>, %arg5: memref<32x1xf32, #tpu.memory_space<vmem>>, %arg6: memref<32x128x128xbf16, #tpu.memory_space<vmem>>, %arg7: memref<1x128xf32, #tpu.memory_space<vmem>>, %arg8: memref<128x64xbf16, #tpu.memory_space<vmem>>, %arg9: memref<1x64xf32, #tpu.memory_space<vmem>>, %arg10: memref<64x19xbf16, #tpu.memory_space<vmem>>, %arg11: memref<1x19xf32, #tpu.memory_space<vmem>>, %arg12: memref<8x19xf32, #tpu.memory_space<vmem>>, %arg13: memref<8x32x128xbf16, #tpu.memory_space<vmem>>) attributes {dimension_semantics = [#tpu.dimension_semantics<parallel>], iteration_bounds = array<i64: 1>, scalar_prefetch = 0 : i64, scratch_operands = 1 : i64, tpu.core_type = #tpu.core_type<tc>, window_params = [{transform_indices = @transform_0, window_bounds = array<i64: 8, 16, 128>}, {pipeline_mode = #tpu.pipeline_mode<synchronous>, transform_indices = @transform_1, window_bounds = array<i64: 16, 9>}, {pipeline_mode = #tpu.pipeline_mode<synchronous>, transform_indices = @transform_2, window_bounds = array<i64: 16, 1>}, {pipeline_mode = #tpu.pipeline_mode<synchronous>, transform_indices = @transform_3, window_bounds = array<i64: 32, 144>}, {pipeline_mode = #tpu.pipeline_mode<synchronous>, transform_indices = @transform_4, window_bounds = array<i64: 32, 1>}, {pipeline_mode = #tpu.pipeline_mode<synchronous>, transform_indices = @transform_5, window_bounds = array<i64: 32, 128, 128>}, {pipeline_mode = #tpu.pipeline_mode<synchronous>, transform_indices = @transform_6, window_bounds = array<i64: 1, 128>}, {pipeline_mode = #tpu.pipeline_mode<synchronous>, transform_indices = @transform_7, window_bounds = array<i64: 128, 64>}, {pipeline_mode = #tpu.pipeline_mode<synchronous>, transform_indices = @transform_8, window_bounds = array<i64: 1, 64>}, {pipeline_mode = #tpu.pipeline_mode<synchronous>, transform_indices = @transform_9, window_bounds = array<i64: 64, 19>}, {pipeline_mode = #tpu.pipeline_mode<synchronous>, transform_indices = @transform_10, window_bounds = array<i64: 1, 19>}, {transform_indices = @transform_11, window_bounds = array<i64: 8, 19>}]} {
    %0 = tpu.iota {dimensions = array<i32: 1>} : vector<1x110xi32>
    %c15_i32 = arith.constant 15 : i32
    %1 = vector.broadcast %c15_i32 : i32 to vector<1x110xi32>
    %2 = arith.andi %0, %1 : vector<1x110xi32>
    %c14_i32 = arith.constant 14 : i32
    %3 = vector.broadcast %c14_i32 : i32 to vector<1x110xi32>
    %4 = arith.cmpi slt, %2, %3 : vector<1x110xi32>
    %5 = arith.extui %4 : vector<1x110xi1> to vector<1x110xi32>
    %6 = arith.sitofp %5 : vector<1x110xi32> to vector<1x110xf32>
    %cst = arith.constant 0.000000e+00 : f32
    %7 = vector.broadcast %cst : f32 to vector<9x18xf32>
    %cst_0 = arith.constant 0.000000e+00 : f32
    %8 = vector.broadcast %cst_0 : f32 to vector<144x18xf32>
    %cst_1 = arith.constant 0.000000e+00 : f32
    %9 = vector.broadcast %cst_1 : f32 to vector<16x17xf32>
    %c0 = arith.constant 0 : index
    %c0_2 = arith.constant 0 : index
    %10 = vector.load %arg2[%c0, %c0_2] : memref<16x9xf32, #tpu.memory_space<vmem>>, vector<16x9xf32>
    %c0_3 = arith.constant 0 : index
    %c0_4 = arith.constant 0 : index
    %11 = vector.load %arg3[%c0_3, %c0_4] : memref<16x1xf32, #tpu.memory_space<vmem>>, vector<16x1xf32>
    %c0_5 = arith.constant 0 : index
    %c0_6 = arith.constant 0 : index
    %12 = vector.load %arg4[%c0_5, %c0_6] : memref<32x144xbf16, #tpu.memory_space<vmem>>, vector<32x144xbf16>
    %c0_7 = arith.constant 0 : index
    %c0_8 = arith.constant 0 : index
    %13 = vector.load %arg5[%c0_7, %c0_8] : memref<32x1xf32, #tpu.memory_space<vmem>>, vector<32x1xf32>
    %c0_i32 = arith.constant 0 : i32
    %c8_i32 = arith.constant 8 : i32
    %14 = arith.addi %c0_i32, %c8_i32 : i32
    %c1_i32 = arith.constant 1 : i32
    scf.for %arg14 = %c0_i32 to %14 step %c1_i32  : i32 {
      %238 = arith.index_cast %arg14 : i32 to index
      %c0_129 = arith.constant 0 : index
      %c0_130 = arith.constant 0 : index
      %239 = vector.load %arg1[%238, %c0_129, %c0_130] : memref<8x16x128xf32, #tpu.memory_space<vmem>>, vector<1x16x128xf32>
      %240 = vector.shape_cast %239 : vector<1x16x128xf32> to vector<16x128xf32>
      %241 = vector.extract_strided_slice %240 {offsets = [0, 0], sizes = [1, 110], strides = [1, 1]} : vector<16x128xf32> to vector<1x110xf32>
      %242 = vector.extract_strided_slice %240 {offsets = [1, 0], sizes = [1, 110], strides = [1, 1]} : vector<16x128xf32> to vector<1x110xf32>
      %243 = vector.extract_strided_slice %240 {offsets = [2, 0], sizes = [1, 110], strides = [1, 1]} : vector<16x128xf32> to vector<1x110xf32>
      %244 = vector.extract_strided_slice %240 {offsets = [4, 0], sizes = [1, 110], strides = [1, 1]} : vector<16x128xf32> to vector<1x110xf32>
      %245 = vector.extract_strided_slice %240 {offsets = [5, 0], sizes = [1, 110], strides = [1, 1]} : vector<16x128xf32> to vector<1x110xf32>
      %246 = vector.extract_strided_slice %240 {offsets = [6, 0], sizes = [1, 110], strides = [1, 1]} : vector<16x128xf32> to vector<1x110xf32>
      %247 = vector.extract_strided_slice %240 {offsets = [8, 0], sizes = [1, 110], strides = [1, 1]} : vector<16x128xf32> to vector<1x110xf32>
      %248 = vector.extract_strided_slice %240 {offsets = [9, 0], sizes = [1, 110], strides = [1, 1]} : vector<16x128xf32> to vector<1x110xf32>
      %249 = vector.extract_strided_slice %240 {offsets = [10, 0], sizes = [1, 110], strides = [1, 1]} : vector<16x128xf32> to vector<1x110xf32>
      %250 = tpu.concatenate %241, %242, %243, %244, %245, %246, %247, %248, %249 in 0 : vector<1x110xf32>, vector<1x110xf32>, vector<1x110xf32>, vector<1x110xf32>, vector<1x110xf32>, vector<1x110xf32>, vector<1x110xf32>, vector<1x110xf32>, vector<1x110xf32> -> vector<9x110xf32>
      %251 = tpu.concatenate %250, %7 in 1 : vector<9x110xf32>, vector<9x18xf32> -> vector<9x128xf32>
      %252 = vector.extract_strided_slice %240 {offsets = [1, 0], sizes = [1, 110], strides = [1, 1]} : vector<16x128xf32> to vector<1x110xf32>
      %253 = vector.extract_strided_slice %240 {offsets = [2, 0], sizes = [1, 110], strides = [1, 1]} : vector<16x128xf32> to vector<1x110xf32>
      %254 = vector.extract_strided_slice %240 {offsets = [3, 0], sizes = [1, 110], strides = [1, 1]} : vector<16x128xf32> to vector<1x110xf32>
      %255 = vector.extract_strided_slice %240 {offsets = [5, 0], sizes = [1, 110], strides = [1, 1]} : vector<16x128xf32> to vector<1x110xf32>
      %256 = vector.extract_strided_slice %240 {offsets = [6, 0], sizes = [1, 110], strides = [1, 1]} : vector<16x128xf32> to vector<1x110xf32>
      %257 = vector.extract_strided_slice %240 {offsets = [7, 0], sizes = [1, 110], strides = [1, 1]} : vector<16x128xf32> to vector<1x110xf32>
      %258 = vector.extract_strided_slice %240 {offsets = [9, 0], sizes = [1, 110], strides = [1, 1]} : vector<16x128xf32> to vector<1x110xf32>
      %259 = vector.extract_strided_slice %240 {offsets = [10, 0], sizes = [1, 110], strides = [1, 1]} : vector<16x128xf32> to vector<1x110xf32>
      %260 = vector.extract_strided_slice %240 {offsets = [11, 0], sizes = [1, 110], strides = [1, 1]} : vector<16x128xf32> to vector<1x110xf32>
      %261 = tpu.concatenate %252, %253, %254, %255, %256, %257, %258, %259, %260 in 0 : vector<1x110xf32>, vector<1x110xf32>, vector<1x110xf32>, vector<1x110xf32>, vector<1x110xf32>, vector<1x110xf32>, vector<1x110xf32>, vector<1x110xf32>, vector<1x110xf32> -> vector<9x110xf32>
      %262 = tpu.concatenate %261, %7 in 1 : vector<9x110xf32>, vector<9x18xf32> -> vector<9x128xf32>
      %263 = vector.extract_strided_slice %240 {offsets = [4, 0], sizes = [1, 110], strides = [1, 1]} : vector<16x128xf32> to vector<1x110xf32>
      %264 = vector.extract_strided_slice %240 {offsets = [5, 0], sizes = [1, 110], strides = [1, 1]} : vector<16x128xf32> to vector<1x110xf32>
      %265 = vector.extract_strided_slice %240 {offsets = [6, 0], sizes = [1, 110], strides = [1, 1]} : vector<16x128xf32> to vector<1x110xf32>
      %266 = vector.extract_strided_slice %240 {offsets = [8, 0], sizes = [1, 110], strides = [1, 1]} : vector<16x128xf32> to vector<1x110xf32>
      %267 = vector.extract_strided_slice %240 {offsets = [9, 0], sizes = [1, 110], strides = [1, 1]} : vector<16x128xf32> to vector<1x110xf32>
      %268 = vector.extract_strided_slice %240 {offsets = [10, 0], sizes = [1, 110], strides = [1, 1]} : vector<16x128xf32> to vector<1x110xf32>
      %269 = vector.extract_strided_slice %240 {offsets = [12, 0], sizes = [1, 110], strides = [1, 1]} : vector<16x128xf32> to vector<1x110xf32>
      %270 = vector.extract_strided_slice %240 {offsets = [13, 0], sizes = [1, 110], strides = [1, 1]} : vector<16x128xf32> to vector<1x110xf32>
      %271 = vector.extract_strided_slice %240 {offsets = [14, 0], sizes = [1, 110], strides = [1, 1]} : vector<16x128xf32> to vector<1x110xf32>
      %272 = tpu.concatenate %263, %264, %265, %266, %267, %268, %269, %270, %271 in 0 : vector<1x110xf32>, vector<1x110xf32>, vector<1x110xf32>, vector<1x110xf32>, vector<1x110xf32>, vector<1x110xf32>, vector<1x110xf32>, vector<1x110xf32>, vector<1x110xf32> -> vector<9x110xf32>
      %273 = tpu.concatenate %272, %7 in 1 : vector<9x110xf32>, vector<9x18xf32> -> vector<9x128xf32>
      %274 = vector.extract_strided_slice %240 {offsets = [5, 0], sizes = [1, 110], strides = [1, 1]} : vector<16x128xf32> to vector<1x110xf32>
      %275 = vector.extract_strided_slice %240 {offsets = [6, 0], sizes = [1, 110], strides = [1, 1]} : vector<16x128xf32> to vector<1x110xf32>
      %276 = vector.extract_strided_slice %240 {offsets = [7, 0], sizes = [1, 110], strides = [1, 1]} : vector<16x128xf32> to vector<1x110xf32>
      %277 = vector.extract_strided_slice %240 {offsets = [9, 0], sizes = [1, 110], strides = [1, 1]} : vector<16x128xf32> to vector<1x110xf32>
      %278 = vector.extract_strided_slice %240 {offsets = [10, 0], sizes = [1, 110], strides = [1, 1]} : vector<16x128xf32> to vector<1x110xf32>
      %279 = vector.extract_strided_slice %240 {offsets = [11, 0], sizes = [1, 110], strides = [1, 1]} : vector<16x128xf32> to vector<1x110xf32>
      %280 = vector.extract_strided_slice %240 {offsets = [13, 0], sizes = [1, 110], strides = [1, 1]} : vector<16x128xf32> to vector<1x110xf32>
      %281 = vector.extract_strided_slice %240 {offsets = [14, 0], sizes = [1, 110], strides = [1, 1]} : vector<16x128xf32> to vector<1x110xf32>
      %282 = vector.extract_strided_slice %240 {offsets = [15, 0], sizes = [1, 110], strides = [1, 1]} : vector<16x128xf32> to vector<1x110xf32>
      %283 = tpu.concatenate %274, %275, %276, %277, %278, %279, %280, %281, %282 in 0 : vector<1x110xf32>, vector<1x110xf32>, vector<1x110xf32>, vector<1x110xf32>, vector<1x110xf32>, vector<1x110xf32>, vector<1x110xf32>, vector<1x110xf32>, vector<1x110xf32> -> vector<9x110xf32>
      %284 = tpu.concatenate %283, %7 in 1 : vector<9x110xf32>, vector<9x18xf32> -> vector<9x128xf32>
      %285 = tpu.concatenate %251, %262, %273, %284 in 1 : vector<9x128xf32>, vector<9x128xf32>, vector<9x128xf32>, vector<9x128xf32> -> vector<9x512xf32>
      %cst_131 = arith.constant dense<0.000000e+00> : vector<16x512xf32>
      %286 = tpu.matmul %10, %285, %cst_131 {dimension_numbers = #tpu.dot_dimension_numbers<[1], [0], [0], [1], [0, 0, 1, 1], [], []>} : vector<16x9xf32>, vector<9x512xf32>, vector<16x512xf32> -> vector<16x512xf32>
      %287 = vector.extract_strided_slice %286 {offsets = [0, 0], sizes = [16, 128], strides = [1, 1]} : vector<16x512xf32> to vector<16x128xf32>
      %288 = vector.extract_strided_slice %286 {offsets = [0, 128], sizes = [16, 128], strides = [1, 1]} : vector<16x512xf32> to vector<16x128xf32>
      %289 = arith.maximumf %287, %288 : vector<16x128xf32>
      %290 = vector.extract_strided_slice %286 {offsets = [0, 256], sizes = [16, 128], strides = [1, 1]} : vector<16x512xf32> to vector<16x128xf32>
      %291 = vector.extract_strided_slice %286 {offsets = [0, 384], sizes = [16, 128], strides = [1, 1]} : vector<16x512xf32> to vector<16x128xf32>
      %292 = arith.maximumf %290, %291 : vector<16x128xf32>
      %293 = arith.maximumf %289, %292 : vector<16x128xf32>
      %294 = vector.extract_strided_slice %293 {offsets = [0, 0], sizes = [16, 110], strides = [1, 1]} : vector<16x128xf32> to vector<16x110xf32>
      %295 = vector.broadcast %11 : vector<16x1xf32> to vector<16x110xf32>
      %296 = arith.addf %294, %295 : vector<16x110xf32>
      %cst_132 = arith.constant 0.000000e+00 : f32
      %297 = vector.broadcast %cst_132 : f32 to vector<16x110xf32>
      %298 = arith.maximumf %296, %297 : vector<16x110xf32>
      %299 = vector.broadcast %6 : vector<1x110xf32> to vector<16x110xf32>
      %300 = arith.mulf %298, %299 : vector<16x110xf32>
      %301 = tpu.concatenate %9, %300, %9 in 1 : vector<16x17xf32>, vector<16x110xf32>, vector<16x17xf32> -> vector<16x144xf32>
      %302 = vector.extract_strided_slice %240 {offsets = [2, 0], sizes = [1, 110], strides = [1, 1]} : vector<16x128xf32> to vector<1x110xf32>
      %303 = vector.extract_strided_slice %240 {offsets = [3, 0], sizes = [1, 110], strides = [1, 1]} : vector<16x128xf32> to vector<1x110xf32>
      %304 = vector.extract_strided_slice %240 {offsets = [0, 1], sizes = [1, 110], strides = [1, 1]} : vector<16x128xf32> to vector<1x110xf32>
      %305 = vector.extract_strided_slice %240 {offsets = [6, 0], sizes = [1, 110], strides = [1, 1]} : vector<16x128xf32> to vector<1x110xf32>
      %306 = vector.extract_strided_slice %240 {offsets = [7, 0], sizes = [1, 110], strides = [1, 1]} : vector<16x128xf32> to vector<1x110xf32>
      %307 = vector.extract_strided_slice %240 {offsets = [4, 1], sizes = [1, 110], strides = [1, 1]} : vector<16x128xf32> to vector<1x110xf32>
      %308 = vector.extract_strided_slice %240 {offsets = [10, 0], sizes = [1, 110], strides = [1, 1]} : vector<16x128xf32> to vector<1x110xf32>
      %309 = vector.extract_strided_slice %240 {offsets = [11, 0], sizes = [1, 110], strides = [1, 1]} : vector<16x128xf32> to vector<1x110xf32>
      %310 = vector.extract_strided_slice %240 {offsets = [8, 1], sizes = [1, 110], strides = [1, 1]} : vector<16x128xf32> to vector<1x110xf32>
      %311 = tpu.concatenate %302, %303, %304, %305, %306, %307, %308, %309, %310 in 0 : vector<1x110xf32>, vector<1x110xf32>, vector<1x110xf32>, vector<1x110xf32>, vector<1x110xf32>, vector<1x110xf32>, vector<1x110xf32>, vector<1x110xf32>, vector<1x110xf32> -> vector<9x110xf32>
      %312 = tpu.concatenate %311, %7 in 1 : vector<9x110xf32>, vector<9x18xf32> -> vector<9x128xf32>
      %313 = vector.extract_strided_slice %240 {offsets = [3, 0], sizes = [1, 110], strides = [1, 1]} : vector<16x128xf32> to vector<1x110xf32>
      %314 = vector.extract_strided_slice %240 {offsets = [0, 1], sizes = [1, 110], strides = [1, 1]} : vector<16x128xf32> to vector<1x110xf32>
      %315 = vector.extract_strided_slice %240 {offsets = [1, 1], sizes = [1, 110], strides = [1, 1]} : vector<16x128xf32> to vector<1x110xf32>
      %316 = vector.extract_strided_slice %240 {offsets = [7, 0], sizes = [1, 110], strides = [1, 1]} : vector<16x128xf32> to vector<1x110xf32>
      %317 = vector.extract_strided_slice %240 {offsets = [4, 1], sizes = [1, 110], strides = [1, 1]} : vector<16x128xf32> to vector<1x110xf32>
      %318 = vector.extract_strided_slice %240 {offsets = [5, 1], sizes = [1, 110], strides = [1, 1]} : vector<16x128xf32> to vector<1x110xf32>
      %319 = vector.extract_strided_slice %240 {offsets = [11, 0], sizes = [1, 110], strides = [1, 1]} : vector<16x128xf32> to vector<1x110xf32>
      %320 = vector.extract_strided_slice %240 {offsets = [8, 1], sizes = [1, 110], strides = [1, 1]} : vector<16x128xf32> to vector<1x110xf32>
      %321 = vector.extract_strided_slice %240 {offsets = [9, 1], sizes = [1, 110], strides = [1, 1]} : vector<16x128xf32> to vector<1x110xf32>
      %322 = tpu.concatenate %313, %314, %315, %316, %317, %318, %319, %320, %321 in 0 : vector<1x110xf32>, vector<1x110xf32>, vector<1x110xf32>, vector<1x110xf32>, vector<1x110xf32>, vector<1x110xf32>, vector<1x110xf32>, vector<1x110xf32>, vector<1x110xf32> -> vector<9x110xf32>
      %323 = tpu.concatenate %322, %7 in 1 : vector<9x110xf32>, vector<9x18xf32> -> vector<9x128xf32>
      %324 = vector.extract_strided_slice %240 {offsets = [6, 0], sizes = [1, 110], strides = [1, 1]} : vector<16x128xf32> to vector<1x110xf32>
      %325 = vector.extract_strided_slice %240 {offsets = [7, 0], sizes = [1, 110], strides = [1, 1]} : vector<16x128xf32> to vector<1x110xf32>
      %326 = vector.extract_strided_slice %240 {offsets = [4, 1], sizes = [1, 110], strides = [1, 1]} : vector<16x128xf32> to vector<1x110xf32>
      %327 = vector.extract_strided_slice %240 {offsets = [10, 0], sizes = [1, 110], strides = [1, 1]} : vector<16x128xf32> to vector<1x110xf32>
      %328 = vector.extract_strided_slice %240 {offsets = [11, 0], sizes = [1, 110], strides = [1, 1]} : vector<16x128xf32> to vector<1x110xf32>
      %329 = vector.extract_strided_slice %240 {offsets = [8, 1], sizes = [1, 110], strides = [1, 1]} : vector<16x128xf32> to vector<1x110xf32>
      %330 = vector.extract_strided_slice %240 {offsets = [14, 0], sizes = [1, 110], strides = [1, 1]} : vector<16x128xf32> to vector<1x110xf32>
      %331 = vector.extract_strided_slice %240 {offsets = [15, 0], sizes = [1, 110], strides = [1, 1]} : vector<16x128xf32> to vector<1x110xf32>
      %332 = vector.extract_strided_slice %240 {offsets = [12, 1], sizes = [1, 110], strides = [1, 1]} : vector<16x128xf32> to vector<1x110xf32>
      %333 = tpu.concatenate %324, %325, %326, %327, %328, %329, %330, %331, %332 in 0 : vector<1x110xf32>, vector<1x110xf32>, vector<1x110xf32>, vector<1x110xf32>, vector<1x110xf32>, vector<1x110xf32>, vector<1x110xf32>, vector<1x110xf32>, vector<1x110xf32> -> vector<9x110xf32>
      %334 = tpu.concatenate %333, %7 in 1 : vector<9x110xf32>, vector<9x18xf32> -> vector<9x128xf32>
      %335 = vector.extract_strided_slice %240 {offsets = [7, 0], sizes = [1, 110], strides = [1, 1]} : vector<16x128xf32> to vector<1x110xf32>
      %336 = vector.extract_strided_slice %240 {offsets = [4, 1], sizes = [1, 110], strides = [1, 1]} : vector<16x128xf32> to vector<1x110xf32>
      %337 = vector.extract_strided_slice %240 {offsets = [5, 1], sizes = [1, 110], strides = [1, 1]} : vector<16x128xf32> to vector<1x110xf32>
      %338 = vector.extract_strided_slice %240 {offsets = [11, 0], sizes = [1, 110], strides = [1, 1]} : vector<16x128xf32> to vector<1x110xf32>
      %339 = vector.extract_strided_slice %240 {offsets = [8, 1], sizes = [1, 110], strides = [1, 1]} : vector<16x128xf32> to vector<1x110xf32>
      %340 = vector.extract_strided_slice %240 {offsets = [9, 1], sizes = [1, 110], strides = [1, 1]} : vector<16x128xf32> to vector<1x110xf32>
      %341 = vector.extract_strided_slice %240 {offsets = [15, 0], sizes = [1, 110], strides = [1, 1]} : vector<16x128xf32> to vector<1x110xf32>
      %342 = vector.extract_strided_slice %240 {offsets = [12, 1], sizes = [1, 110], strides = [1, 1]} : vector<16x128xf32> to vector<1x110xf32>
      %343 = vector.extract_strided_slice %240 {offsets = [13, 1], sizes = [1, 110], strides = [1, 1]} : vector<16x128xf32> to vector<1x110xf32>
      %344 = tpu.concatenate %335, %336, %337, %338, %339, %340, %341, %342, %343 in 0 : vector<1x110xf32>, vector<1x110xf32>, vector<1x110xf32>, vector<1x110xf32>, vector<1x110xf32>, vector<1x110xf32>, vector<1x110xf32>, vector<1x110xf32>, vector<1x110xf32> -> vector<9x110xf32>
      %345 = tpu.concatenate %344, %7 in 1 : vector<9x110xf32>, vector<9x18xf32> -> vector<9x128xf32>
      %346 = tpu.concatenate %312, %323, %334, %345 in 1 : vector<9x128xf32>, vector<9x128xf32>, vector<9x128xf32>, vector<9x128xf32> -> vector<9x512xf32>
      %cst_133 = arith.constant dense<0.000000e+00> : vector<16x512xf32>
      %347 = tpu.matmul %10, %346, %cst_133 {dimension_numbers = #tpu.dot_dimension_numbers<[1], [0], [0], [1], [0, 0, 1, 1], [], []>} : vector<16x9xf32>, vector<9x512xf32>, vector<16x512xf32> -> vector<16x512xf32>
      %348 = vector.extract_strided_slice %347 {offsets = [0, 0], sizes = [16, 128], strides = [1, 1]} : vector<16x512xf32> to vector<16x128xf32>
      %349 = vector.extract_strided_slice %347 {offsets = [0, 128], sizes = [16, 128], strides = [1, 1]} : vector<16x512xf32> to vector<16x128xf32>
      %350 = arith.maximumf %348, %349 : vector<16x128xf32>
      %351 = vector.extract_strided_slice %347 {offsets = [0, 256], sizes = [16, 128], strides = [1, 1]} : vector<16x512xf32> to vector<16x128xf32>
      %352 = vector.extract_strided_slice %347 {offsets = [0, 384], sizes = [16, 128], strides = [1, 1]} : vector<16x512xf32> to vector<16x128xf32>
      %353 = arith.maximumf %351, %352 : vector<16x128xf32>
      %354 = arith.maximumf %350, %353 : vector<16x128xf32>
      %355 = vector.extract_strided_slice %354 {offsets = [0, 0], sizes = [16, 110], strides = [1, 1]} : vector<16x128xf32> to vector<16x110xf32>
      %356 = vector.broadcast %11 : vector<16x1xf32> to vector<16x110xf32>
      %357 = arith.addf %355, %356 : vector<16x110xf32>
      %cst_134 = arith.constant 0.000000e+00 : f32
      %358 = vector.broadcast %cst_134 : f32 to vector<16x110xf32>
      %359 = arith.maximumf %357, %358 : vector<16x110xf32>
      %360 = vector.broadcast %6 : vector<1x110xf32> to vector<16x110xf32>
      %361 = arith.mulf %359, %360 : vector<16x110xf32>
      %362 = tpu.concatenate %9, %361, %9 in 1 : vector<16x17xf32>, vector<16x110xf32>, vector<16x17xf32> -> vector<16x144xf32>
      %363 = vector.extract_strided_slice %240 {offsets = [8, 0], sizes = [1, 110], strides = [1, 1]} : vector<16x128xf32> to vector<1x110xf32>
      %364 = vector.extract_strided_slice %240 {offsets = [9, 0], sizes = [1, 110], strides = [1, 1]} : vector<16x128xf32> to vector<1x110xf32>
      %365 = vector.extract_strided_slice %240 {offsets = [10, 0], sizes = [1, 110], strides = [1, 1]} : vector<16x128xf32> to vector<1x110xf32>
      %366 = vector.extract_strided_slice %240 {offsets = [12, 0], sizes = [1, 110], strides = [1, 1]} : vector<16x128xf32> to vector<1x110xf32>
      %367 = vector.extract_strided_slice %240 {offsets = [13, 0], sizes = [1, 110], strides = [1, 1]} : vector<16x128xf32> to vector<1x110xf32>
      %368 = vector.extract_strided_slice %240 {offsets = [14, 0], sizes = [1, 110], strides = [1, 1]} : vector<16x128xf32> to vector<1x110xf32>
      %369 = vector.extract_strided_slice %240 {offsets = [0, 16], sizes = [1, 110], strides = [1, 1]} : vector<16x128xf32> to vector<1x110xf32>
      %370 = vector.extract_strided_slice %240 {offsets = [1, 16], sizes = [1, 110], strides = [1, 1]} : vector<16x128xf32> to vector<1x110xf32>
      %371 = vector.extract_strided_slice %240 {offsets = [2, 16], sizes = [1, 110], strides = [1, 1]} : vector<16x128xf32> to vector<1x110xf32>
      %372 = tpu.concatenate %363, %364, %365, %366, %367, %368, %369, %370, %371 in 0 : vector<1x110xf32>, vector<1x110xf32>, vector<1x110xf32>, vector<1x110xf32>, vector<1x110xf32>, vector<1x110xf32>, vector<1x110xf32>, vector<1x110xf32>, vector<1x110xf32> -> vector<9x110xf32>
      %373 = tpu.concatenate %372, %7 in 1 : vector<9x110xf32>, vector<9x18xf32> -> vector<9x128xf32>
      %374 = vector.extract_strided_slice %240 {offsets = [9, 0], sizes = [1, 110], strides = [1, 1]} : vector<16x128xf32> to vector<1x110xf32>
      %375 = vector.extract_strided_slice %240 {offsets = [10, 0], sizes = [1, 110], strides = [1, 1]} : vector<16x128xf32> to vector<1x110xf32>
      %376 = vector.extract_strided_slice %240 {offsets = [11, 0], sizes = [1, 110], strides = [1, 1]} : vector<16x128xf32> to vector<1x110xf32>
      %377 = vector.extract_strided_slice %240 {offsets = [13, 0], sizes = [1, 110], strides = [1, 1]} : vector<16x128xf32> to vector<1x110xf32>
      %378 = vector.extract_strided_slice %240 {offsets = [14, 0], sizes = [1, 110], strides = [1, 1]} : vector<16x128xf32> to vector<1x110xf32>
      %379 = vector.extract_strided_slice %240 {offsets = [15, 0], sizes = [1, 110], strides = [1, 1]} : vector<16x128xf32> to vector<1x110xf32>
      %380 = vector.extract_strided_slice %240 {offsets = [1, 16], sizes = [1, 110], strides = [1, 1]} : vector<16x128xf32> to vector<1x110xf32>
      %381 = vector.extract_strided_slice %240 {offsets = [2, 16], sizes = [1, 110], strides = [1, 1]} : vector<16x128xf32> to vector<1x110xf32>
      %382 = vector.extract_strided_slice %240 {offsets = [3, 16], sizes = [1, 110], strides = [1, 1]} : vector<16x128xf32> to vector<1x110xf32>
      %383 = tpu.concatenate %374, %375, %376, %377, %378, %379, %380, %381, %382 in 0 : vector<1x110xf32>, vector<1x110xf32>, vector<1x110xf32>, vector<1x110xf32>, vector<1x110xf32>, vector<1x110xf32>, vector<1x110xf32>, vector<1x110xf32>, vector<1x110xf32> -> vector<9x110xf32>
      %384 = tpu.concatenate %383, %7 in 1 : vector<9x110xf32>, vector<9x18xf32> -> vector<9x128xf32>
      %385 = vector.extract_strided_slice %240 {offsets = [12, 0], sizes = [1, 110], strides = [1, 1]} : vector<16x128xf32> to vector<1x110xf32>
      %386 = vector.extract_strided_slice %240 {offsets = [13, 0], sizes = [1, 110], strides = [1, 1]} : vector<16x128xf32> to vector<1x110xf32>
      %387 = vector.extract_strided_slice %240 {offsets = [14, 0], sizes = [1, 110], strides = [1, 1]} : vector<16x128xf32> to vector<1x110xf32>
      %388 = vector.extract_strided_slice %240 {offsets = [0, 16], sizes = [1, 110], strides = [1, 1]} : vector<16x128xf32> to vector<1x110xf32>
      %389 = vector.extract_strided_slice %240 {offsets = [1, 16], sizes = [1, 110], strides = [1, 1]} : vector<16x128xf32> to vector<1x110xf32>
      %390 = vector.extract_strided_slice %240 {offsets = [2, 16], sizes = [1, 110], strides = [1, 1]} : vector<16x128xf32> to vector<1x110xf32>
      %391 = vector.extract_strided_slice %240 {offsets = [4, 16], sizes = [1, 110], strides = [1, 1]} : vector<16x128xf32> to vector<1x110xf32>
      %392 = vector.extract_strided_slice %240 {offsets = [5, 16], sizes = [1, 110], strides = [1, 1]} : vector<16x128xf32> to vector<1x110xf32>
      %393 = vector.extract_strided_slice %240 {offsets = [6, 16], sizes = [1, 110], strides = [1, 1]} : vector<16x128xf32> to vector<1x110xf32>
      %394 = tpu.concatenate %385, %386, %387, %388, %389, %390, %391, %392, %393 in 0 : vector<1x110xf32>, vector<1x110xf32>, vector<1x110xf32>, vector<1x110xf32>, vector<1x110xf32>, vector<1x110xf32>, vector<1x110xf32>, vector<1x110xf32>, vector<1x110xf32> -> vector<9x110xf32>
      %395 = tpu.concatenate %394, %7 in 1 : vector<9x110xf32>, vector<9x18xf32> -> vector<9x128xf32>
      %396 = vector.extract_strided_slice %240 {offsets = [13, 0], sizes = [1, 110], strides = [1, 1]} : vector<16x128xf32> to vector<1x110xf32>
      %397 = vector.extract_strided_slice %240 {offsets = [14, 0], sizes = [1, 110], strides = [1, 1]} : vector<16x128xf32> to vector<1x110xf32>
      %398 = vector.extract_strided_slice %240 {offsets = [15, 0], sizes = [1, 110], strides = [1, 1]} : vector<16x128xf32> to vector<1x110xf32>
      %399 = vector.extract_strided_slice %240 {offsets = [1, 16], sizes = [1, 110], strides = [1, 1]} : vector<16x128xf32> to vector<1x110xf32>
      %400 = vector.extract_strided_slice %240 {offsets = [2, 16], sizes = [1, 110], strides = [1, 1]} : vector<16x128xf32> to vector<1x110xf32>
      %401 = vector.extract_strided_slice %240 {offsets = [3, 16], sizes = [1, 110], strides = [1, 1]} : vector<16x128xf32> to vector<1x110xf32>
      %402 = vector.extract_strided_slice %240 {offsets = [5, 16], sizes = [1, 110], strides = [1, 1]} : vector<16x128xf32> to vector<1x110xf32>
      %403 = vector.extract_strided_slice %240 {offsets = [6, 16], sizes = [1, 110], strides = [1, 1]} : vector<16x128xf32> to vector<1x110xf32>
      %404 = vector.extract_strided_slice %240 {offsets = [7, 16], sizes = [1, 110], strides = [1, 1]} : vector<16x128xf32> to vector<1x110xf32>
      %405 = tpu.concatenate %396, %397, %398, %399, %400, %401, %402, %403, %404 in 0 : vector<1x110xf32>, vector<1x110xf32>, vector<1x110xf32>, vector<1x110xf32>, vector<1x110xf32>, vector<1x110xf32>, vector<1x110xf32>, vector<1x110xf32>, vector<1x110xf32> -> vector<9x110xf32>
      %406 = tpu.concatenate %405, %7 in 1 : vector<9x110xf32>, vector<9x18xf32> -> vector<9x128xf32>
      %407 = tpu.concatenate %373, %384, %395, %406 in 1 : vector<9x128xf32>, vector<9x128xf32>, vector<9x128xf32>, vector<9x128xf32> -> vector<9x512xf32>
      %cst_135 = arith.constant dense<0.000000e+00> : vector<16x512xf32>
      %408 = tpu.matmul %10, %407, %cst_135 {dimension_numbers = #tpu.dot_dimension_numbers<[1], [0], [0], [1], [0, 0, 1, 1], [], []>} : vector<16x9xf32>, vector<9x512xf32>, vector<16x512xf32> -> vector<16x512xf32>
      %409 = vector.extract_strided_slice %408 {offsets = [0, 0], sizes = [16, 128], strides = [1, 1]} : vector<16x512xf32> to vector<16x128xf32>
      %410 = vector.extract_strided_slice %408 {offsets = [0, 128], sizes = [16, 128], strides = [1, 1]} : vector<16x512xf32> to vector<16x128xf32>
      %411 = arith.maximumf %409, %410 : vector<16x128xf32>
      %412 = vector.extract_strided_slice %408 {offsets = [0, 256], sizes = [16, 128], strides = [1, 1]} : vector<16x512xf32> to vector<16x128xf32>
      %413 = vector.extract_strided_slice %408 {offsets = [0, 384], sizes = [16, 128], strides = [1, 1]} : vector<16x512xf32> to vector<16x128xf32>
      %414 = arith.maximumf %412, %413 : vector<16x128xf32>
      %415 = arith.maximumf %411, %414 : vector<16x128xf32>
      %416 = vector.extract_strided_slice %415 {offsets = [0, 0], sizes = [16, 110], strides = [1, 1]} : vector<16x128xf32> to vector<16x110xf32>
      %417 = vector.broadcast %11 : vector<16x1xf32> to vector<16x110xf32>
      %418 = arith.addf %416, %417 : vector<16x110xf32>
      %cst_136 = arith.constant 0.000000e+00 : f32
      %419 = vector.broadcast %cst_136 : f32 to vector<16x110xf32>
      %420 = arith.maximumf %418, %419 : vector<16x110xf32>
      %421 = vector.broadcast %6 : vector<1x110xf32> to vector<16x110xf32>
      %422 = arith.mulf %420, %421 : vector<16x110xf32>
      %423 = tpu.concatenate %9, %422, %9 in 1 : vector<16x17xf32>, vector<16x110xf32>, vector<16x17xf32> -> vector<16x144xf32>
      %424 = vector.extract_strided_slice %240 {offsets = [10, 0], sizes = [1, 110], strides = [1, 1]} : vector<16x128xf32> to vector<1x110xf32>
      %425 = vector.extract_strided_slice %240 {offsets = [11, 0], sizes = [1, 110], strides = [1, 1]} : vector<16x128xf32> to vector<1x110xf32>
      %426 = vector.extract_strided_slice %240 {offsets = [8, 1], sizes = [1, 110], strides = [1, 1]} : vector<16x128xf32> to vector<1x110xf32>
      %427 = vector.extract_strided_slice %240 {offsets = [14, 0], sizes = [1, 110], strides = [1, 1]} : vector<16x128xf32> to vector<1x110xf32>
      %428 = vector.extract_strided_slice %240 {offsets = [15, 0], sizes = [1, 110], strides = [1, 1]} : vector<16x128xf32> to vector<1x110xf32>
      %429 = vector.extract_strided_slice %240 {offsets = [12, 1], sizes = [1, 110], strides = [1, 1]} : vector<16x128xf32> to vector<1x110xf32>
      %430 = vector.extract_strided_slice %240 {offsets = [2, 16], sizes = [1, 110], strides = [1, 1]} : vector<16x128xf32> to vector<1x110xf32>
      %431 = vector.extract_strided_slice %240 {offsets = [3, 16], sizes = [1, 110], strides = [1, 1]} : vector<16x128xf32> to vector<1x110xf32>
      %432 = vector.extract_strided_slice %240 {offsets = [0, 17], sizes = [1, 110], strides = [1, 1]} : vector<16x128xf32> to vector<1x110xf32>
      %433 = tpu.concatenate %424, %425, %426, %427, %428, %429, %430, %431, %432 in 0 : vector<1x110xf32>, vector<1x110xf32>, vector<1x110xf32>, vector<1x110xf32>, vector<1x110xf32>, vector<1x110xf32>, vector<1x110xf32>, vector<1x110xf32>, vector<1x110xf32> -> vector<9x110xf32>
      %434 = tpu.concatenate %433, %7 in 1 : vector<9x110xf32>, vector<9x18xf32> -> vector<9x128xf32>
      %435 = vector.extract_strided_slice %240 {offsets = [11, 0], sizes = [1, 110], strides = [1, 1]} : vector<16x128xf32> to vector<1x110xf32>
      %436 = vector.extract_strided_slice %240 {offsets = [8, 1], sizes = [1, 110], strides = [1, 1]} : vector<16x128xf32> to vector<1x110xf32>
      %437 = vector.extract_strided_slice %240 {offsets = [9, 1], sizes = [1, 110], strides = [1, 1]} : vector<16x128xf32> to vector<1x110xf32>
      %438 = vector.extract_strided_slice %240 {offsets = [15, 0], sizes = [1, 110], strides = [1, 1]} : vector<16x128xf32> to vector<1x110xf32>
      %439 = vector.extract_strided_slice %240 {offsets = [12, 1], sizes = [1, 110], strides = [1, 1]} : vector<16x128xf32> to vector<1x110xf32>
      %440 = vector.extract_strided_slice %240 {offsets = [13, 1], sizes = [1, 110], strides = [1, 1]} : vector<16x128xf32> to vector<1x110xf32>
      %441 = vector.extract_strided_slice %240 {offsets = [3, 16], sizes = [1, 110], strides = [1, 1]} : vector<16x128xf32> to vector<1x110xf32>
      %442 = vector.extract_strided_slice %240 {offsets = [0, 17], sizes = [1, 110], strides = [1, 1]} : vector<16x128xf32> to vector<1x110xf32>
      %443 = vector.extract_strided_slice %240 {offsets = [1, 17], sizes = [1, 110], strides = [1, 1]} : vector<16x128xf32> to vector<1x110xf32>
      %444 = tpu.concatenate %435, %436, %437, %438, %439, %440, %441, %442, %443 in 0 : vector<1x110xf32>, vector<1x110xf32>, vector<1x110xf32>, vector<1x110xf32>, vector<1x110xf32>, vector<1x110xf32>, vector<1x110xf32>, vector<1x110xf32>, vector<1x110xf32> -> vector<9x110xf32>
      %445 = tpu.concatenate %444, %7 in 1 : vector<9x110xf32>, vector<9x18xf32> -> vector<9x128xf32>
      %446 = vector.extract_strided_slice %240 {offsets = [14, 0], sizes = [1, 110], strides = [1, 1]} : vector<16x128xf32> to vector<1x110xf32>
      %447 = vector.extract_strided_slice %240 {offsets = [15, 0], sizes = [1, 110], strides = [1, 1]} : vector<16x128xf32> to vector<1x110xf32>
      %448 = vector.extract_strided_slice %240 {offsets = [12, 1], sizes = [1, 110], strides = [1, 1]} : vector<16x128xf32> to vector<1x110xf32>
      %449 = vector.extract_strided_slice %240 {offsets = [2, 16], sizes = [1, 110], strides = [1, 1]} : vector<16x128xf32> to vector<1x110xf32>
      %450 = vector.extract_strided_slice %240 {offsets = [3, 16], sizes = [1, 110], strides = [1, 1]} : vector<16x128xf32> to vector<1x110xf32>
      %451 = vector.extract_strided_slice %240 {offsets = [0, 17], sizes = [1, 110], strides = [1, 1]} : vector<16x128xf32> to vector<1x110xf32>
      %452 = vector.extract_strided_slice %240 {offsets = [6, 16], sizes = [1, 110], strides = [1, 1]} : vector<16x128xf32> to vector<1x110xf32>
      %453 = vector.extract_strided_slice %240 {offsets = [7, 16], sizes = [1, 110], strides = [1, 1]} : vector<16x128xf32> to vector<1x110xf32>
      %454 = vector.extract_strided_slice %240 {offsets = [4, 17], sizes = [1, 110], strides = [1, 1]} : vector<16x128xf32> to vector<1x110xf32>
      %455 = tpu.concatenate %446, %447, %448, %449, %450, %451, %452, %453, %454 in 0 : vector<1x110xf32>, vector<1x110xf32>, vector<1x110xf32>, vector<1x110xf32>, vector<1x110xf32>, vector<1x110xf32>, vector<1x110xf32>, vector<1x110xf32>, vector<1x110xf32> -> vector<9x110xf32>
      %456 = tpu.concatenate %455, %7 in 1 : vector<9x110xf32>, vector<9x18xf32> -> vector<9x128xf32>
      %457 = vector.extract_strided_slice %240 {offsets = [15, 0], sizes = [1, 110], strides = [1, 1]} : vector<16x128xf32> to vector<1x110xf32>
      %458 = vector.extract_strided_slice %240 {offsets = [12, 1], sizes = [1, 110], strides = [1, 1]} : vector<16x128xf32> to vector<1x110xf32>
      %459 = vector.extract_strided_slice %240 {offsets = [13, 1], sizes = [1, 110], strides = [1, 1]} : vector<16x128xf32> to vector<1x110xf32>
      %460 = vector.extract_strided_slice %240 {offsets = [3, 16], sizes = [1, 110], strides = [1, 1]} : vector<16x128xf32> to vector<1x110xf32>
      %461 = vector.extract_strided_slice %240 {offsets = [0, 17], sizes = [1, 110], strides = [1, 1]} : vector<16x128xf32> to vector<1x110xf32>
      %462 = vector.extract_strided_slice %240 {offsets = [1, 17], sizes = [1, 110], strides = [1, 1]} : vector<16x128xf32> to vector<1x110xf32>
      %463 = vector.extract_strided_slice %240 {offsets = [7, 16], sizes = [1, 110], strides = [1, 1]} : vector<16x128xf32> to vector<1x110xf32>
      %464 = vector.extract_strided_slice %240 {offsets = [4, 17], sizes = [1, 110], strides = [1, 1]} : vector<16x128xf32> to vector<1x110xf32>
      %465 = vector.extract_strided_slice %240 {offsets = [5, 17], sizes = [1, 110], strides = [1, 1]} : vector<16x128xf32> to vector<1x110xf32>
      %466 = tpu.concatenate %457, %458, %459, %460, %461, %462, %463, %464, %465 in 0 : vector<1x110xf32>, vector<1x110xf32>, vector<1x110xf32>, vector<1x110xf32>, vector<1x110xf32>, vector<1x110xf32>, vector<1x110xf32>, vector<1x110xf32>, vector<1x110xf32> -> vector<9x110xf32>
      %467 = tpu.concatenate %466, %7 in 1 : vector<9x110xf32>, vector<9x18xf32> -> vector<9x128xf32>
      %468 = tpu.concatenate %434, %445, %456, %467 in 1 : vector<9x128xf32>, vector<9x128xf32>, vector<9x128xf32>, vector<9x128xf32> -> vector<9x512xf32>
      %cst_137 = arith.constant dense<0.000000e+00> : vector<16x512xf32>
      %469 = tpu.matmul %10, %468, %cst_137 {dimension_numbers = #tpu.dot_dimension_numbers<[1], [0], [0], [1], [0, 0, 1, 1], [], []>} : vector<16x9xf32>, vector<9x512xf32>, vector<16x512xf32> -> vector<16x512xf32>
      %470 = vector.extract_strided_slice %469 {offsets = [0, 0], sizes = [16, 128], strides = [1, 1]} : vector<16x512xf32> to vector<16x128xf32>
      %471 = vector.extract_strided_slice %469 {offsets = [0, 128], sizes = [16, 128], strides = [1, 1]} : vector<16x512xf32> to vector<16x128xf32>
      %472 = arith.maximumf %470, %471 : vector<16x128xf32>
      %473 = vector.extract_strided_slice %469 {offsets = [0, 256], sizes = [16, 128], strides = [1, 1]} : vector<16x512xf32> to vector<16x128xf32>
      %474 = vector.extract_strided_slice %469 {offsets = [0, 384], sizes = [16, 128], strides = [1, 1]} : vector<16x512xf32> to vector<16x128xf32>
      %475 = arith.maximumf %473, %474 : vector<16x128xf32>
      %476 = arith.maximumf %472, %475 : vector<16x128xf32>
      %477 = vector.extract_strided_slice %476 {offsets = [0, 0], sizes = [16, 110], strides = [1, 1]} : vector<16x128xf32> to vector<16x110xf32>
      %478 = vector.broadcast %11 : vector<16x1xf32> to vector<16x110xf32>
      %479 = arith.addf %477, %478 : vector<16x110xf32>
      %cst_138 = arith.constant 0.000000e+00 : f32
      %480 = vector.broadcast %cst_138 : f32 to vector<16x110xf32>
      %481 = arith.maximumf %479, %480 : vector<16x110xf32>
      %482 = vector.broadcast %6 : vector<1x110xf32> to vector<16x110xf32>
      %483 = arith.mulf %481, %482 : vector<16x110xf32>
      %484 = tpu.concatenate %9, %483, %9 in 1 : vector<16x17xf32>, vector<16x110xf32>, vector<16x17xf32> -> vector<16x144xf32>
      %485 = vector.extract_strided_slice %484 {offsets = [0, 0], sizes = [16, 110], strides = [1, 1]} : vector<16x144xf32> to vector<16x110xf32>
      %486 = vector.extract_strided_slice %423 {offsets = [0, 1], sizes = [16, 110], strides = [1, 1]} : vector<16x144xf32> to vector<16x110xf32>
      %487 = vector.extract_strided_slice %484 {offsets = [0, 1], sizes = [16, 110], strides = [1, 1]} : vector<16x144xf32> to vector<16x110xf32>
      %488 = vector.extract_strided_slice %362 {offsets = [0, 16], sizes = [16, 110], strides = [1, 1]} : vector<16x144xf32> to vector<16x110xf32>
      %489 = vector.extract_strided_slice %301 {offsets = [0, 17], sizes = [16, 110], strides = [1, 1]} : vector<16x144xf32> to vector<16x110xf32>
      %490 = vector.extract_strided_slice %362 {offsets = [0, 17], sizes = [16, 110], strides = [1, 1]} : vector<16x144xf32> to vector<16x110xf32>
      %491 = vector.extract_strided_slice %484 {offsets = [0, 16], sizes = [16, 110], strides = [1, 1]} : vector<16x144xf32> to vector<16x110xf32>
      %492 = vector.extract_strided_slice %423 {offsets = [0, 17], sizes = [16, 110], strides = [1, 1]} : vector<16x144xf32> to vector<16x110xf32>
      %493 = vector.extract_strided_slice %484 {offsets = [0, 17], sizes = [16, 110], strides = [1, 1]} : vector<16x144xf32> to vector<16x110xf32>
      %494 = tpu.concatenate %485, %486, %487, %488, %489, %490, %491, %492, %493 in 0 : vector<16x110xf32>, vector<16x110xf32>, vector<16x110xf32>, vector<16x110xf32>, vector<16x110xf32>, vector<16x110xf32>, vector<16x110xf32>, vector<16x110xf32>, vector<16x110xf32> -> vector<144x110xf32>
      %495 = tpu.concatenate %494, %8 in 1 : vector<144x110xf32>, vector<144x18xf32> -> vector<144x128xf32>
      %496 = vector.extract_strided_slice %423 {offsets = [0, 1], sizes = [16, 110], strides = [1, 1]} : vector<16x144xf32> to vector<16x110xf32>
      %497 = vector.extract_strided_slice %484 {offsets = [0, 1], sizes = [16, 110], strides = [1, 1]} : vector<16x144xf32> to vector<16x110xf32>
      %498 = vector.extract_strided_slice %423 {offsets = [0, 2], sizes = [16, 110], strides = [1, 1]} : vector<16x144xf32> to vector<16x110xf32>
      %499 = vector.extract_strided_slice %301 {offsets = [0, 17], sizes = [16, 110], strides = [1, 1]} : vector<16x144xf32> to vector<16x110xf32>
      %500 = vector.extract_strided_slice %362 {offsets = [0, 17], sizes = [16, 110], strides = [1, 1]} : vector<16x144xf32> to vector<16x110xf32>
      %501 = vector.extract_strided_slice %301 {offsets = [0, 18], sizes = [16, 110], strides = [1, 1]} : vector<16x144xf32> to vector<16x110xf32>
      %502 = vector.extract_strided_slice %423 {offsets = [0, 17], sizes = [16, 110], strides = [1, 1]} : vector<16x144xf32> to vector<16x110xf32>
      %503 = vector.extract_strided_slice %484 {offsets = [0, 17], sizes = [16, 110], strides = [1, 1]} : vector<16x144xf32> to vector<16x110xf32>
      %504 = vector.extract_strided_slice %423 {offsets = [0, 18], sizes = [16, 110], strides = [1, 1]} : vector<16x144xf32> to vector<16x110xf32>
      %505 = tpu.concatenate %496, %497, %498, %499, %500, %501, %502, %503, %504 in 0 : vector<16x110xf32>, vector<16x110xf32>, vector<16x110xf32>, vector<16x110xf32>, vector<16x110xf32>, vector<16x110xf32>, vector<16x110xf32>, vector<16x110xf32>, vector<16x110xf32> -> vector<144x110xf32>
      %506 = tpu.concatenate %505, %8 in 1 : vector<144x110xf32>, vector<144x18xf32> -> vector<144x128xf32>
      %507 = vector.extract_strided_slice %362 {offsets = [0, 16], sizes = [16, 110], strides = [1, 1]} : vector<16x144xf32> to vector<16x110xf32>
      %508 = vector.extract_strided_slice %301 {offsets = [0, 17], sizes = [16, 110], strides = [1, 1]} : vector<16x144xf32> to vector<16x110xf32>
      %509 = vector.extract_strided_slice %362 {offsets = [0, 17], sizes = [16, 110], strides = [1, 1]} : vector<16x144xf32> to vector<16x110xf32>
      %510 = vector.extract_strided_slice %484 {offsets = [0, 16], sizes = [16, 110], strides = [1, 1]} : vector<16x144xf32> to vector<16x110xf32>
      %511 = vector.extract_strided_slice %423 {offsets = [0, 17], sizes = [16, 110], strides = [1, 1]} : vector<16x144xf32> to vector<16x110xf32>
      %512 = vector.extract_strided_slice %484 {offsets = [0, 17], sizes = [16, 110], strides = [1, 1]} : vector<16x144xf32> to vector<16x110xf32>
      %513 = vector.extract_strided_slice %362 {offsets = [0, 32], sizes = [16, 110], strides = [1, 1]} : vector<16x144xf32> to vector<16x110xf32>
      %514 = vector.extract_strided_slice %301 {offsets = [0, 33], sizes = [16, 110], strides = [1, 1]} : vector<16x144xf32> to vector<16x110xf32>
      %515 = vector.extract_strided_slice %362 {offsets = [0, 33], sizes = [16, 110], strides = [1, 1]} : vector<16x144xf32> to vector<16x110xf32>
      %516 = tpu.concatenate %507, %508, %509, %510, %511, %512, %513, %514, %515 in 0 : vector<16x110xf32>, vector<16x110xf32>, vector<16x110xf32>, vector<16x110xf32>, vector<16x110xf32>, vector<16x110xf32>, vector<16x110xf32>, vector<16x110xf32>, vector<16x110xf32> -> vector<144x110xf32>
      %517 = tpu.concatenate %516, %8 in 1 : vector<144x110xf32>, vector<144x18xf32> -> vector<144x128xf32>
      %518 = vector.extract_strided_slice %301 {offsets = [0, 17], sizes = [16, 110], strides = [1, 1]} : vector<16x144xf32> to vector<16x110xf32>
      %519 = vector.extract_strided_slice %362 {offsets = [0, 17], sizes = [16, 110], strides = [1, 1]} : vector<16x144xf32> to vector<16x110xf32>
      %520 = vector.extract_strided_slice %301 {offsets = [0, 18], sizes = [16, 110], strides = [1, 1]} : vector<16x144xf32> to vector<16x110xf32>
      %521 = vector.extract_strided_slice %423 {offsets = [0, 17], sizes = [16, 110], strides = [1, 1]} : vector<16x144xf32> to vector<16x110xf32>
      %522 = vector.extract_strided_slice %484 {offsets = [0, 17], sizes = [16, 110], strides = [1, 1]} : vector<16x144xf32> to vector<16x110xf32>
      %523 = vector.extract_strided_slice %423 {offsets = [0, 18], sizes = [16, 110], strides = [1, 1]} : vector<16x144xf32> to vector<16x110xf32>
      %524 = vector.extract_strided_slice %301 {offsets = [0, 33], sizes = [16, 110], strides = [1, 1]} : vector<16x144xf32> to vector<16x110xf32>
      %525 = vector.extract_strided_slice %362 {offsets = [0, 33], sizes = [16, 110], strides = [1, 1]} : vector<16x144xf32> to vector<16x110xf32>
      %526 = vector.extract_strided_slice %301 {offsets = [0, 34], sizes = [16, 110], strides = [1, 1]} : vector<16x144xf32> to vector<16x110xf32>
      %527 = tpu.concatenate %518, %519, %520, %521, %522, %523, %524, %525, %526 in 0 : vector<16x110xf32>, vector<16x110xf32>, vector<16x110xf32>, vector<16x110xf32>, vector<16x110xf32>, vector<16x110xf32>, vector<16x110xf32>, vector<16x110xf32>, vector<16x110xf32> -> vector<144x110xf32>
      %528 = tpu.concatenate %527, %8 in 1 : vector<144x110xf32>, vector<144x18xf32> -> vector<144x128xf32>
      %529 = tpu.concatenate %495, %506, %517, %528 in 1 : vector<144x128xf32>, vector<144x128xf32>, vector<144x128xf32>, vector<144x128xf32> -> vector<144x512xf32>
      %530 = arith.truncf %529 : vector<144x512xf32> to vector<144x512xbf16>
      %cst_139 = arith.constant dense<0.000000e+00> : vector<32x512xf32>
      %531 = tpu.matmul %12, %530, %cst_139 {dimension_numbers = #tpu.dot_dimension_numbers<[1], [0], [0], [1], [0, 0, 1, 1], [], []>} : vector<32x144xbf16>, vector<144x512xbf16>, vector<32x512xf32> -> vector<32x512xf32>
      %532 = vector.extract_strided_slice %531 {offsets = [0, 0], sizes = [32, 128], strides = [1, 1]} : vector<32x512xf32> to vector<32x128xf32>
      %533 = vector.extract_strided_slice %531 {offsets = [0, 128], sizes = [32, 128], strides = [1, 1]} : vector<32x512xf32> to vector<32x128xf32>
      %534 = arith.maximumf %532, %533 : vector<32x128xf32>
      %535 = vector.extract_strided_slice %531 {offsets = [0, 256], sizes = [32, 128], strides = [1, 1]} : vector<32x512xf32> to vector<32x128xf32>
      %536 = vector.extract_strided_slice %531 {offsets = [0, 384], sizes = [32, 128], strides = [1, 1]} : vector<32x512xf32> to vector<32x128xf32>
      %537 = arith.maximumf %535, %536 : vector<32x128xf32>
      %538 = arith.maximumf %534, %537 : vector<32x128xf32>
      %539 = vector.broadcast %13 : vector<32x1xf32> to vector<32x128xf32>
      %540 = arith.addf %538, %539 : vector<32x128xf32>
      %cst_140 = arith.constant 0.000000e+00 : f32
      %541 = vector.broadcast %cst_140 : f32 to vector<32x128xf32>
      %542 = arith.maximumf %540, %541 : vector<32x128xf32>
      %543 = arith.truncf %542 : vector<32x128xf32> to vector<32x128xbf16>
      %544 = arith.index_cast %arg14 : i32 to index
      %c0_141 = arith.constant 0 : index
      %c0_142 = arith.constant 0 : index
      %545 = vector.load %arg13[%544, %c0_141, %c0_142] : memref<8x32x128xbf16, #tpu.memory_space<vmem>>, vector<1x32x128xbf16>
      %546 = vector.shape_cast %545 : vector<1x32x128xbf16> to vector<32x128xbf16>
      %547 = vector.shape_cast %543 : vector<32x128xbf16> to vector<1x32x128xbf16>
      tpu.vector_store %arg13[%544, %c0_141, %c0_142], %547 {strides = array<i32>} : memref<8x32x128xbf16, #tpu.memory_space<vmem>>, vector<1x32x128xbf16>,
    }
    %c8_i32_9 = arith.constant 8 : i32
    %c0_10 = arith.constant 0 : index
    %c0_11 = arith.constant 0 : index
    %c0_12 = arith.constant 0 : index
    %15 = vector.load %arg13[%c0_10, %c0_11, %c0_12] : memref<8x32x128xbf16, #tpu.memory_space<vmem>>, vector<8x32x128xbf16>
    %cst_13 = arith.constant 0.000000e+00 : f32
    %16 = vector.broadcast %cst_13 : f32 to vector<8x128xf32>
    %17 = vector.extract_strided_slice %15 {offsets = [0, 0, 0], sizes = [8, 1, 128], strides = [1, 1, 1]} : vector<8x32x128xbf16> to vector<8x1x128xbf16>
    %18 = vector.shape_cast %17 : vector<8x1x128xbf16> to vector<8x128xbf16>
    %c0_14 = arith.constant 0 : index
    %c0_15 = arith.constant 0 : index
    %c0_16 = arith.constant 0 : index
    %19 = vector.load %arg6[%c0_14, %c0_15, %c0_16] : memref<32x128x128xbf16, #tpu.memory_space<vmem>>, vector<1x128x128xbf16>
    %20 = vector.shape_cast %19 : vector<1x128x128xbf16> to vector<128x128xbf16>
    %cst_17 = arith.constant dense<0.000000e+00> : vector<8x128xf32>
    %21 = tpu.matmul %18, %20, %cst_17 {dimension_numbers = #tpu.dot_dimension_numbers<[1], [0], [0], [1], [0, 0, 1, 1], [], []>} : vector<8x128xbf16>, vector<128x128xbf16>, vector<8x128xf32> -> vector<8x128xf32>
    %22 = arith.addf %16, %21 : vector<8x128xf32>
    %23 = vector.extract_strided_slice %15 {offsets = [0, 1, 0], sizes = [8, 1, 128], strides = [1, 1, 1]} : vector<8x32x128xbf16> to vector<8x1x128xbf16>
    %24 = vector.shape_cast %23 : vector<8x1x128xbf16> to vector<8x128xbf16>
    %c1 = arith.constant 1 : index
    %c0_18 = arith.constant 0 : index
    %c0_19 = arith.constant 0 : index
    %25 = vector.load %arg6[%c1, %c0_18, %c0_19] : memref<32x128x128xbf16, #tpu.memory_space<vmem>>, vector<1x128x128xbf16>
    %26 = vector.shape_cast %25 : vector<1x128x128xbf16> to vector<128x128xbf16>
    %cst_20 = arith.constant dense<0.000000e+00> : vector<8x128xf32>
    %27 = tpu.matmul %24, %26, %cst_20 {dimension_numbers = #tpu.dot_dimension_numbers<[1], [0], [0], [1], [0, 0, 1, 1], [], []>} : vector<8x128xbf16>, vector<128x128xbf16>, vector<8x128xf32> -> vector<8x128xf32>
    %28 = arith.addf %22, %27 : vector<8x128xf32>
    %29 = vector.extract_strided_slice %15 {offsets = [0, 2, 0], sizes = [8, 1, 128], strides = [1, 1, 1]} : vector<8x32x128xbf16> to vector<8x1x128xbf16>
    %30 = vector.shape_cast %29 : vector<8x1x128xbf16> to vector<8x128xbf16>
    %c2 = arith.constant 2 : index
    %c0_21 = arith.constant 0 : index
    %c0_22 = arith.constant 0 : index
    %31 = vector.load %arg6[%c2, %c0_21, %c0_22] : memref<32x128x128xbf16, #tpu.memory_space<vmem>>, vector<1x128x128xbf16>
    %32 = vector.shape_cast %31 : vector<1x128x128xbf16> to vector<128x128xbf16>
    %cst_23 = arith.constant dense<0.000000e+00> : vector<8x128xf32>
    %33 = tpu.matmul %30, %32, %cst_23 {dimension_numbers = #tpu.dot_dimension_numbers<[1], [0], [0], [1], [0, 0, 1, 1], [], []>} : vector<8x128xbf16>, vector<128x128xbf16>, vector<8x128xf32> -> vector<8x128xf32>
    %34 = arith.addf %28, %33 : vector<8x128xf32>
    %35 = vector.extract_strided_slice %15 {offsets = [0, 3, 0], sizes = [8, 1, 128], strides = [1, 1, 1]} : vector<8x32x128xbf16> to vector<8x1x128xbf16>
    %36 = vector.shape_cast %35 : vector<8x1x128xbf16> to vector<8x128xbf16>
    %c3 = arith.constant 3 : index
    %c0_24 = arith.constant 0 : index
    %c0_25 = arith.constant 0 : index
    %37 = vector.load %arg6[%c3, %c0_24, %c0_25] : memref<32x128x128xbf16, #tpu.memory_space<vmem>>, vector<1x128x128xbf16>
    %38 = vector.shape_cast %37 : vector<1x128x128xbf16> to vector<128x128xbf16>
    %cst_26 = arith.constant dense<0.000000e+00> : vector<8x128xf32>
    %39 = tpu.matmul %36, %38, %cst_26 {dimension_numbers = #tpu.dot_dimension_numbers<[1], [0], [0], [1], [0, 0, 1, 1], [], []>} : vector<8x128xbf16>, vector<128x128xbf16>, vector<8x128xf32> -> vector<8x128xf32>
    %40 = arith.addf %34, %39 : vector<8x128xf32>
    %41 = vector.extract_strided_slice %15 {offsets = [0, 4, 0], sizes = [8, 1, 128], strides = [1, 1, 1]} : vector<8x32x128xbf16> to vector<8x1x128xbf16>
    %42 = vector.shape_cast %41 : vector<8x1x128xbf16> to vector<8x128xbf16>
    %c4 = arith.constant 4 : index
    %c0_27 = arith.constant 0 : index
    %c0_28 = arith.constant 0 : index
    %43 = vector.load %arg6[%c4, %c0_27, %c0_28] : memref<32x128x128xbf16, #tpu.memory_space<vmem>>, vector<1x128x128xbf16>
    %44 = vector.shape_cast %43 : vector<1x128x128xbf16> to vector<128x128xbf16>
    %cst_29 = arith.constant dense<0.000000e+00> : vector<8x128xf32>
    %45 = tpu.matmul %42, %44, %cst_29 {dimension_numbers = #tpu.dot_dimension_numbers<[1], [0], [0], [1], [0, 0, 1, 1], [], []>} : vector<8x128xbf16>, vector<128x128xbf16>, vector<8x128xf32> -> vector<8x128xf32>
    %46 = arith.addf %40, %45 : vector<8x128xf32>
    %47 = vector.extract_strided_slice %15 {offsets = [0, 5, 0], sizes = [8, 1, 128], strides = [1, 1, 1]} : vector<8x32x128xbf16> to vector<8x1x128xbf16>
    %48 = vector.shape_cast %47 : vector<8x1x128xbf16> to vector<8x128xbf16>
    %c5 = arith.constant 5 : index
    %c0_30 = arith.constant 0 : index
    %c0_31 = arith.constant 0 : index
    %49 = vector.load %arg6[%c5, %c0_30, %c0_31] : memref<32x128x128xbf16, #tpu.memory_space<vmem>>, vector<1x128x128xbf16>
    %50 = vector.shape_cast %49 : vector<1x128x128xbf16> to vector<128x128xbf16>
    %cst_32 = arith.constant dense<0.000000e+00> : vector<8x128xf32>
    %51 = tpu.matmul %48, %50, %cst_32 {dimension_numbers = #tpu.dot_dimension_numbers<[1], [0], [0], [1], [0, 0, 1, 1], [], []>} : vector<8x128xbf16>, vector<128x128xbf16>, vector<8x128xf32> -> vector<8x128xf32>
    %52 = arith.addf %46, %51 : vector<8x128xf32>
    %53 = vector.extract_strided_slice %15 {offsets = [0, 6, 0], sizes = [8, 1, 128], strides = [1, 1, 1]} : vector<8x32x128xbf16> to vector<8x1x128xbf16>
    %54 = vector.shape_cast %53 : vector<8x1x128xbf16> to vector<8x128xbf16>
    %c6 = arith.constant 6 : index
    %c0_33 = arith.constant 0 : index
    %c0_34 = arith.constant 0 : index
    %55 = vector.load %arg6[%c6, %c0_33, %c0_34] : memref<32x128x128xbf16, #tpu.memory_space<vmem>>, vector<1x128x128xbf16>
    %56 = vector.shape_cast %55 : vector<1x128x128xbf16> to vector<128x128xbf16>
    %cst_35 = arith.constant dense<0.000000e+00> : vector<8x128xf32>
    %57 = tpu.matmul %54, %56, %cst_35 {dimension_numbers = #tpu.dot_dimension_numbers<[1], [0], [0], [1], [0, 0, 1, 1], [], []>} : vector<8x128xbf16>, vector<128x128xbf16>, vector<8x128xf32> -> vector<8x128xf32>
    %58 = arith.addf %52, %57 : vector<8x128xf32>
    %59 = vector.extract_strided_slice %15 {offsets = [0, 7, 0], sizes = [8, 1, 128], strides = [1, 1, 1]} : vector<8x32x128xbf16> to vector<8x1x128xbf16>
    %60 = vector.shape_cast %59 : vector<8x1x128xbf16> to vector<8x128xbf16>
    %c7 = arith.constant 7 : index
    %c0_36 = arith.constant 0 : index
    %c0_37 = arith.constant 0 : index
    %61 = vector.load %arg6[%c7, %c0_36, %c0_37] : memref<32x128x128xbf16, #tpu.memory_space<vmem>>, vector<1x128x128xbf16>
    %62 = vector.shape_cast %61 : vector<1x128x128xbf16> to vector<128x128xbf16>
    %cst_38 = arith.constant dense<0.000000e+00> : vector<8x128xf32>
    %63 = tpu.matmul %60, %62, %cst_38 {dimension_numbers = #tpu.dot_dimension_numbers<[1], [0], [0], [1], [0, 0, 1, 1], [], []>} : vector<8x128xbf16>, vector<128x128xbf16>, vector<8x128xf32> -> vector<8x128xf32>
    %64 = arith.addf %58, %63 : vector<8x128xf32>
    %65 = vector.extract_strided_slice %15 {offsets = [0, 8, 0], sizes = [8, 1, 128], strides = [1, 1, 1]} : vector<8x32x128xbf16> to vector<8x1x128xbf16>
    %66 = vector.shape_cast %65 : vector<8x1x128xbf16> to vector<8x128xbf16>
    %c8 = arith.constant 8 : index
    %c0_39 = arith.constant 0 : index
    %c0_40 = arith.constant 0 : index
    %67 = vector.load %arg6[%c8, %c0_39, %c0_40] : memref<32x128x128xbf16, #tpu.memory_space<vmem>>, vector<1x128x128xbf16>
    %68 = vector.shape_cast %67 : vector<1x128x128xbf16> to vector<128x128xbf16>
    %cst_41 = arith.constant dense<0.000000e+00> : vector<8x128xf32>
    %69 = tpu.matmul %66, %68, %cst_41 {dimension_numbers = #tpu.dot_dimension_numbers<[1], [0], [0], [1], [0, 0, 1, 1], [], []>} : vector<8x128xbf16>, vector<128x128xbf16>, vector<8x128xf32> -> vector<8x128xf32>
    %70 = arith.addf %64, %69 : vector<8x128xf32>
    %71 = vector.extract_strided_slice %15 {offsets = [0, 9, 0], sizes = [8, 1, 128], strides = [1, 1, 1]} : vector<8x32x128xbf16> to vector<8x1x128xbf16>
    %72 = vector.shape_cast %71 : vector<8x1x128xbf16> to vector<8x128xbf16>
    %c9 = arith.constant 9 : index
    %c0_42 = arith.constant 0 : index
    %c0_43 = arith.constant 0 : index
    %73 = vector.load %arg6[%c9, %c0_42, %c0_43] : memref<32x128x128xbf16, #tpu.memory_space<vmem>>, vector<1x128x128xbf16>
    %74 = vector.shape_cast %73 : vector<1x128x128xbf16> to vector<128x128xbf16>
    %cst_44 = arith.constant dense<0.000000e+00> : vector<8x128xf32>
    %75 = tpu.matmul %72, %74, %cst_44 {dimension_numbers = #tpu.dot_dimension_numbers<[1], [0], [0], [1], [0, 0, 1, 1], [], []>} : vector<8x128xbf16>, vector<128x128xbf16>, vector<8x128xf32> -> vector<8x128xf32>
    %76 = arith.addf %70, %75 : vector<8x128xf32>
    %77 = vector.extract_strided_slice %15 {offsets = [0, 10, 0], sizes = [8, 1, 128], strides = [1, 1, 1]} : vector<8x32x128xbf16> to vector<8x1x128xbf16>
    %78 = vector.shape_cast %77 : vector<8x1x128xbf16> to vector<8x128xbf16>
    %c10 = arith.constant 10 : index
    %c0_45 = arith.constant 0 : index
    %c0_46 = arith.constant 0 : index
    %79 = vector.load %arg6[%c10, %c0_45, %c0_46] : memref<32x128x128xbf16, #tpu.memory_space<vmem>>, vector<1x128x128xbf16>
    %80 = vector.shape_cast %79 : vector<1x128x128xbf16> to vector<128x128xbf16>
    %cst_47 = arith.constant dense<0.000000e+00> : vector<8x128xf32>
    %81 = tpu.matmul %78, %80, %cst_47 {dimension_numbers = #tpu.dot_dimension_numbers<[1], [0], [0], [1], [0, 0, 1, 1], [], []>} : vector<8x128xbf16>, vector<128x128xbf16>, vector<8x128xf32> -> vector<8x128xf32>
    %82 = arith.addf %76, %81 : vector<8x128xf32>
    %83 = vector.extract_strided_slice %15 {offsets = [0, 11, 0], sizes = [8, 1, 128], strides = [1, 1, 1]} : vector<8x32x128xbf16> to vector<8x1x128xbf16>
    %84 = vector.shape_cast %83 : vector<8x1x128xbf16> to vector<8x128xbf16>
    %c11 = arith.constant 11 : index
    %c0_48 = arith.constant 0 : index
    %c0_49 = arith.constant 0 : index
    %85 = vector.load %arg6[%c11, %c0_48, %c0_49] : memref<32x128x128xbf16, #tpu.memory_space<vmem>>, vector<1x128x128xbf16>
    %86 = vector.shape_cast %85 : vector<1x128x128xbf16> to vector<128x128xbf16>
    %cst_50 = arith.constant dense<0.000000e+00> : vector<8x128xf32>
    %87 = tpu.matmul %84, %86, %cst_50 {dimension_numbers = #tpu.dot_dimension_numbers<[1], [0], [0], [1], [0, 0, 1, 1], [], []>} : vector<8x128xbf16>, vector<128x128xbf16>, vector<8x128xf32> -> vector<8x128xf32>
    %88 = arith.addf %82, %87 : vector<8x128xf32>
    %89 = vector.extract_strided_slice %15 {offsets = [0, 12, 0], sizes = [8, 1, 128], strides = [1, 1, 1]} : vector<8x32x128xbf16> to vector<8x1x128xbf16>
    %90 = vector.shape_cast %89 : vector<8x1x128xbf16> to vector<8x128xbf16>
    %c12 = arith.constant 12 : index
    %c0_51 = arith.constant 0 : index
    %c0_52 = arith.constant 0 : index
    %91 = vector.load %arg6[%c12, %c0_51, %c0_52] : memref<32x128x128xbf16, #tpu.memory_space<vmem>>, vector<1x128x128xbf16>
    %92 = vector.shape_cast %91 : vector<1x128x128xbf16> to vector<128x128xbf16>
    %cst_53 = arith.constant dense<0.000000e+00> : vector<8x128xf32>
    %93 = tpu.matmul %90, %92, %cst_53 {dimension_numbers = #tpu.dot_dimension_numbers<[1], [0], [0], [1], [0, 0, 1, 1], [], []>} : vector<8x128xbf16>, vector<128x128xbf16>, vector<8x128xf32> -> vector<8x128xf32>
    %94 = arith.addf %88, %93 : vector<8x128xf32>
    %95 = vector.extract_strided_slice %15 {offsets = [0, 13, 0], sizes = [8, 1, 128], strides = [1, 1, 1]} : vector<8x32x128xbf16> to vector<8x1x128xbf16>
    %96 = vector.shape_cast %95 : vector<8x1x128xbf16> to vector<8x128xbf16>
    %c13 = arith.constant 13 : index
    %c0_54 = arith.constant 0 : index
    %c0_55 = arith.constant 0 : index
    %97 = vector.load %arg6[%c13, %c0_54, %c0_55] : memref<32x128x128xbf16, #tpu.memory_space<vmem>>, vector<1x128x128xbf16>
    %98 = vector.shape_cast %97 : vector<1x128x128xbf16> to vector<128x128xbf16>
    %cst_56 = arith.constant dense<0.000000e+00> : vector<8x128xf32>
    %99 = tpu.matmul %96, %98, %cst_56 {dimension_numbers = #tpu.dot_dimension_numbers<[1], [0], [0], [1], [0, 0, 1, 1], [], []>} : vector<8x128xbf16>, vector<128x128xbf16>, vector<8x128xf32> -> vector<8x128xf32>
    %100 = arith.addf %94, %99 : vector<8x128xf32>
    %101 = vector.extract_strided_slice %15 {offsets = [0, 14, 0], sizes = [8, 1, 128], strides = [1, 1, 1]} : vector<8x32x128xbf16> to vector<8x1x128xbf16>
    %102 = vector.shape_cast %101 : vector<8x1x128xbf16> to vector<8x128xbf16>
    %c14 = arith.constant 14 : index
    %c0_57 = arith.constant 0 : index
    %c0_58 = arith.constant 0 : index
    %103 = vector.load %arg6[%c14, %c0_57, %c0_58] : memref<32x128x128xbf16, #tpu.memory_space<vmem>>, vector<1x128x128xbf16>
    %104 = vector.shape_cast %103 : vector<1x128x128xbf16> to vector<128x128xbf16>
    %cst_59 = arith.constant dense<0.000000e+00> : vector<8x128xf32>
    %105 = tpu.matmul %102, %104, %cst_59 {dimension_numbers = #tpu.dot_dimension_numbers<[1], [0], [0], [1], [0, 0, 1, 1], [], []>} : vector<8x128xbf16>, vector<128x128xbf16>, vector<8x128xf32> -> vector<8x128xf32>
    %106 = arith.addf %100, %105 : vector<8x128xf32>
    %107 = vector.extract_strided_slice %15 {offsets = [0, 15, 0], sizes = [8, 1, 128], strides = [1, 1, 1]} : vector<8x32x128xbf16> to vector<8x1x128xbf16>
    %108 = vector.shape_cast %107 : vector<8x1x128xbf16> to vector<8x128xbf16>
    %c15 = arith.constant 15 : index
    %c0_60 = arith.constant 0 : index
    %c0_61 = arith.constant 0 : index
    %109 = vector.load %arg6[%c15, %c0_60, %c0_61] : memref<32x128x128xbf16, #tpu.memory_space<vmem>>, vector<1x128x128xbf16>
    %110 = vector.shape_cast %109 : vector<1x128x128xbf16> to vector<128x128xbf16>
    %cst_62 = arith.constant dense<0.000000e+00> : vector<8x128xf32>
    %111 = tpu.matmul %108, %110, %cst_62 {dimension_numbers = #tpu.dot_dimension_numbers<[1], [0], [0], [1], [0, 0, 1, 1], [], []>} : vector<8x128xbf16>, vector<128x128xbf16>, vector<8x128xf32> -> vector<8x128xf32>
    %112 = arith.addf %106, %111 : vector<8x128xf32>
    %113 = vector.extract_strided_slice %15 {offsets = [0, 16, 0], sizes = [8, 1, 128], strides = [1, 1, 1]} : vector<8x32x128xbf16> to vector<8x1x128xbf16>
    %114 = vector.shape_cast %113 : vector<8x1x128xbf16> to vector<8x128xbf16>
    %c16 = arith.constant 16 : index
    %c0_63 = arith.constant 0 : index
    %c0_64 = arith.constant 0 : index
    %115 = vector.load %arg6[%c16, %c0_63, %c0_64] : memref<32x128x128xbf16, #tpu.memory_space<vmem>>, vector<1x128x128xbf16>
    %116 = vector.shape_cast %115 : vector<1x128x128xbf16> to vector<128x128xbf16>
    %cst_65 = arith.constant dense<0.000000e+00> : vector<8x128xf32>
    %117 = tpu.matmul %114, %116, %cst_65 {dimension_numbers = #tpu.dot_dimension_numbers<[1], [0], [0], [1], [0, 0, 1, 1], [], []>} : vector<8x128xbf16>, vector<128x128xbf16>, vector<8x128xf32> -> vector<8x128xf32>
    %118 = arith.addf %112, %117 : vector<8x128xf32>
    %119 = vector.extract_strided_slice %15 {offsets = [0, 17, 0], sizes = [8, 1, 128], strides = [1, 1, 1]} : vector<8x32x128xbf16> to vector<8x1x128xbf16>
    %120 = vector.shape_cast %119 : vector<8x1x128xbf16> to vector<8x128xbf16>
    %c17 = arith.constant 17 : index
    %c0_66 = arith.constant 0 : index
    %c0_67 = arith.constant 0 : index
    %121 = vector.load %arg6[%c17, %c0_66, %c0_67] : memref<32x128x128xbf16, #tpu.memory_space<vmem>>, vector<1x128x128xbf16>
    %122 = vector.shape_cast %121 : vector<1x128x128xbf16> to vector<128x128xbf16>
    %cst_68 = arith.constant dense<0.000000e+00> : vector<8x128xf32>
    %123 = tpu.matmul %120, %122, %cst_68 {dimension_numbers = #tpu.dot_dimension_numbers<[1], [0], [0], [1], [0, 0, 1, 1], [], []>} : vector<8x128xbf16>, vector<128x128xbf16>, vector<8x128xf32> -> vector<8x128xf32>
    %124 = arith.addf %118, %123 : vector<8x128xf32>
    %125 = vector.extract_strided_slice %15 {offsets = [0, 18, 0], sizes = [8, 1, 128], strides = [1, 1, 1]} : vector<8x32x128xbf16> to vector<8x1x128xbf16>
    %126 = vector.shape_cast %125 : vector<8x1x128xbf16> to vector<8x128xbf16>
    %c18 = arith.constant 18 : index
    %c0_69 = arith.constant 0 : index
    %c0_70 = arith.constant 0 : index
    %127 = vector.load %arg6[%c18, %c0_69, %c0_70] : memref<32x128x128xbf16, #tpu.memory_space<vmem>>, vector<1x128x128xbf16>
    %128 = vector.shape_cast %127 : vector<1x128x128xbf16> to vector<128x128xbf16>
    %cst_71 = arith.constant dense<0.000000e+00> : vector<8x128xf32>
    %129 = tpu.matmul %126, %128, %cst_71 {dimension_numbers = #tpu.dot_dimension_numbers<[1], [0], [0], [1], [0, 0, 1, 1], [], []>} : vector<8x128xbf16>, vector<128x128xbf16>, vector<8x128xf32> -> vector<8x128xf32>
    %130 = arith.addf %124, %129 : vector<8x128xf32>
    %131 = vector.extract_strided_slice %15 {offsets = [0, 19, 0], sizes = [8, 1, 128], strides = [1, 1, 1]} : vector<8x32x128xbf16> to vector<8x1x128xbf16>
    %132 = vector.shape_cast %131 : vector<8x1x128xbf16> to vector<8x128xbf16>
    %c19 = arith.constant 19 : index
    %c0_72 = arith.constant 0 : index
    %c0_73 = arith.constant 0 : index
    %133 = vector.load %arg6[%c19, %c0_72, %c0_73] : memref<32x128x128xbf16, #tpu.memory_space<vmem>>, vector<1x128x128xbf16>
    %134 = vector.shape_cast %133 : vector<1x128x128xbf16> to vector<128x128xbf16>
    %cst_74 = arith.constant dense<0.000000e+00> : vector<8x128xf32>
    %135 = tpu.matmul %132, %134, %cst_74 {dimension_numbers = #tpu.dot_dimension_numbers<[1], [0], [0], [1], [0, 0, 1, 1], [], []>} : vector<8x128xbf16>, vector<128x128xbf16>, vector<8x128xf32> -> vector<8x128xf32>
    %136 = arith.addf %130, %135 : vector<8x128xf32>
    %137 = vector.extract_strided_slice %15 {offsets = [0, 20, 0], sizes = [8, 1, 128], strides = [1, 1, 1]} : vector<8x32x128xbf16> to vector<8x1x128xbf16>
    %138 = vector.shape_cast %137 : vector<8x1x128xbf16> to vector<8x128xbf16>
    %c20 = arith.constant 20 : index
    %c0_75 = arith.constant 0 : index
    %c0_76 = arith.constant 0 : index
    %139 = vector.load %arg6[%c20, %c0_75, %c0_76] : memref<32x128x128xbf16, #tpu.memory_space<vmem>>, vector<1x128x128xbf16>
    %140 = vector.shape_cast %139 : vector<1x128x128xbf16> to vector<128x128xbf16>
    %cst_77 = arith.constant dense<0.000000e+00> : vector<8x128xf32>
    %141 = tpu.matmul %138, %140, %cst_77 {dimension_numbers = #tpu.dot_dimension_numbers<[1], [0], [0], [1], [0, 0, 1, 1], [], []>} : vector<8x128xbf16>, vector<128x128xbf16>, vector<8x128xf32> -> vector<8x128xf32>
    %142 = arith.addf %136, %141 : vector<8x128xf32>
    %143 = vector.extract_strided_slice %15 {offsets = [0, 21, 0], sizes = [8, 1, 128], strides = [1, 1, 1]} : vector<8x32x128xbf16> to vector<8x1x128xbf16>
    %144 = vector.shape_cast %143 : vector<8x1x128xbf16> to vector<8x128xbf16>
    %c21 = arith.constant 21 : index
    %c0_78 = arith.constant 0 : index
    %c0_79 = arith.constant 0 : index
    %145 = vector.load %arg6[%c21, %c0_78, %c0_79] : memref<32x128x128xbf16, #tpu.memory_space<vmem>>, vector<1x128x128xbf16>
    %146 = vector.shape_cast %145 : vector<1x128x128xbf16> to vector<128x128xbf16>
    %cst_80 = arith.constant dense<0.000000e+00> : vector<8x128xf32>
    %147 = tpu.matmul %144, %146, %cst_80 {dimension_numbers = #tpu.dot_dimension_numbers<[1], [0], [0], [1], [0, 0, 1, 1], [], []>} : vector<8x128xbf16>, vector<128x128xbf16>, vector<8x128xf32> -> vector<8x128xf32>
    %148 = arith.addf %142, %147 : vector<8x128xf32>
    %149 = vector.extract_strided_slice %15 {offsets = [0, 22, 0], sizes = [8, 1, 128], strides = [1, 1, 1]} : vector<8x32x128xbf16> to vector<8x1x128xbf16>
    %150 = vector.shape_cast %149 : vector<8x1x128xbf16> to vector<8x128xbf16>
    %c22 = arith.constant 22 : index
    %c0_81 = arith.constant 0 : index
    %c0_82 = arith.constant 0 : index
    %151 = vector.load %arg6[%c22, %c0_81, %c0_82] : memref<32x128x128xbf16, #tpu.memory_space<vmem>>, vector<1x128x128xbf16>
    %152 = vector.shape_cast %151 : vector<1x128x128xbf16> to vector<128x128xbf16>
    %cst_83 = arith.constant dense<0.000000e+00> : vector<8x128xf32>
    %153 = tpu.matmul %150, %152, %cst_83 {dimension_numbers = #tpu.dot_dimension_numbers<[1], [0], [0], [1], [0, 0, 1, 1], [], []>} : vector<8x128xbf16>, vector<128x128xbf16>, vector<8x128xf32> -> vector<8x128xf32>
    %154 = arith.addf %148, %153 : vector<8x128xf32>
    %155 = vector.extract_strided_slice %15 {offsets = [0, 23, 0], sizes = [8, 1, 128], strides = [1, 1, 1]} : vector<8x32x128xbf16> to vector<8x1x128xbf16>
    %156 = vector.shape_cast %155 : vector<8x1x128xbf16> to vector<8x128xbf16>
    %c23 = arith.constant 23 : index
    %c0_84 = arith.constant 0 : index
    %c0_85 = arith.constant 0 : index
    %157 = vector.load %arg6[%c23, %c0_84, %c0_85] : memref<32x128x128xbf16, #tpu.memory_space<vmem>>, vector<1x128x128xbf16>
    %158 = vector.shape_cast %157 : vector<1x128x128xbf16> to vector<128x128xbf16>
    %cst_86 = arith.constant dense<0.000000e+00> : vector<8x128xf32>
    %159 = tpu.matmul %156, %158, %cst_86 {dimension_numbers = #tpu.dot_dimension_numbers<[1], [0], [0], [1], [0, 0, 1, 1], [], []>} : vector<8x128xbf16>, vector<128x128xbf16>, vector<8x128xf32> -> vector<8x128xf32>
    %160 = arith.addf %154, %159 : vector<8x128xf32>
    %161 = vector.extract_strided_slice %15 {offsets = [0, 24, 0], sizes = [8, 1, 128], strides = [1, 1, 1]} : vector<8x32x128xbf16> to vector<8x1x128xbf16>
    %162 = vector.shape_cast %161 : vector<8x1x128xbf16> to vector<8x128xbf16>
    %c24 = arith.constant 24 : index
    %c0_87 = arith.constant 0 : index
    %c0_88 = arith.constant 0 : index
    %163 = vector.load %arg6[%c24, %c0_87, %c0_88] : memref<32x128x128xbf16, #tpu.memory_space<vmem>>, vector<1x128x128xbf16>
    %164 = vector.shape_cast %163 : vector<1x128x128xbf16> to vector<128x128xbf16>
    %cst_89 = arith.constant dense<0.000000e+00> : vector<8x128xf32>
    %165 = tpu.matmul %162, %164, %cst_89 {dimension_numbers = #tpu.dot_dimension_numbers<[1], [0], [0], [1], [0, 0, 1, 1], [], []>} : vector<8x128xbf16>, vector<128x128xbf16>, vector<8x128xf32> -> vector<8x128xf32>
    %166 = arith.addf %160, %165 : vector<8x128xf32>
    %167 = vector.extract_strided_slice %15 {offsets = [0, 25, 0], sizes = [8, 1, 128], strides = [1, 1, 1]} : vector<8x32x128xbf16> to vector<8x1x128xbf16>
    %168 = vector.shape_cast %167 : vector<8x1x128xbf16> to vector<8x128xbf16>
    %c25 = arith.constant 25 : index
    %c0_90 = arith.constant 0 : index
    %c0_91 = arith.constant 0 : index
    %169 = vector.load %arg6[%c25, %c0_90, %c0_91] : memref<32x128x128xbf16, #tpu.memory_space<vmem>>, vector<1x128x128xbf16>
    %170 = vector.shape_cast %169 : vector<1x128x128xbf16> to vector<128x128xbf16>
    %cst_92 = arith.constant dense<0.000000e+00> : vector<8x128xf32>
    %171 = tpu.matmul %168, %170, %cst_92 {dimension_numbers = #tpu.dot_dimension_numbers<[1], [0], [0], [1], [0, 0, 1, 1], [], []>} : vector<8x128xbf16>, vector<128x128xbf16>, vector<8x128xf32> -> vector<8x128xf32>
    %172 = arith.addf %166, %171 : vector<8x128xf32>
    %173 = vector.extract_strided_slice %15 {offsets = [0, 26, 0], sizes = [8, 1, 128], strides = [1, 1, 1]} : vector<8x32x128xbf16> to vector<8x1x128xbf16>
    %174 = vector.shape_cast %173 : vector<8x1x128xbf16> to vector<8x128xbf16>
    %c26 = arith.constant 26 : index
    %c0_93 = arith.constant 0 : index
    %c0_94 = arith.constant 0 : index
    %175 = vector.load %arg6[%c26, %c0_93, %c0_94] : memref<32x128x128xbf16, #tpu.memory_space<vmem>>, vector<1x128x128xbf16>
    %176 = vector.shape_cast %175 : vector<1x128x128xbf16> to vector<128x128xbf16>
    %cst_95 = arith.constant dense<0.000000e+00> : vector<8x128xf32>
    %177 = tpu.matmul %174, %176, %cst_95 {dimension_numbers = #tpu.dot_dimension_numbers<[1], [0], [0], [1], [0, 0, 1, 1], [], []>} : vector<8x128xbf16>, vector<128x128xbf16>, vector<8x128xf32> -> vector<8x128xf32>
    %178 = arith.addf %172, %177 : vector<8x128xf32>
    %179 = vector.extract_strided_slice %15 {offsets = [0, 27, 0], sizes = [8, 1, 128], strides = [1, 1, 1]} : vector<8x32x128xbf16> to vector<8x1x128xbf16>
    %180 = vector.shape_cast %179 : vector<8x1x128xbf16> to vector<8x128xbf16>
    %c27 = arith.constant 27 : index
    %c0_96 = arith.constant 0 : index
    %c0_97 = arith.constant 0 : index
    %181 = vector.load %arg6[%c27, %c0_96, %c0_97] : memref<32x128x128xbf16, #tpu.memory_space<vmem>>, vector<1x128x128xbf16>
    %182 = vector.shape_cast %181 : vector<1x128x128xbf16> to vector<128x128xbf16>
    %cst_98 = arith.constant dense<0.000000e+00> : vector<8x128xf32>
    %183 = tpu.matmul %180, %182, %cst_98 {dimension_numbers = #tpu.dot_dimension_numbers<[1], [0], [0], [1], [0, 0, 1, 1], [], []>} : vector<8x128xbf16>, vector<128x128xbf16>, vector<8x128xf32> -> vector<8x128xf32>
    %184 = arith.addf %178, %183 : vector<8x128xf32>
    %185 = vector.extract_strided_slice %15 {offsets = [0, 28, 0], sizes = [8, 1, 128], strides = [1, 1, 1]} : vector<8x32x128xbf16> to vector<8x1x128xbf16>
    %186 = vector.shape_cast %185 : vector<8x1x128xbf16> to vector<8x128xbf16>
    %c28 = arith.constant 28 : index
    %c0_99 = arith.constant 0 : index
    %c0_100 = arith.constant 0 : index
    %187 = vector.load %arg6[%c28, %c0_99, %c0_100] : memref<32x128x128xbf16, #tpu.memory_space<vmem>>, vector<1x128x128xbf16>
    %188 = vector.shape_cast %187 : vector<1x128x128xbf16> to vector<128x128xbf16>
    %cst_101 = arith.constant dense<0.000000e+00> : vector<8x128xf32>
    %189 = tpu.matmul %186, %188, %cst_101 {dimension_numbers = #tpu.dot_dimension_numbers<[1], [0], [0], [1], [0, 0, 1, 1], [], []>} : vector<8x128xbf16>, vector<128x128xbf16>, vector<8x128xf32> -> vector<8x128xf32>
    %190 = arith.addf %184, %189 : vector<8x128xf32>
    %191 = vector.extract_strided_slice %15 {offsets = [0, 29, 0], sizes = [8, 1, 128], strides = [1, 1, 1]} : vector<8x32x128xbf16> to vector<8x1x128xbf16>
    %192 = vector.shape_cast %191 : vector<8x1x128xbf16> to vector<8x128xbf16>
    %c29 = arith.constant 29 : index
    %c0_102 = arith.constant 0 : index
    %c0_103 = arith.constant 0 : index
    %193 = vector.load %arg6[%c29, %c0_102, %c0_103] : memref<32x128x128xbf16, #tpu.memory_space<vmem>>, vector<1x128x128xbf16>
    %194 = vector.shape_cast %193 : vector<1x128x128xbf16> to vector<128x128xbf16>
    %cst_104 = arith.constant dense<0.000000e+00> : vector<8x128xf32>
    %195 = tpu.matmul %192, %194, %cst_104 {dimension_numbers = #tpu.dot_dimension_numbers<[1], [0], [0], [1], [0, 0, 1, 1], [], []>} : vector<8x128xbf16>, vector<128x128xbf16>, vector<8x128xf32> -> vector<8x128xf32>
    %196 = arith.addf %190, %195 : vector<8x128xf32>
    %197 = vector.extract_strided_slice %15 {offsets = [0, 30, 0], sizes = [8, 1, 128], strides = [1, 1, 1]} : vector<8x32x128xbf16> to vector<8x1x128xbf16>
    %198 = vector.shape_cast %197 : vector<8x1x128xbf16> to vector<8x128xbf16>
    %c30 = arith.constant 30 : index
    %c0_105 = arith.constant 0 : index
    %c0_106 = arith.constant 0 : index
    %199 = vector.load %arg6[%c30, %c0_105, %c0_106] : memref<32x128x128xbf16, #tpu.memory_space<vmem>>, vector<1x128x128xbf16>
    %200 = vector.shape_cast %199 : vector<1x128x128xbf16> to vector<128x128xbf16>
    %cst_107 = arith.constant dense<0.000000e+00> : vector<8x128xf32>
    %201 = tpu.matmul %198, %200, %cst_107 {dimension_numbers = #tpu.dot_dimension_numbers<[1], [0], [0], [1], [0, 0, 1, 1], [], []>} : vector<8x128xbf16>, vector<128x128xbf16>, vector<8x128xf32> -> vector<8x128xf32>
    %202 = arith.addf %196, %201 : vector<8x128xf32>
    %203 = vector.extract_strided_slice %15 {offsets = [0, 31, 0], sizes = [8, 1, 128], strides = [1, 1, 1]} : vector<8x32x128xbf16> to vector<8x1x128xbf16>
    %204 = vector.shape_cast %203 : vector<8x1x128xbf16> to vector<8x128xbf16>
    %c31 = arith.constant 31 : index
    %c0_108 = arith.constant 0 : index
    %c0_109 = arith.constant 0 : index
    %205 = vector.load %arg6[%c31, %c0_108, %c0_109] : memref<32x128x128xbf16, #tpu.memory_space<vmem>>, vector<1x128x128xbf16>
    %206 = vector.shape_cast %205 : vector<1x128x128xbf16> to vector<128x128xbf16>
    %cst_110 = arith.constant dense<0.000000e+00> : vector<8x128xf32>
    %207 = tpu.matmul %204, %206, %cst_110 {dimension_numbers = #tpu.dot_dimension_numbers<[1], [0], [0], [1], [0, 0, 1, 1], [], []>} : vector<8x128xbf16>, vector<128x128xbf16>, vector<8x128xf32> -> vector<8x128xf32>
    %208 = arith.addf %202, %207 : vector<8x128xf32>
    %c0_111 = arith.constant 0 : index
    %c0_112 = arith.constant 0 : index
    %209 = vector.load %arg7[%c0_111, %c0_112] : memref<1x128xf32, #tpu.memory_space<vmem>>, vector<1x128xf32>
    %210 = vector.broadcast %209 : vector<1x128xf32> to vector<8x128xf32>
    %211 = arith.addf %208, %210 : vector<8x128xf32>
    %cst_113 = arith.constant 0.000000e+00 : f32
    %212 = vector.broadcast %cst_113 : f32 to vector<8x128xf32>
    %213 = arith.maximumf %211, %212 : vector<8x128xf32>
    %214 = arith.truncf %213 : vector<8x128xf32> to vector<8x128xbf16>
    %c0_114 = arith.constant 0 : index
    %c0_115 = arith.constant 0 : index
    %215 = vector.load %arg8[%c0_114, %c0_115] : memref<128x64xbf16, #tpu.memory_space<vmem>>, vector<128x64xbf16>
    %cst_116 = arith.constant dense<0.000000e+00> : vector<8x64xf32>
    %216 = tpu.matmul %214, %215, %cst_116 {dimension_numbers = #tpu.dot_dimension_numbers<[1], [0], [0], [1], [0, 0, 1, 1], [], []>} : vector<8x128xbf16>, vector<128x64xbf16>, vector<8x64xf32> -> vector<8x64xf32>
    %c0_117 = arith.constant 0 : index
    %c0_118 = arith.constant 0 : index
    %217 = vector.load %arg9[%c0_117, %c0_118] : memref<1x64xf32, #tpu.memory_space<vmem>>, vector<1x64xf32>
    %218 = vector.broadcast %217 : vector<1x64xf32> to vector<8x64xf32>
    %219 = arith.addf %216, %218 : vector<8x64xf32>
    %cst_119 = arith.constant 0.000000e+00 : f32
    %220 = vector.broadcast %cst_119 : f32 to vector<8x64xf32>
    %221 = arith.maximumf %219, %220 : vector<8x64xf32>
    %222 = arith.truncf %221 : vector<8x64xf32> to vector<8x64xbf16>
    %c0_120 = arith.constant 0 : index
    %c0_121 = arith.constant 0 : index
    %223 = vector.load %arg10[%c0_120, %c0_121] : memref<64x19xbf16, #tpu.memory_space<vmem>>, vector<64x19xbf16>
    %cst_122 = arith.constant dense<0.000000e+00> : vector<8x19xf32>
    %224 = tpu.matmul %222, %223, %cst_122 {dimension_numbers = #tpu.dot_dimension_numbers<[1], [0], [0], [1], [0, 0, 1, 1], [], []>} : vector<8x64xbf16>, vector<64x19xbf16>, vector<8x19xf32> -> vector<8x19xf32>
    %c0_123 = arith.constant 0 : index
    %c0_124 = arith.constant 0 : index
    %225 = vector.load %arg11[%c0_123, %c0_124] : memref<1x19xf32, #tpu.memory_space<vmem>>, vector<1x19xf32>
    %226 = vector.broadcast %225 : vector<1x19xf32> to vector<8x19xf32>
    %227 = arith.addf %224, %226 : vector<8x19xf32>
    %cst_125 = arith.constant dense<0xFF800000> : vector<8xf32>
    %228 = vector.multi_reduction <maximumf>, %227, %cst_125 [1] : vector<8x19xf32> to vector<8xf32>
    %229 = vector.shape_cast %228 : vector<8xf32> to vector<8x1xf32>
    %230 = vector.broadcast %229 : vector<8x1xf32> to vector<8x19xf32>
    %231 = arith.subf %227, %230 : vector<8x19xf32>
    %232 = math.exp %231 : vector<8x19xf32>
    %cst_126 = arith.constant dense<0.000000e+00> : vector<8xf32>
    %233 = vector.multi_reduction <add>, %232, %cst_126 [1] : vector<8x19xf32> to vector<8xf32>
    %234 = vector.shape_cast %233 : vector<8xf32> to vector<8x1xf32>
    %235 = vector.broadcast %234 : vector<8x1xf32> to vector<8x19xf32>
    %236 = arith.divf %232, %235 : vector<8x19xf32>
    %c0_127 = arith.constant 0 : index
    %c0_128 = arith.constant 0 : index
    %237 = vector.load %arg12[%c0_127, %c0_128] : memref<8x19xf32, #tpu.memory_space<vmem>>, vector<8x19xf32>
    tpu.vector_store %arg12[%c0_127, %c0_128], %236 {strides = array<i32>} : memref<8x19xf32, #tpu.memory_space<vmem>>, vector<8x19xf32>,
    return
  }
  func.func @transform_0(%arg0: i32) -> (i32, i32, i32) {
    %c0_i32 = arith.constant 0 : i32
    %c0_i32_0 = arith.constant 0 : i32
    %c0_i32_1 = arith.constant 0 : i32
    return %arg0, %c0_i32, %c0_i32_0 : i32, i32, i32
  }
  func.func @transform_1(%arg0: i32) -> (i32, i32) {
    %c0_i32 = arith.constant 0 : i32
    %c0_i32_0 = arith.constant 0 : i32
    %c0_i32_1 = arith.constant 0 : i32
    return %c0_i32, %c0_i32_0 : i32, i32
  }
  func.func @transform_2(%arg0: i32) -> (i32, i32) {
    %c0_i32 = arith.constant 0 : i32
    %c0_i32_0 = arith.constant 0 : i32
    %c0_i32_1 = arith.constant 0 : i32
    return %c0_i32, %c0_i32_0 : i32, i32
  }
  func.func @transform_3(%arg0: i32) -> (i32, i32) {
    %c0_i32 = arith.constant 0 : i32
    %c0_i32_0 = arith.constant 0 : i32
    %c0_i32_1 = arith.constant 0 : i32
    return %c0_i32, %c0_i32_0 : i32, i32
  }
  func.func @transform_4(%arg0: i32) -> (i32, i32) {
    %c0_i32 = arith.constant 0 : i32
    %c0_i32_0 = arith.constant 0 : i32
    %c0_i32_1 = arith.constant 0 : i32
    return %c0_i32, %c0_i32_0 : i32, i32
  }
  func.func @transform_5(%arg0: i32) -> (i32, i32, i32) {
    %c0_i32 = arith.constant 0 : i32
    %c0_i32_0 = arith.constant 0 : i32
    %c0_i32_1 = arith.constant 0 : i32
    %c0_i32_2 = arith.constant 0 : i32
    return %c0_i32, %c0_i32_0, %c0_i32_1 : i32, i32, i32
  }
  func.func @transform_6(%arg0: i32) -> (i32, i32) {
    %c0_i32 = arith.constant 0 : i32
    %c0_i32_0 = arith.constant 0 : i32
    %c0_i32_1 = arith.constant 0 : i32
    return %c0_i32, %c0_i32_0 : i32, i32
  }
  func.func @transform_7(%arg0: i32) -> (i32, i32) {
    %c0_i32 = arith.constant 0 : i32
    %c0_i32_0 = arith.constant 0 : i32
    %c0_i32_1 = arith.constant 0 : i32
    return %c0_i32, %c0_i32_0 : i32, i32
  }
  func.func @transform_8(%arg0: i32) -> (i32, i32) {
    %c0_i32 = arith.constant 0 : i32
    %c0_i32_0 = arith.constant 0 : i32
    %c0_i32_1 = arith.constant 0 : i32
    return %c0_i32, %c0_i32_0 : i32, i32
  }
  func.func @transform_9(%arg0: i32) -> (i32, i32) {
    %c0_i32 = arith.constant 0 : i32
    %c0_i32_0 = arith.constant 0 : i32
    %c0_i32_1 = arith.constant 0 : i32
    return %c0_i32, %c0_i32_0 : i32, i32
  }
  func.func @transform_10(%arg0: i32) -> (i32, i32) {
    %c0_i32 = arith.constant 0 : i32
    %c0_i32_0 = arith.constant 0 : i32
    %c0_i32_1 = arith.constant 0 : i32
    return %c0_i32, %c0_i32_0 : i32, i32
  }
  func.func @transform_11(%arg0: i32) -> (i32, i32) {
    %c0_i32 = arith.constant 0 : i32
    %c0_i32_0 = arith.constant 0 : i32
    return %arg0, %c0_i32 : i32, i32
  }
}

</mosaic_0001>

<llo_original>
// kernel: mnist_addition_cnn.1
$region0: #{mnist_addition_cnn.1}
  #allocation0 [shape = 'u32[]', space=smem, size = 0x4, offset = 0x4, fixed_abs, tag = 'smem constant byte address 0x4 - core index']
  #allocation1 [shape = 'u32[72,128]{1,0:T(1,128)}', space=vmem, size = 0x9000, scoped, tag = 'internal scratch']
  #allocation2 [shape = 'bf16[8,32,128]{2,1,0:T(8,128)(2,1)}', space=vmem, size = 0x10000, scoped, tag = 'scratch operand']
  %s0 = inlined_call_operand.vmem [shape: f32[8,16,128], index: 0, kind: input, shape index: {}]
  %s1 = inlined_call_operand.vmem [shape: f32[16,9], index: 1, kind: input, shape index: {}]
  %s2 = inlined_call_operand.vmem [shape: f32[16,1], index: 2, kind: input, shape index: {}]
  %s3 = inlined_call_operand.vmem [shape: bf16[32,144], index: 3, kind: input, shape index: {}]
  %s4 = inlined_call_operand.vmem [shape: f32[32,1], index: 4, kind: input, shape index: {}]
  %s5 = inlined_call_operand.vmem [shape: bf16[32,128,128], index: 5, kind: input, shape index: {}]
  %s6 = inlined_call_operand.vmem [shape: f32[1,128], index: 6, kind: input, shape index: {}]
  %s7 = inlined_call_operand.vmem [shape: bf16[128,64], index: 7, kind: input, shape index: {}]
  %s8 = inlined_call_operand.vmem [shape: f32[1,64], index: 8, kind: input, shape index: {}]
  %s9 = inlined_call_operand.vmem [shape: bf16[64,19], index: 9, kind: input, shape index: {}]
  %s10 = inlined_call_operand.vmem [shape: f32[1,19], index: 10, kind: input, shape index: {}]
  %s11 = inlined_call_operand.vmem [shape: f32[8,19], index: 11, kind: output, shape index: {}]
  %s12 = sld [smem:[#allocation0]]
  $region61: #{mnist_addition_cnn.1} parent=0
    _
  %s14 = ssub.s32 1, %s12
  %s15 = scalar_select 0, %s14, %s12
  // Predicated region
  $region2: #{mnist_addition_cnn.1} parent=0 // pred_check
    _
  $region3: #{mnist_addition_cnn.1} parent=0 // pred_check_branch
    %17 = sbr.rel (0) target = $region5
  $region4: #{mnist_addition_cnn.1} parent=0 // pred_region
    _
  $region5: #{mnist_addition_cnn.1} parent=0 // pred_fallthru
    _
  // Predicated region
  $region6: #{mnist_addition_cnn.1} parent=0 // pred_check
    _
  $region7: #{mnist_addition_cnn.1} parent=0 // pred_check_branch
    %19 = sbr.rel (0) target = $region9
  $region8: #{mnist_addition_cnn.1} parent=0 // pred_region
    _
  $region9: #{mnist_addition_cnn.1} parent=0 // pred_fallthru
    _
  // Predicated region
  $region10: #{mnist_addition_cnn.1} parent=0 // pred_check
    _
  $region11: #{mnist_addition_cnn.1} parent=0 // pred_check_branch
    %21 = sbr.rel (0) target = $region13
  $region12: #{mnist_addition_cnn.1} parent=0 // pred_region
    _
  $region13: #{mnist_addition_cnn.1} parent=0 // pred_fallthru
    _
  // Predicated region
  $region14: #{mnist_addition_cnn.1} parent=0 // pred_check
    _
  $region15: #{mnist_addition_cnn.1} parent=0 // pred_check_branch
    %23 = sbr.rel (0) target = $region17
  $region16: #{mnist_addition_cnn.1} parent=0 // pred_region
    _
  $region17: #{mnist_addition_cnn.1} parent=0 // pred_fallthru
    _
  // Predicated region
  $region18: #{mnist_addition_cnn.1} parent=0 // pred_check
    _
  $region19: #{mnist_addition_cnn.1} parent=0 // pred_check_branch
    %25 = sbr.rel (0) target = $region21
  $region20: #{mnist_addition_cnn.1} parent=0 // pred_region
    _
  $region21: #{mnist_addition_cnn.1} parent=0 // pred_fallthru
    _
  // Predicated region
  $region22: #{mnist_addition_cnn.1} parent=0 // pred_check
    _
  $region23: #{mnist_addition_cnn.1} parent=0 // pred_check_branch
    %27 = sbr.rel (0) target = $region25
  $region24: #{mnist_addition_cnn.1} parent=0 // pred_region
    _
  $region25: #{mnist_addition_cnn.1} parent=0 // pred_fallthru
    _
  // Predicated region
  $region26: #{mnist_addition_cnn.1} parent=0 // pred_check
    _
  $region27: #{mnist_addition_cnn.1} parent=0 // pred_check_branch
    %29 = sbr.rel (0) target = $region29
  $region28: #{mnist_addition_cnn.1} parent=0 // pred_region
    _
  $region29: #{mnist_addition_cnn.1} parent=0 // pred_fallthru
    _
  // Predicated region
  $region30: #{mnist_addition_cnn.1} parent=0 // pred_check
    _
  $region31: #{mnist_addition_cnn.1} parent=0 // pred_check_branch
    %31 = sbr.rel (0) target = $region33
  $region32: #{mnist_addition_cnn.1} parent=0 // pred_region
    _
  $region33: #{mnist_addition_cnn.1} parent=0 // pred_fallthru
    _
  // Predicated region
  $region34: #{mnist_addition_cnn.1} parent=0 // pred_check
    _
  $region35: #{mnist_addition_cnn.1} parent=0 // pred_check_branch
    %33 = sbr.rel (0) target = $region37
  $region36: #{mnist_addition_cnn.1} parent=0 // pred_region
    _
  $region37: #{mnist_addition_cnn.1} parent=0 // pred_fallthru
    _
  // Predicated region
  $region38: #{mnist_addition_cnn.1} parent=0 // pred_check
    _
  $region39: #{mnist_addition_cnn.1} parent=0 // pred_check_branch
    %35 = sbr.rel (0) target = $region41
  $region40: #{mnist_addition_cnn.1} parent=0 // pred_region
    _
  $region41: #{mnist_addition_cnn.1} parent=0 // pred_fallthru
    _
  // Predicated region
  $region42: #{mnist_addition_cnn.1} parent=0 // pred_check
    _
  $region43: #{mnist_addition_cnn.1} parent=0 // pred_check_branch
    %37 = sbr.rel (0) target = $region45
  $region44: #{mnist_addition_cnn.1} parent=0 // pred_region
    _
  $region45: #{mnist_addition_cnn.1} parent=0 // pred_fallthru
    _
  %v39 = vlaneseq
  %v40 = vand.u32 %v39, 127
  %v41 = vand.u32 %v40, 15
  %vm42 = vcmp.lt.s32.totalorder %v41, 14
  %v43 = vsel %vm42, 1, 0
  %v44 = vcvt.s32.f32 %v43
  %v45 = vld [vmem:[%s1] sm:$0xff]
  %v46 = vld [vmem:[%s1 + $0x8] sm:$0xff]
  %v47 = vld [vmem:[%s2] sm:$0xff]
  %v48 = vld [vmem:[%s2 + $0x8] sm:$0xff]
  %v49 = vld [vmem:[%s3] sm:$0xff]
  %v50 = vld [vmem:[%s3 + $0x8] sm:$0xff]
  %v51 = vld [vmem:[%s3 + $0x10] sm:$0xff]
  %v52 = vld [vmem:[%s3 + $0x18] sm:$0xff]
  %v53 = vld [vmem:[%s4] sm:$0xff]
  %v54 = vld [vmem:[%s4 + $0x8] sm:$0xff]
  %v55 = vld [vmem:[%s4 + $0x10] sm:$0xff]
  %v56 = vld [vmem:[%s4 + $0x18] sm:$0xff]
  loop: start=0, step=1, limit=8
  $region46: #{mnist_addition_cnn.1} parent=0 // loop_pre_header
    _
  $region47: #{mnist_addition_cnn.1} parent=0 // loop_header
    %s58 = sphi 0, %s62
    %p59 = scmp.ge.s32.totalorder %s58, 8
  $region48: #{mnist_addition_cnn.1} parent=0 // loop_header_branch
    %61 = sbr.rel (%p59) target = $region52
  $region49: #{mnist_addition_cnn.1} parent=0 // loop_body
    %s63 = smul.u32 %s58, 16
    %s64 = scalar_lea.vmem %s0, %s63
    %v65 = vld [vmem:[%s64] sm:$0xff]
    %v66 = vld [vmem:[%s64 + $0x8] sm:$0xff]
    %v68 = vrot.slane %v65, 1
    %v71 = vrot.slane %v66, 2
    %vm73 = vcmask 1042432
    %v74 = vsel %vm73, %v65, %v68
    %vm75 = vcmask 1043456
    %v76 = vsel %vm75, %v74, %v68
    %vm77 = vcmask 1044480
    %v78 = vsel %vm77, %v76, %v68
    %vm79 = vcmask 1045504
    %v80 = vsel %vm79, %v78, %v71
    %vm81 = vcmask 1046528
    %v82 = vsel %vm81, %v80, %v71
    %vm83 = vcmask 900096
    %v84 = vsel %vm83, %v82, 0.0
    %v85 = vsel %vm83, %v71, 0.0
    %v86 = vrot.slane %v65, 2
    %v88 = vrot.slane %v66, 3
    %vm90 = vcmask 1040384
    %vm91 = vcmask 1041408
    %v92 = vsel %vm91, %v68, %v68
    %v93 = vsel %vm73, %v92, %v86
    %v94 = vsel %vm75, %v93, %v86
    %v95 = vsel %vm77, %v94, %v86
    %v96 = vsel %vm79, %v95, %v88
    %v97 = vsel %vm81, %v96, %v88
    %v98 = vsel %vm83, %v97, 0.0
    %v99 = vsel %vm83, %v88, 0.0
    %v100 = vrot.slane %v65, 4
    %v102 = vrot.slane %v66, 5
    %v104 = vrot.slane %v66, 6
    %v106 = vsel %vm91, %v100, %v100
    %v107 = vsel %vm73, %v106, %v102
    %v108 = vsel %vm75, %v107, %v102
    %v109 = vsel %vm77, %v108, %v102
    %v110 = vsel %vm79, %v109, %v104
    %v111 = vsel %vm81, %v110, %v104
    %v112 = vsel %vm83, %v111, 0.0
    %v113 = vsel %vm83, %v104, 0.0
    %v114 = vrot.slane %v65, 5
    %v116 = vrot.slane %v66, 7
    %v118 = vsel %vm91, %v114, %v114
    %v119 = vsel %vm73, %v118, %v104
    %v120 = vsel %vm75, %v119, %v104
    %v121 = vsel %vm77, %v120, %v104
    %v122 = vsel %vm79, %v121, %v116
    %v123 = vsel %vm81, %v122, %v116
    %v124 = vsel %vm83, %v123, 0.0
    %v125 = vsel %vm83, %v116, 0.0
    %vm126 = vcmask 72704
    %v128 = vsel %vm126, %v45, 0
    %v131 = vsel %vm126, %v46, 0
    %v134 = vsel %vm90, %v85, 0
    %v137 = vsel %vm90, %v99, 0
    %v140 = vsel %vm90, %v113, 0
    %v143 = vsel %vm90, %v125, 0
    %145 = vmatpush.msra.mxu0 0.0
    %146 = vmatpush.msra.mxu0 0.0
    %147 = vmatpush.msra.mxu0 0.0
    %148 = vmatpush.msra.mxu0 0.0
    %149 = vmatpush.msra.mxu0 0.0
    %150 = vmatpush.msra.mxu0 0.0
    %151 = vmatpush.msra.mxu0 0.0
    %152 = vmatpush.msra.mxu0 0.0
    %153 = vmatpush.msra.mxu0 0.0
    %154 = vmatpush.msra.mxu0 0.0
    %155 = vmatpush.msra.mxu0 0.0
    %156 = vmatpush.msra.mxu0 0.0
    %157 = vmatpush.msra.mxu0 0.0
    %158 = vmatpush.msra.mxu0 0.0
    %159 = vmatpush.msra.mxu0 %v134
    %160 = vmatpush.msra.mxu0 %v84
    %161 = vmatmul.f32.gmra.mxu0 %v128
    %v162 = vpop.f32.mrf.mxu0
    %v163 = vadd.f32 0.0, %v162
    %164 = vmatmul.f32.gmra.mxu0 %v131
    %v165 = vpop.f32.mrf.mxu0
    %v166 = vadd.f32 0.0, %v165
    %167 = vdwg.mxu0
    %168 = vmatpush.msra.mxu0 0.0
    %169 = vmatpush.msra.mxu0 0.0
    %170 = vmatpush.msra.mxu0 0.0
    %171 = vmatpush.msra.mxu0 0.0
    %172 = vmatpush.msra.mxu0 0.0
    %173 = vmatpush.msra.mxu0 0.0
    %174 = vmatpush.msra.mxu0 0.0
    %175 = vmatpush.msra.mxu0 0.0
    %176 = vmatpush.msra.mxu0 0.0
    %177 = vmatpush.msra.mxu0 0.0
    %178 = vmatpush.msra.mxu0 0.0
    %179 = vmatpush.msra.mxu0 0.0
    %180 = vmatpush.msra.mxu0 0.0
    %181 = vmatpush.msra.mxu0 0.0
    %182 = vmatpush.msra.mxu0 %v137
    %183 = vmatpush.msra.mxu0 %v98
    %184 = vmatmul.f32.gmra.mxu0 %v128
    %v185 = vpop.f32.mrf.mxu0
    %v186 = vadd.f32 0.0, %v185
    %187 = vmatmul.f32.gmra.mxu0 %v131
    %v188 = vpop.f32.mrf.mxu0
    %v189 = vadd.f32 0.0, %v188
    %190 = vdwg.mxu0
    %191 = vmatpush.msra.mxu0 0.0
    %192 = vmatpush.msra.mxu0 0.0
    %193 = vmatpush.msra.mxu0 0.0
    %194 = vmatpush.msra.mxu0 0.0
    %195 = vmatpush.msra.mxu0 0.0
    %196 = vmatpush.msra.mxu0 0.0
    %197 = vmatpush.msra.mxu0 0.0
    %198 = vmatpush.msra.mxu0 0.0
    %199 = vmatpush.msra.mxu0 0.0
    %200 = vmatpush.msra.mxu0 0.0
    %201 = vmatpush.msra.mxu0 0.0
    %202 = vmatpush.msra.mxu0 0.0
    %203 = vmatpush.msra.mxu0 0.0
    %204 = vmatpush.msra.mxu0 0.0
    %205 = vmatpush.msra.mxu0 %v140
    %206 = vmatpush.msra.mxu0 %v112
    %207 = vmatmul.f32.gmra.mxu0 %v128
    %v208 = vpop.f32.mrf.mxu0
    %v209 = vadd.f32 0.0, %v208
    %210 = vmatmul.f32.gmra.mxu0 %v131
    %v211 = vpop.f32.mrf.mxu0
    %v212 = vadd.f32 0.0, %v211
    %213 = vdwg.mxu0
    %214 = vmatpush.msra.mxu0 0.0
    %215 = vmatpush.msra.mxu0 0.0
    %216 = vmatpush.msra.mxu0 0.0
    %217 = vmatpush.msra.mxu0 0.0
    %218 = vmatpush.msra.mxu0 0.0
    %219 = vmatpush.msra.mxu0 0.0
    %220 = vmatpush.msra.mxu0 0.0
    %221 = vmatpush.msra.mxu0 0.0
    %222 = vmatpush.msra.mxu0 0.0
    %223 = vmatpush.msra.mxu0 0.0
    %224 = vmatpush.msra.mxu0 0.0
    %225 = vmatpush.msra.mxu0 0.0
    %226 = vmatpush.msra.mxu0 0.0
    %227 = vmatpush.msra.mxu0 0.0
    %228 = vmatpush.msra.mxu0 %v143
    %229 = vmatpush.msra.mxu0 %v124
    %230 = vmatmul.f32.gmra.mxu0 %v128
    %v231 = vpop.f32.mrf.mxu0
    %v232 = vadd.f32 0.0, %v231
    %233 = vmatmul.f32.gmra.mxu0 %v131
    %v234 = vpop.f32.mrf.mxu0
    %v235 = vadd.f32 0.0, %v234
    %236 = vdwg.mxu0
    %v237 = vmax.f32 %v163, %v186
    %v238 = vmax.f32 %v166, %v189
    %v239 = vmax.f32 %v209, %v232
    %v240 = vmax.f32 %v212, %v235
    %v241 = vmax.f32 %v237, %v239
    %v242 = vmax.f32 %v238, %v240
    %244 = vset.pattern.permute.xlu0 0
    %245 = vperm.xlu0 %244, %v47
    %v246 = vpop.permute.xlu0 %245
    %249 = vset.pattern.permute.xlu0 0
    %250 = vperm.xlu0 %249, %v48
    %v251 = vpop.permute.xlu0 %250
    %v253 = vadd.f32 %v241, %v246
    %v254 = vadd.f32 %v242, %v251
    %v255 = vmax.f32 %v253, 0.0
    %v256 = vmax.f32 %v254, 0.0
    %v257 = vmul.f32 %v255, %v44
    %v258 = vmul.f32 %v256, %v44
    %261 = vrot.lane.b32.xlu0 %v257, 17
    %v262 = vpop.permute.xlu0 %261
    %263 = vrot.lane.b32.xlu0 %v258, 17
    %v264 = vpop.permute.xlu0 %263
    %vm267 = vcmask 138240
    %v268 = vsel %vm267, 0.0, %v262
    %v269 = vsel %vm267, 0.0, %v264
    %vm270 = vcmask 1039360
    %v271 = vsel %vm270, %v268, 0.0
    %v272 = vsel %vm270, %v269, 0.0
    %v273 = vrot.slane %v65, 6
    %274 = vrot.lane.b32.xlu0 %v273, 127
    %v275 = vpop.permute.xlu0 %274
    %v277 = vrot.slane %v65, 3
    %v279 = vrot.slane %v65, 7
    %280 = vrot.lane.b32.xlu0 %v279, 127
    %v281 = vpop.permute.xlu0 %280
    %v283 = vrot.slane %v66, 4
    %285 = vrot.lane.b32.xlu0 %v66, 127
    %v286 = vpop.permute.xlu0 %285
    %v288 = vsel %vm91, %v86, %v275
    %v289 = vsel %vm73, %v288, %v277
    %v290 = vsel %vm75, %v289, %v277
    %v291 = vsel %vm77, %v290, %v281
    %v292 = vsel %vm79, %v291, %v283
    %v293 = vsel %vm81, %v292, %v283
    %v294 = vsel %vm83, %v293, 0.0
    %v295 = vsel %vm83, %v286, 0.0
    %296 = vrot.lane.b32.xlu0 %v65, 127
    %v297 = vpop.permute.xlu0 %296
    %v299 = vrot.slane %v66, 1
    %300 = vrot.lane.b32.xlu0 %v299, 127
    %v301 = vpop.permute.xlu0 %300
    %v303 = vsel %vm90, %v277, %v281
    %v304 = vsel %vm91, %v303, %v281
    %v305 = vsel %vm73, %v304, %v100
    %v306 = vsel %vm75, %v305, %v297
    %v307 = vsel %vm77, %v306, %v297
    %v308 = vsel %vm79, %v307, %v102
    %v309 = vsel %vm81, %v308, %v301
    %v310 = vsel %vm83, %v309, 0.0
    %v311 = vsel %vm83, %v301, 0.0
    %313 = vrot.lane.b32.xlu0 %v86, 127
    %v314 = vpop.permute.xlu0 %313
    %316 = vrot.lane.b32.xlu0 %v88, 127
    %v317 = vpop.permute.xlu0 %316
    %319 = vrot.lane.b32.xlu0 %v283, 127
    %v320 = vpop.permute.xlu0 %319
    %v322 = vsel %vm91, %v273, %v314
    %v323 = vsel %vm73, %v322, %v116
    %v324 = vsel %vm75, %v323, %v116
    %v325 = vsel %vm77, %v324, %v317
    %v326 = vsel %vm79, %v325, %v66
    %v327 = vsel %vm81, %v326, %v66
    %v328 = vsel %vm83, %v327, 0.0
    %v329 = vsel %vm83, %v320, 0.0
    %331 = vrot.lane.b32.xlu0 %v277, 127
    %v332 = vpop.permute.xlu0 %331
    %335 = vrot.lane.b32.xlu0 %v102, 127
    %v336 = vpop.permute.xlu0 %335
    %v338 = vsel %vm90, %v279, %v332
    %v339 = vsel %vm91, %v338, %v332
    %v340 = vsel %vm73, %v339, %v66
    %v341 = vsel %vm75, %v340, %v320
    %v342 = vsel %vm77, %v341, %v320
    %v343 = vsel %vm79, %v342, %v299
    %v344 = vsel %vm81, %v343, %v336
    %v345 = vsel %vm83, %v344, 0.0
    %v346 = vsel %vm83, %v336, 0.0
    %v348 = vsel %vm90, %v295, 0
    %v351 = vsel %vm90, %v311, 0
    %v354 = vsel %vm90, %v329, 0
    %v357 = vsel %vm90, %v346, 0
    %359 = vmatpush.msra.mxu0 0.0
    %360 = vmatpush.msra.mxu0 0.0
    %361 = vmatpush.msra.mxu0 0.0
    %362 = vmatpush.msra.mxu0 0.0
    %363 = vmatpush.msra.mxu0 0.0
    %364 = vmatpush.msra.mxu0 0.0
    %365 = vmatpush.msra.mxu0 0.0
    %366 = vmatpush.msra.mxu0 0.0
    %367 = vmatpush.msra.mxu0 0.0
    %368 = vmatpush.msra.mxu0 0.0
    %369 = vmatpush.msra.mxu0 0.0
    %370 = vmatpush.msra.mxu0 0.0
    %371 = vmatpush.msra.mxu0 0.0
    %372 = vmatpush.msra.mxu0 0.0
    %373 = vmatpush.msra.mxu0 %v348
    %374 = vmatpush.msra.mxu0 %v294
    %375 = vmatmul.f32.gmra.mxu0 %v128
    %v376 = vpop.f32.mrf.mxu0
    %v377 = vadd.f32 0.0, %v376
    %378 = vmatmul.f32.gmra.mxu0 %v131
    %v379 = vpop.f32.mrf.mxu0
    %v380 = vadd.f32 0.0, %v379
    %381 = vdwg.mxu0
    %382 = vmatpush.msra.mxu0 0.0
    %383 = vmatpush.msra.mxu0 0.0
    %384 = vmatpush.msra.mxu0 0.0
    %385 = vmatpush.msra.mxu0 0.0
    %386 = vmatpush.msra.mxu0 0.0
    %387 = vmatpush.msra.mxu0 0.0
    %388 = vmatpush.msra.mxu0 0.0
    %389 = vmatpush.msra.mxu0 0.0
    %390 = vmatpush.msra.mxu0 0.0
    %391 = vmatpush.msra.mxu0 0.0
    %392 = vmatpush.msra.mxu0 0.0
    %393 = vmatpush.msra.mxu0 0.0
    %394 = vmatpush.msra.mxu0 0.0
    %395 = vmatpush.msra.mxu0 0.0
    %396 = vmatpush.msra.mxu0 %v351
    %397 = vmatpush.msra.mxu0 %v310
    %398 = vmatmul.f32.gmra.mxu0 %v128
    %v399 = vpop.f32.mrf.mxu0
    %v400 = vadd.f32 0.0, %v399
    %401 = vmatmul.f32.gmra.mxu0 %v131
    %v402 = vpop.f32.mrf.mxu0
    %v403 = vadd.f32 0.0, %v402
    %404 = vdwg.mxu0
    %405 = vmatpush.msra.mxu0 0.0
    %406 = vmatpush.msra.mxu0 0.0
    %407 = vmatpush.msra.mxu0 0.0
    %408 = vmatpush.msra.mxu0 0.0
    %409 = vmatpush.msra.mxu0 0.0
    %410 = vmatpush.msra.mxu0 0.0
    %411 = vmatpush.msra.mxu0 0.0
    %412 = vmatpush.msra.mxu0 0.0
    %413 = vmatpush.msra.mxu0 0.0
    %414 = vmatpush.msra.mxu0 0.0
    %415 = vmatpush.msra.mxu0 0.0
    %416 = vmatpush.msra.mxu0 0.0
    %417 = vmatpush.msra.mxu0 0.0
    %418 = vmatpush.msra.mxu0 0.0
    %419 = vmatpush.msra.mxu0 %v354
    %420 = vmatpush.msra.mxu0 %v328
    %421 = vmatmul.f32.gmra.mxu0 %v128
    %v422 = vpop.f32.mrf.mxu0
    %v423 = vadd.f32 0.0, %v422
    %424 = vmatmul.f32.gmra.mxu0 %v131
    %v425 = vpop.f32.mrf.mxu0
    %v426 = vadd.f32 0.0, %v425
    %427 = vdwg.mxu0
    %428 = vmatpush.msra.mxu0 0.0
    %429 = vmatpush.msra.mxu0 0.0
    %430 = vmatpush.msra.mxu0 0.0
    %431 = vmatpush.msra.mxu0 0.0
    %432 = vmatpush.msra.mxu0 0.0
    %433 = vmatpush.msra.mxu0 0.0
    %434 = vmatpush.msra.mxu0 0.0
    %435 = vmatpush.msra.mxu0 0.0
    %436 = vmatpush.msra.mxu0 0.0
    %437 = vmatpush.msra.mxu0 0.0
    %438 = vmatpush.msra.mxu0 0.0
    %439 = vmatpush.msra.mxu0 0.0
    %440 = vmatpush.msra.mxu0 0.0
    %441 = vmatpush.msra.mxu0 0.0
    %442 = vmatpush.msra.mxu0 %v357
    %443 = vmatpush.msra.mxu0 %v345
    %444 = vmatmul.f32.gmra.mxu0 %v128
    %v445 = vpop.f32.mrf.mxu0
    %v446 = vadd.f32 0.0, %v445
    %447 = vmatmul.f32.gmra.mxu0 %v131
    %v448 = vpop.f32.mrf.mxu0
    %v449 = vadd.f32 0.0, %v448
    %450 = vdwg.mxu0
    %v451 = vmax.f32 %v377, %v400
    %v452 = vmax.f32 %v380, %v403
    %v453 = vmax.f32 %v423, %v446
    %v454 = vmax.f32 %v426, %v449
    %v455 = vmax.f32 %v451, %v453
    %v456 = vmax.f32 %v452, %v454
    %v457 = vadd.f32 %v455, %v246
    %v458 = vadd.f32 %v456, %v251
    %v459 = vmax.f32 %v457, 0.0
    %v460 = vmax.f32 %v458, 0.0
    %v461 = vmul.f32 %v459, %v44
    %v462 = vmul.f32 %v460, %v44
    %465 = vrot.lane.b32.xlu0 %v461, 17
    %v466 = vpop.permute.xlu0 %465
    %467 = vrot.lane.b32.xlu0 %v462, 17
    %v468 = vpop.permute.xlu0 %467
    %v471 = vsel %vm267, 0.0, %v466
    %v472 = vsel %vm267, 0.0, %v468
    %v473 = vsel %vm270, %v471, 0.0
    %v474 = vsel %vm270, %v472, 0.0
    %475 = vrot.lane.b32.xlu0 %v86, 112
    %v476 = vpop.permute.xlu0 %475
    %v478 = vsel %vm73, %v66, %v299
    %v479 = vsel %vm75, %v478, %v299
    %v480 = vsel %vm77, %v479, %v299
    %v481 = vsel %vm79, %v480, %v476
    %v482 = vsel %vm81, %v481, %v476
    %v483 = vsel %vm83, %v482, 0.0
    %v484 = vsel %vm83, %v476, 0.0
    %485 = vrot.lane.b32.xlu0 %v277, 112
    %v486 = vpop.permute.xlu0 %485
    %v488 = vsel %vm91, %v299, %v299
    %v489 = vsel %vm73, %v488, %v71
    %v490 = vsel %vm75, %v489, %v71
    %v491 = vsel %vm77, %v490, %v71
    %v492 = vsel %vm79, %v491, %v486
    %v493 = vsel %vm81, %v492, %v486
    %v494 = vsel %vm83, %v493, 0.0
    %v495 = vsel %vm83, %v486, 0.0
    %496 = vrot.lane.b32.xlu0 %v114, 112
    %v497 = vpop.permute.xlu0 %496
    %499 = vrot.lane.b32.xlu0 %v273, 112
    %v500 = vpop.permute.xlu0 %499
    %v502 = vsel %vm91, %v283, %v283
    %v503 = vsel %vm73, %v502, %v497
    %v504 = vsel %vm75, %v503, %v497
    %v505 = vsel %vm77, %v504, %v497
    %v506 = vsel %vm79, %v505, %v500
    %v507 = vsel %vm81, %v506, %v500
    %v508 = vsel %vm83, %v507, 0.0
    %v509 = vsel %vm83, %v500, 0.0
    %510 = vrot.lane.b32.xlu0 %v279, 112
    %v511 = vpop.permute.xlu0 %510
    %v513 = vsel %vm91, %v102, %v102
    %v514 = vsel %vm73, %v513, %v500
    %v515 = vsel %vm75, %v514, %v500
    %v516 = vsel %vm77, %v515, %v500
    %v517 = vsel %vm79, %v516, %v511
    %v518 = vsel %vm81, %v517, %v511
    %v519 = vsel %vm83, %v518, 0.0
    %v520 = vsel %vm83, %v511, 0.0
    %v522 = vsel %vm90, %v484, 0
    %v525 = vsel %vm90, %v495, 0
    %v528 = vsel %vm90, %v509, 0
    %v531 = vsel %vm90, %v520, 0
    %533 = vmatpush.msra.mxu0 0.0
    %534 = vmatpush.msra.mxu0 0.0
    %535 = vmatpush.msra.mxu0 0.0
    %536 = vmatpush.msra.mxu0 0.0
    %537 = vmatpush.msra.mxu0 0.0
    %538 = vmatpush.msra.mxu0 0.0
    %539 = vmatpush.msra.mxu0 0.0
    %540 = vmatpush.msra.mxu0 0.0
    %541 = vmatpush.msra.mxu0 0.0
    %542 = vmatpush.msra.mxu0 0.0
    %543 = vmatpush.msra.mxu0 0.0
    %544 = vmatpush.msra.mxu0 0.0
    %545 = vmatpush.msra.mxu0 0.0
    %546 = vmatpush.msra.mxu0 0.0
    %547 = vmatpush.msra.mxu0 %v522
    %548 = vmatpush.msra.mxu0 %v483
    %549 = vmatmul.f32.gmra.mxu0 %v128
    %v550 = vpop.f32.mrf.mxu0
    %v551 = vadd.f32 0.0, %v550
    %552 = vmatmul.f32.gmra.mxu0 %v131
    %v553 = vpop.f32.mrf.mxu0
    %v554 = vadd.f32 0.0, %v553
    %555 = vdwg.mxu0
    %556 = vmatpush.msra.mxu0 0.0
    %557 = vmatpush.msra.mxu0 0.0
    %558 = vmatpush.msra.mxu0 0.0
    %559 = vmatpush.msra.mxu0 0.0
    %560 = vmatpush.msra.mxu0 0.0
    %561 = vmatpush.msra.mxu0 0.0
    %562 = vmatpush.msra.mxu0 0.0
    %563 = vmatpush.msra.mxu0 0.0
    %564 = vmatpush.msra.mxu0 0.0
    %565 = vmatpush.msra.mxu0 0.0
    %566 = vmatpush.msra.mxu0 0.0
    %567 = vmatpush.msra.mxu0 0.0
    %568 = vmatpush.msra.mxu0 0.0
    %569 = vmatpush.msra.mxu0 0.0
    %570 = vmatpush.msra.mxu0 %v525
    %571 = vmatpush.msra.mxu0 %v494
    %572 = vmatmul.f32.gmra.mxu0 %v128
    %v573 = vpop.f32.mrf.mxu0
    %v574 = vadd.f32 0.0, %v573
    %575 = vmatmul.f32.gmra.mxu0 %v131
    %v576 = vpop.f32.mrf.mxu0
    %v577 = vadd.f32 0.0, %v576
    %578 = vdwg.mxu0
    %579 = vmatpush.msra.mxu0 0.0
    %580 = vmatpush.msra.mxu0 0.0
    %581 = vmatpush.msra.mxu0 0.0
    %582 = vmatpush.msra.mxu0 0.0
    %583 = vmatpush.msra.mxu0 0.0
    %584 = vmatpush.msra.mxu0 0.0
    %585 = vmatpush.msra.mxu0 0.0
    %586 = vmatpush.msra.mxu0 0.0
    %587 = vmatpush.msra.mxu0 0.0
    %588 = vmatpush.msra.mxu0 0.0
    %589 = vmatpush.msra.mxu0 0.0
    %590 = vmatpush.msra.mxu0 0.0
    %591 = vmatpush.msra.mxu0 0.0
    %592 = vmatpush.msra.mxu0 0.0
    %593 = vmatpush.msra.mxu0 %v528
    %594 = vmatpush.msra.mxu0 %v508
    %595 = vmatmul.f32.gmra.mxu0 %v128
    %v596 = vpop.f32.mrf.mxu0
    %v597 = vadd.f32 0.0, %v596
    %598 = vmatmul.f32.gmra.mxu0 %v131
    %v599 = vpop.f32.mrf.mxu0
    %v600 = vadd.f32 0.0, %v599
    %601 = vdwg.mxu0
    %602 = vmatpush.msra.mxu0 0.0
    %603 = vmatpush.msra.mxu0 0.0
    %604 = vmatpush.msra.mxu0 0.0
    %605 = vmatpush.msra.mxu0 0.0
    %606 = vmatpush.msra.mxu0 0.0
    %607 = vmatpush.msra.mxu0 0.0
    %608 = vmatpush.msra.mxu0 0.0
    %609 = vmatpush.msra.mxu0 0.0
    %610 = vmatpush.msra.mxu0 0.0
    %611 = vmatpush.msra.mxu0 0.0
    %612 = vmatpush.msra.mxu0 0.0
    %613 = vmatpush.msra.mxu0 0.0
    %614 = vmatpush.msra.mxu0 0.0
    %615 = vmatpush.msra.mxu0 0.0
    %616 = vmatpush.msra.mxu0 %v531
    %617 = vmatpush.msra.mxu0 %v519
    %618 = vmatmul.f32.gmra.mxu0 %v128
    %v619 = vpop.f32.mrf.mxu0
    %v620 = vadd.f32 0.0, %v619
    %621 = vmatmul.f32.gmra.mxu0 %v131
    %v622 = vpop.f32.mrf.mxu0
    %v623 = vadd.f32 0.0, %v622
    %624 = vdwg.mxu0
    %v625 = vmax.f32 %v551, %v574
    %v626 = vmax.f32 %v554, %v577
    %v627 = vmax.f32 %v597, %v620
    %v628 = vmax.f32 %v600, %v623
    %v629 = vmax.f32 %v625, %v627
    %v630 = vmax.f32 %v626, %v628
    %v631 = vadd.f32 %v629, %v246
    %v632 = vadd.f32 %v630, %v251
    %v633 = vmax.f32 %v631, 0.0
    %v634 = vmax.f32 %v632, 0.0
    %v635 = vmul.f32 %v633, %v44
    %v636 = vmul.f32 %v634, %v44
    %639 = vrot.lane.b32.xlu0 %v635, 17
    %v640 = vpop.permute.xlu0 %639
    %641 = vrot.lane.b32.xlu0 %v636, 17
    %v642 = vpop.permute.xlu0 %641
    %v645 = vsel %vm267, 0.0, %v640
    %v646 = vsel %vm267, 0.0, %v642
    %v647 = vsel %vm270, %v645, 0.0
    %v648 = vsel %vm270, %v646, 0.0
    %649 = vrot.lane.b32.xlu0 %v104, 127
    %v650 = vpop.permute.xlu0 %649
    %652 = vrot.lane.b32.xlu0 %v116, 127
    %v653 = vpop.permute.xlu0 %652
    %655 = vrot.lane.b32.xlu0 %v100, 112
    %v656 = vpop.permute.xlu0 %655
    %658 = vrot.lane.b32.xlu0 %v65, 111
    %v659 = vpop.permute.xlu0 %658
    %v661 = vsel %vm91, %v71, %v650
    %v662 = vsel %vm73, %v661, %v88
    %v663 = vsel %vm75, %v662, %v88
    %v664 = vsel %vm77, %v663, %v653
    %v665 = vsel %vm79, %v664, %v656
    %v666 = vsel %vm81, %v665, %v656
    %v667 = vsel %vm83, %v666, 0.0
    %v668 = vsel %vm83, %v659, 0.0
    %669 = vrot.lane.b32.xlu0 %v68, 111
    %v670 = vpop.permute.xlu0 %669
    %v672 = vsel %vm90, %v88, %v653
    %v673 = vsel %vm91, %v672, %v653
    %v674 = vsel %vm73, %v673, %v283
    %v675 = vsel %vm75, %v674, %v286
    %v676 = vsel %vm77, %v675, %v286
    %v677 = vsel %vm79, %v676, %v497
    %v678 = vsel %vm81, %v677, %v670
    %v679 = vsel %vm83, %v678, 0.0
    %v680 = vsel %vm83, %v670, 0.0
    %681 = vrot.lane.b32.xlu0 %v71, 127
    %v682 = vpop.permute.xlu0 %681
    %684 = vrot.lane.b32.xlu0 %v277, 111
    %v685 = vpop.permute.xlu0 %684
    %687 = vrot.lane.b32.xlu0 %v65, 112
    %v688 = vpop.permute.xlu0 %687
    %690 = vrot.lane.b32.xlu0 %v100, 111
    %v691 = vpop.permute.xlu0 %690
    %v693 = vsel %vm91, %v104, %v682
    %v694 = vsel %vm73, %v693, %v511
    %v695 = vsel %vm75, %v694, %v511
    %v696 = vsel %vm77, %v695, %v685
    %v697 = vsel %vm79, %v696, %v688
    %v698 = vsel %vm81, %v697, %v688
    %v699 = vsel %vm83, %v698, 0.0
    %v700 = vsel %vm83, %v691, 0.0
    %701 = vrot.lane.b32.xlu0 %v68, 112
    %v702 = vpop.permute.xlu0 %701
    %704 = vrot.lane.b32.xlu0 %v114, 111
    %v705 = vpop.permute.xlu0 %704
    %v707 = vsel %vm90, %v116, %v317
    %v708 = vsel %vm91, %v707, %v317
    %v709 = vsel %vm73, %v708, %v688
    %v710 = vsel %vm75, %v709, %v691
    %v711 = vsel %vm77, %v710, %v691
    %v712 = vsel %vm79, %v711, %v702
    %v713 = vsel %vm81, %v712, %v705
    %v714 = vsel %vm83, %v713, 0.0
    %v715 = vsel %vm83, %v705, 0.0
    %v717 = vsel %vm90, %v668, 0
    %v720 = vsel %vm90, %v680, 0
    %v723 = vsel %vm90, %v700, 0
    %v726 = vsel %vm90, %v715, 0
    %728 = vmatpush.msra.mxu0 0.0
    %729 = vmatpush.msra.mxu0 0.0
    %730 = vmatpush.msra.mxu0 0.0
    %731 = vmatpush.msra.mxu0 0.0
    %732 = vmatpush.msra.mxu0 0.0
    %733 = vmatpush.msra.mxu0 0.0
    %734 = vmatpush.msra.mxu0 0.0
    %735 = vmatpush.msra.mxu0 0.0
    %736 = vmatpush.msra.mxu0 0.0
    %737 = vmatpush.msra.mxu0 0.0
    %738 = vmatpush.msra.mxu0 0.0
    %739 = vmatpush.msra.mxu0 0.0
    %740 = vmatpush.msra.mxu0 0.0
    %741 = vmatpush.msra.mxu0 0.0
    %742 = vmatpush.msra.mxu0 %v717
    %743 = vmatpush.msra.mxu0 %v667
    %744 = vmatmul.f32.gmra.mxu0 %v128
    %v745 = vpop.f32.mrf.mxu0
    %v746 = vadd.f32 0.0, %v745
    %747 = vmatmul.f32.gmra.mxu0 %v131
    %v748 = vpop.f32.mrf.mxu0
    %v749 = vadd.f32 0.0, %v748
    %750 = vdwg.mxu0
    %751 = vmatpush.msra.mxu0 0.0
    %752 = vmatpush.msra.mxu0 0.0
    %753 = vmatpush.msra.mxu0 0.0
    %754 = vmatpush.msra.mxu0 0.0
    %755 = vmatpush.msra.mxu0 0.0
    %756 = vmatpush.msra.mxu0 0.0
    %757 = vmatpush.msra.mxu0 0.0
    %758 = vmatpush.msra.mxu0 0.0
    %759 = vmatpush.msra.mxu0 0.0
    %760 = vmatpush.msra.mxu0 0.0
    %761 = vmatpush.msra.mxu0 0.0
    %762 = vmatpush.msra.mxu0 0.0
    %763 = vmatpush.msra.mxu0 0.0
    %764 = vmatpush.msra.mxu0 0.0
    %765 = vmatpush.msra.mxu0 %v720
    %766 = vmatpush.msra.mxu0 %v679
    %767 = vmatmul.f32.gmra.mxu0 %v128
    %v768 = vpop.f32.mrf.mxu0
    %v769 = vadd.f32 0.0, %v768
    %770 = vmatmul.f32.gmra.mxu0 %v131
    %v771 = vpop.f32.mrf.mxu0
    %v772 = vadd.f32 0.0, %v771
    %773 = vdwg.mxu0
    %774 = vmatpush.msra.mxu0 0.0
    %775 = vmatpush.msra.mxu0 0.0
    %776 = vmatpush.msra.mxu0 0.0
    %777 = vmatpush.msra.mxu0 0.0
    %778 = vmatpush.msra.mxu0 0.0
    %779 = vmatpush.msra.mxu0 0.0
    %780 = vmatpush.msra.mxu0 0.0
    %781 = vmatpush.msra.mxu0 0.0
    %782 = vmatpush.msra.mxu0 0.0
    %783 = vmatpush.msra.mxu0 0.0
    %784 = vmatpush.msra.mxu0 0.0
    %785 = vmatpush.msra.mxu0 0.0
    %786 = vmatpush.msra.mxu0 0.0
    %787 = vmatpush.msra.mxu0 0.0
    %788 = vmatpush.msra.mxu0 %v723
    %789 = vmatpush.msra.mxu0 %v699
    %790 = vmatmul.f32.gmra.mxu0 %v128
    %v791 = vpop.f32.mrf.mxu0
    %v792 = vadd.f32 0.0, %v791
    %793 = vmatmul.f32.gmra.mxu0 %v131
    %v794 = vpop.f32.mrf.mxu0
    %v795 = vadd.f32 0.0, %v794
    %796 = vdwg.mxu0
    %797 = vmatpush.msra.mxu0 0.0
    %798 = vmatpush.msra.mxu0 0.0
    %799 = vmatpush.msra.mxu0 0.0
    %800 = vmatpush.msra.mxu0 0.0
    %801 = vmatpush.msra.mxu0 0.0
    %802 = vmatpush.msra.mxu0 0.0
    %803 = vmatpush.msra.mxu0 0.0
    %804 = vmatpush.msra.mxu0 0.0
    %805 = vmatpush.msra.mxu0 0.0
    %806 = vmatpush.msra.mxu0 0.0
    %807 = vmatpush.msra.mxu0 0.0
    %808 = vmatpush.msra.mxu0 0.0
    %809 = vmatpush.msra.mxu0 0.0
    %810 = vmatpush.msra.mxu0 0.0
    %811 = vmatpush.msra.mxu0 %v726
    %812 = vmatpush.msra.mxu0 %v714
    %813 = vmatmul.f32.gmra.mxu0 %v128
    %v814 = vpop.f32.mrf.mxu0
    %v815 = vadd.f32 0.0, %v814
    %816 = vmatmul.f32.gmra.mxu0 %v131
    %v817 = vpop.f32.mrf.mxu0
    %v818 = vadd.f32 0.0, %v817
    %819 = vdwg.mxu0
    %v820 = vmax.f32 %v746, %v769
    %v821 = vmax.f32 %v749, %v772
    %v822 = vmax.f32 %v792, %v815
    %v823 = vmax.f32 %v795, %v818
    %v824 = vmax.f32 %v820, %v822
    %v825 = vmax.f32 %v821, %v823
    %v826 = vadd.f32 %v824, %v246
    %v827 = vadd.f32 %v825, %v251
    %v828 = vmax.f32 %v826, 0.0
    %v829 = vmax.f32 %v827, 0.0
    %v830 = vmul.f32 %v828, %v44
    %v831 = vmul.f32 %v829, %v44
    %834 = vrot.lane.b32.xlu0 %v830, 17
    %v835 = vpop.permute.xlu0 %834
    %836 = vrot.lane.b32.xlu0 %v831, 17
    %v837 = vpop.permute.xlu0 %836
    %v840 = vsel %vm267, 0.0, %v835
    %v841 = vsel %vm267, 0.0, %v837
    %v842 = vsel %vm270, %v840, 0.0
    %v843 = vsel %vm270, %v841, 0.0
    %846 = vrot.lane.b32.xlu0 %v647, 127
    %v847 = vpop.permute.xlu0 %846
    %848 = vrot.lane.b32.xlu0 %v648, 127
    %v849 = vpop.permute.xlu0 %848
    %854 = vrot.lane.b32.xlu0 %v842, 127
    %v855 = vpop.permute.xlu0 %854
    %856 = vrot.lane.b32.xlu0 %v843, 127
    %v857 = vpop.permute.xlu0 %856
    %862 = vrot.lane.b32.xlu0 %v473, 112
    %v863 = vpop.permute.xlu0 %862
    %864 = vrot.lane.b32.xlu0 %v474, 112
    %v865 = vpop.permute.xlu0 %864
    %870 = vrot.lane.b32.xlu0 %v271, 111
    %v871 = vpop.permute.xlu0 %870
    %872 = vrot.lane.b32.xlu0 %v272, 111
    %v873 = vpop.permute.xlu0 %872
    %876 = vrot.lane.b32.xlu0 %v473, 111
    %v877 = vpop.permute.xlu0 %876
    %878 = vrot.lane.b32.xlu0 %v474, 111
    %v879 = vpop.permute.xlu0 %878
    %882 = vrot.lane.b32.xlu0 %v842, 112
    %v883 = vpop.permute.xlu0 %882
    %884 = vrot.lane.b32.xlu0 %v843, 112
    %v885 = vpop.permute.xlu0 %884
    %888 = vrot.lane.b32.xlu0 %v647, 111
    %v889 = vpop.permute.xlu0 %888
    %890 = vrot.lane.b32.xlu0 %v648, 111
    %v891 = vpop.permute.xlu0 %890
    %894 = vrot.lane.b32.xlu0 %v842, 111
    %v895 = vpop.permute.xlu0 %894
    %896 = vrot.lane.b32.xlu0 %v843, 111
    %v897 = vpop.permute.xlu0 %896
    %v900 = vsel %vm83, %v842, 0.0
    %v901 = vsel %vm83, %v843, 0.0
    %v902 = vsel %vm83, %v847, 0.0
    %v903 = vsel %vm83, %v849, 0.0
    %v904 = vsel %vm83, %v855, 0.0
    %v905 = vsel %vm83, %v857, 0.0
    %v906 = vsel %vm83, %v863, 0.0
    %v907 = vsel %vm83, %v865, 0.0
    %v908 = vsel %vm83, %v871, 0.0
    %v909 = vsel %vm83, %v873, 0.0
    %v910 = vsel %vm83, %v877, 0.0
    %v911 = vsel %vm83, %v879, 0.0
    %v912 = vsel %vm83, %v883, 0.0
    %v913 = vsel %vm83, %v885, 0.0
    %v914 = vsel %vm83, %v889, 0.0
    %v915 = vsel %vm83, %v891, 0.0
    %v916 = vsel %vm83, %v895, 0.0
    %v917 = vsel %vm83, %v897, 0.0
    %918 = vrot.lane.b32.xlu0 %v271, 112
    %v919 = vpop.permute.xlu0 %918
    %920 = vrot.lane.b32.xlu0 %v272, 112
    %v921 = vpop.permute.xlu0 %920
    %922 = vrot.lane.b32.xlu0 %v647, 112
    %v923 = vpop.permute.xlu0 %922
    %924 = vrot.lane.b32.xlu0 %v648, 112
    %v925 = vpop.permute.xlu0 %924
    %926 = vrot.lane.b32.xlu0 %v847, 127
    %v927 = vpop.permute.xlu0 %926
    %928 = vrot.lane.b32.xlu0 %v849, 127
    %v929 = vpop.permute.xlu0 %928
    %930 = vrot.lane.b32.xlu0 %v919, 127
    %v931 = vpop.permute.xlu0 %930
    %932 = vrot.lane.b32.xlu0 %v921, 127
    %v933 = vpop.permute.xlu0 %932
    %934 = vrot.lane.b32.xlu0 %v863, 127
    %v935 = vpop.permute.xlu0 %934
    %936 = vrot.lane.b32.xlu0 %v865, 127
    %v937 = vpop.permute.xlu0 %936
    %938 = vrot.lane.b32.xlu0 %v871, 127
    %v939 = vpop.permute.xlu0 %938
    %940 = vrot.lane.b32.xlu0 %v873, 127
    %v941 = vpop.permute.xlu0 %940
    %942 = vrot.lane.b32.xlu0 %v923, 127
    %v943 = vpop.permute.xlu0 %942
    %944 = vrot.lane.b32.xlu0 %v925, 127
    %v945 = vpop.permute.xlu0 %944
    %946 = vrot.lane.b32.xlu0 %v883, 127
    %v947 = vpop.permute.xlu0 %946
    %948 = vrot.lane.b32.xlu0 %v885, 127
    %v949 = vpop.permute.xlu0 %948
    %950 = vrot.lane.b32.xlu0 %v889, 127
    %v951 = vpop.permute.xlu0 %950
    %952 = vrot.lane.b32.xlu0 %v891, 127
    %v953 = vpop.permute.xlu0 %952
    %v968 = vsel %vm83, %v927, 0.0
    %v969 = vsel %vm83, %v929, 0.0
    %v970 = vsel %vm83, %v931, 0.0
    %v971 = vsel %vm83, %v933, 0.0
    %v972 = vsel %vm83, %v935, 0.0
    %v973 = vsel %vm83, %v937, 0.0
    %v974 = vsel %vm83, %v939, 0.0
    %v975 = vsel %vm83, %v941, 0.0
    %v976 = vsel %vm83, %v943, 0.0
    %v977 = vsel %vm83, %v945, 0.0
    %v978 = vsel %vm83, %v947, 0.0
    %v979 = vsel %vm83, %v949, 0.0
    %v980 = vsel %vm83, %v951, 0.0
    %v981 = vsel %vm83, %v953, 0.0
    %982 = vrot.lane.b32.xlu0 %v271, 127
    %v983 = vpop.permute.xlu0 %982
    %984 = vrot.lane.b32.xlu0 %v272, 127
    %v985 = vpop.permute.xlu0 %984
    %986 = vrot.lane.b32.xlu0 %v473, 127
    %v987 = vpop.permute.xlu0 %986
    %988 = vrot.lane.b32.xlu0 %v474, 127
    %v989 = vpop.permute.xlu0 %988
    %991 = vrot.lane.b32.xlu0 0.0, 112
    %v992 = vpop.permute.xlu0 %991
    %vm993 = vcmask 916480
    %v994 = vsel %vm993, %v863, %v992
    %v995 = vsel %vm993, %v865, %v992
    %996 = vrot.lane.b32.xlu0 0.0, 111
    %v997 = vpop.permute.xlu0 %996
    %vm998 = vcmask 908288
    %v999 = vsel %vm998, %v871, %v997
    %v1000 = vsel %vm998, %v873, %v997
    %v1001 = vsel %vm998, %v877, %v997
    %v1002 = vsel %vm998, %v879, %v997
    %1003 = vrot.lane.b32.xlu0 %v983, 112
    %v1004 = vpop.permute.xlu0 %1003
    %1005 = vrot.lane.b32.xlu0 %v985, 112
    %v1006 = vpop.permute.xlu0 %1005
    %1007 = vrot.lane.b32.xlu0 %v987, 112
    %v1008 = vpop.permute.xlu0 %1007
    %1009 = vrot.lane.b32.xlu0 %v989, 112
    %v1010 = vpop.permute.xlu0 %1009
    %1011 = vrot.lane.b32.xlu0 %v847, 112
    %v1012 = vpop.permute.xlu0 %1011
    %1013 = vrot.lane.b32.xlu0 %v849, 112
    %v1014 = vpop.permute.xlu0 %1013
    %1015 = vrot.lane.b32.xlu0 %v855, 112
    %v1016 = vpop.permute.xlu0 %1015
    %1017 = vrot.lane.b32.xlu0 %v857, 112
    %v1018 = vpop.permute.xlu0 %1017
    %1019 = vrot.lane.b32.xlu0 %v994, 112
    %v1020 = vpop.permute.xlu0 %1019
    %1021 = vrot.lane.b32.xlu0 %v995, 112
    %v1022 = vpop.permute.xlu0 %1021
    %1023 = vrot.lane.b32.xlu0 %v999, 112
    %v1024 = vpop.permute.xlu0 %1023
    %1025 = vrot.lane.b32.xlu0 %v1000, 112
    %v1026 = vpop.permute.xlu0 %1025
    %1027 = vrot.lane.b32.xlu0 %v1001, 112
    %v1028 = vpop.permute.xlu0 %1027
    %1029 = vrot.lane.b32.xlu0 %v1002, 112
    %v1030 = vpop.permute.xlu0 %1029
    %v1045 = vsel %vm83, %v1004, 0.0
    %v1046 = vsel %vm83, %v1006, 0.0
    %v1047 = vsel %vm83, %v1008, 0.0
    %v1048 = vsel %vm83, %v1010, 0.0
    %v1049 = vsel %vm83, %v1012, 0.0
    %v1050 = vsel %vm83, %v1014, 0.0
    %v1051 = vsel %vm83, %v1016, 0.0
    %v1052 = vsel %vm83, %v1018, 0.0
    %v1053 = vsel %vm83, %v1020, 0.0
    %v1054 = vsel %vm83, %v1022, 0.0
    %v1055 = vsel %vm83, %v1024, 0.0
    %v1056 = vsel %vm83, %v1026, 0.0
    %v1057 = vsel %vm83, %v1028, 0.0
    %v1058 = vsel %vm83, %v1030, 0.0
    %v1059 = vsel %vm993, %v919, %v992
    %v1060 = vsel %vm993, %v921, %v992
    %1061 = vrot.lane.b32.xlu0 %v983, 111
    %v1062 = vpop.permute.xlu0 %1061
    %1063 = vrot.lane.b32.xlu0 %v985, 111
    %v1064 = vpop.permute.xlu0 %1063
    %1065 = vrot.lane.b32.xlu0 %v847, 111
    %v1066 = vpop.permute.xlu0 %1065
    %1067 = vrot.lane.b32.xlu0 %v849, 111
    %v1068 = vpop.permute.xlu0 %1067
    %1069 = vrot.lane.b32.xlu0 %v1059, 111
    %v1070 = vpop.permute.xlu0 %1069
    %1071 = vrot.lane.b32.xlu0 %v1060, 111
    %v1072 = vpop.permute.xlu0 %1071
    %1073 = vrot.lane.b32.xlu0 %v994, 111
    %v1074 = vpop.permute.xlu0 %1073
    %1075 = vrot.lane.b32.xlu0 %v995, 111
    %v1076 = vpop.permute.xlu0 %1075
    %1077 = vrot.lane.b32.xlu0 %v999, 111
    %v1078 = vpop.permute.xlu0 %1077
    %1079 = vrot.lane.b32.xlu0 %v1000, 111
    %v1080 = vpop.permute.xlu0 %1079
    %v1091 = vsel %vm83, %v1062, 0.0
    %v1092 = vsel %vm83, %v1064, 0.0
    %v1093 = vsel %vm83, %v1066, 0.0
    %v1094 = vsel %vm83, %v1068, 0.0
    %v1095 = vsel %vm83, %v1070, 0.0
    %v1096 = vsel %vm83, %v1072, 0.0
    %v1097 = vsel %vm83, %v1074, 0.0
    %v1098 = vsel %vm83, %v1076, 0.0
    %v1099 = vsel %vm83, %v1078, 0.0
    %v1100 = vsel %vm83, %v1080, 0.0
    %v1101 = vpack.c.bf16 %v901, %v900
    %v1102 = vpack.c.bf16 %v903, %v902
    %v1103 = vpack.c.bf16 %v907, %v906
    %v1104 = vpack.c.bf16 %v909, %v908
    %v1105 = vpack.c.bf16 %v905, %v904
    %v1106 = vpack.c.bf16 %v1046, %v1045
    %v1107 = vpack.c.bf16 %v911, %v910
    %v1108 = vpack.c.bf16 %v969, %v968
    %v1109 = vpack.c.bf16 %v1048, %v1047
    %v1110 = vpack.c.bf16 %v1092, %v1091
    %v1111 = vpack.c.bf16 %v971, %v970
    %v1112 = vpack.c.bf16 %v913, %v912
    %v1113 = vpack.c.bf16 %v915, %v914
    %v1114 = vpack.c.bf16 %v973, %v972
    %v1115 = vpack.c.bf16 %v1050, %v1049
    %v1116 = vpack.c.bf16 %v917, %v916
    %v1117 = vpack.c.bf16 %v975, %v974
    %v1118 = vpack.c.bf16 %v1052, %v1051
    %v1119 = vpack.c.bf16 %v1094, %v1093
    %v1120 = vpack.c.bf16 %v977, %v976
    %v1121 = vpack.c.bf16 %v1054, %v1053
    %v1122 = vpack.c.bf16 %v1096, %v1095
    %v1123 = vpack.c.bf16 %v979, %v978
    %v1124 = vpack.c.bf16 %v1056, %v1055
    %v1125 = vpack.c.bf16 %v1098, %v1097
    %v1126 = vpack.c.bf16 %v981, %v980
    %v1127 = vpack.c.bf16 %v1058, %v1057
    %v1128 = vpack.c.bf16 %v1100, %v1099
    %v1133 = vunpack.c.l.b16 %v49
    %v1134 = vunpack.c.h.b16 %v49
    %v1135 = vunpack.c.l.b16 %v50
    %v1136 = vunpack.c.h.b16 %v50
    %v1137 = vunpack.c.l.b16 %v51
    %v1138 = vunpack.c.h.b16 %v51
    %v1139 = vunpack.c.l.b16 %v52
    %v1140 = vunpack.c.h.b16 %v52
    %v1141 = vpack.c.b16 %v1135, %v1133
    %v1142 = vpack.c.b16 %v1136, %v1134
    %v1143 = vpack.c.b16 %v1139, %v1137
    %v1144 = vpack.c.b16 %v1140, %v1138
    %vm1147 = vcmask 130048
    %v1149 = vsel %vm1147, %v1142, 0
    %v1152 = vsel %vm1147, %v1144, 0
    %1154 = vmatpush.bf16.msra.mxu0 %v1113
    %1155 = vmatpush.bf16.msra.mxu0 %v1112
    %1156 = vmatpush.bf16.msra.mxu0 %v1107
    %1157 = vmatpush.bf16.msra.mxu0 %v1104
    %1158 = vmatpush.bf16.msra.mxu0 %v1103
    %1159 = vmatpush.bf16.msra.mxu0 %v1105
    %1160 = vmatpush.bf16.msra.mxu0 %v1102
    %1161 = vmatpush.bf16.msra.mxu0 %v1101
    %1162 = vmatmul.bf16.gmra.mxu0 %v1141
    %v1163 = vpop.f32.mrf.mxu0
    %v1164 = vadd.f32 0.0, %v1163
    %v1165 = vpop.f32.mrf.mxu0
    %v1166 = vadd.f32 0.0, %v1165
    %1167 = vmatmul.bf16.gmra.mxu0 %v1143
    %v1168 = vpop.f32.mrf.mxu0
    %v1169 = vadd.f32 0.0, %v1168
    %v1170 = vpop.f32.mrf.mxu0
    %v1171 = vadd.f32 0.0, %v1170
    %1172 = vdwg.mxu0
    %1173 = vmatpush.bf16.msra.mxu0 0
    %1174 = vmatpush.bf16.msra.mxu0 0
    %1175 = vmatpush.bf16.msra.mxu0 0
    %1176 = vmatpush.bf16.msra.mxu0 0
    %1177 = vmatpush.bf16.msra.mxu0 0
    %1178 = vmatpush.bf16.msra.mxu0 0
    %1179 = vmatpush.bf16.msra.mxu0 0
    %1180 = vmatpush.bf16.msra.mxu0 %v1116
    %1181 = vmatmul.bf16.gmra.mxu0 %v1149
    %v1182 = vpop.f32.mrf.mxu0
    %v1183 = vadd.f32 %v1164, %v1182
    %v1184 = vpop.f32.mrf.mxu0
    %v1185 = vadd.f32 %v1166, %v1184
    %1186 = vmatmul.bf16.gmra.mxu0 %v1152
    %v1187 = vpop.f32.mrf.mxu0
    %v1188 = vadd.f32 %v1169, %v1187
    %v1189 = vpop.f32.mrf.mxu0
    %v1190 = vadd.f32 %v1171, %v1189
    %1191 = vdwg.mxu0
    %1192 = vmatpush.bf16.msra.mxu0 %v1123
    %1193 = vmatpush.bf16.msra.mxu0 %v1120
    %1194 = vmatpush.bf16.msra.mxu0 %v1117
    %1195 = vmatpush.bf16.msra.mxu0 %v1114
    %1196 = vmatpush.bf16.msra.mxu0 %v1111
    %1197 = vmatpush.bf16.msra.mxu0 %v1108
    %1198 = vmatpush.bf16.msra.mxu0 %v1105
    %1199 = vmatpush.bf16.msra.mxu0 %v1102
    %1200 = vmatmul.bf16.gmra.mxu0 %v1141
    %v1201 = vpop.f32.mrf.mxu0
    %v1202 = vadd.f32 0.0, %v1201
    %v1203 = vpop.f32.mrf.mxu0
    %v1204 = vadd.f32 0.0, %v1203
    %1205 = vmatmul.bf16.gmra.mxu0 %v1143
    %v1206 = vpop.f32.mrf.mxu0
    %v1207 = vadd.f32 0.0, %v1206
    %v1208 = vpop.f32.mrf.mxu0
    %v1209 = vadd.f32 0.0, %v1208
    %1210 = vdwg.mxu0
    %1211 = vmatpush.bf16.msra.mxu0 0
    %1212 = vmatpush.bf16.msra.mxu0 0
    %1213 = vmatpush.bf16.msra.mxu0 0
    %1214 = vmatpush.bf16.msra.mxu0 0
    %1215 = vmatpush.bf16.msra.mxu0 0
    %1216 = vmatpush.bf16.msra.mxu0 0
    %1217 = vmatpush.bf16.msra.mxu0 0
    %1218 = vmatpush.bf16.msra.mxu0 %v1126
    %1219 = vmatmul.bf16.gmra.mxu0 %v1149
    %v1220 = vpop.f32.mrf.mxu0
    %v1221 = vadd.f32 %v1202, %v1220
    %v1222 = vpop.f32.mrf.mxu0
    %v1223 = vadd.f32 %v1204, %v1222
    %1224 = vmatmul.bf16.gmra.mxu0 %v1152
    %v1225 = vpop.f32.mrf.mxu0
    %v1226 = vadd.f32 %v1207, %v1225
    %v1227 = vpop.f32.mrf.mxu0
    %v1228 = vadd.f32 %v1209, %v1227
    %1229 = vdwg.mxu0
    %1230 = vmatpush.bf16.msra.mxu0 %v1124
    %1231 = vmatpush.bf16.msra.mxu0 %v1121
    %1232 = vmatpush.bf16.msra.mxu0 %v1118
    %1233 = vmatpush.bf16.msra.mxu0 %v1115
    %1234 = vmatpush.bf16.msra.mxu0 %v1112
    %1235 = vmatpush.bf16.msra.mxu0 %v1109
    %1236 = vmatpush.bf16.msra.mxu0 %v1106
    %1237 = vmatpush.bf16.msra.mxu0 %v1103
    %1238 = vmatmul.bf16.gmra.mxu0 %v1141
    %v1239 = vpop.f32.mrf.mxu0
    %v1240 = vadd.f32 0.0, %v1239
    %v1241 = vpop.f32.mrf.mxu0
    %v1242 = vadd.f32 0.0, %v1241
    %1243 = vmatmul.bf16.gmra.mxu0 %v1143
    %v1244 = vpop.f32.mrf.mxu0
    %v1245 = vadd.f32 0.0, %v1244
    %v1246 = vpop.f32.mrf.mxu0
    %v1247 = vadd.f32 0.0, %v1246
    %1248 = vdwg.mxu0
    %1249 = vmatpush.bf16.msra.mxu0 0
    %1250 = vmatpush.bf16.msra.mxu0 0
    %1251 = vmatpush.bf16.msra.mxu0 0
    %1252 = vmatpush.bf16.msra.mxu0 0
    %1253 = vmatpush.bf16.msra.mxu0 0
    %1254 = vmatpush.bf16.msra.mxu0 0
    %1255 = vmatpush.bf16.msra.mxu0 0
    %1256 = vmatpush.bf16.msra.mxu0 %v1127
    %1257 = vmatmul.bf16.gmra.mxu0 %v1149
    %v1258 = vpop.f32.mrf.mxu0
    %v1259 = vadd.f32 %v1240, %v1258
    %v1260 = vpop.f32.mrf.mxu0
    %v1261 = vadd.f32 %v1242, %v1260
    %1262 = vmatmul.bf16.gmra.mxu0 %v1152
    %v1263 = vpop.f32.mrf.mxu0
    %v1264 = vadd.f32 %v1245, %v1263
    %v1265 = vpop.f32.mrf.mxu0
    %v1266 = vadd.f32 %v1247, %v1265
    %1267 = vdwg.mxu0
    %1268 = vmatpush.bf16.msra.mxu0 %v1125
    %1269 = vmatpush.bf16.msra.mxu0 %v1122
    %1270 = vmatpush.bf16.msra.mxu0 %v1119
    %1271 = vmatpush.bf16.msra.mxu0 %v1116
    %1272 = vmatpush.bf16.msra.mxu0 %v1113
    %1273 = vmatpush.bf16.msra.mxu0 %v1110
    %1274 = vmatpush.bf16.msra.mxu0 %v1107
    %1275 = vmatpush.bf16.msra.mxu0 %v1104
    %1276 = vmatmul.bf16.gmra.mxu0 %v1141
    %v1277 = vpop.f32.mrf.mxu0
    %v1278 = vadd.f32 0.0, %v1277
    %v1279 = vpop.f32.mrf.mxu0
    %v1280 = vadd.f32 0.0, %v1279
    %1281 = vmatmul.bf16.gmra.mxu0 %v1143
    %v1282 = vpop.f32.mrf.mxu0
    %v1283 = vadd.f32 0.0, %v1282
    %v1284 = vpop.f32.mrf.mxu0
    %v1285 = vadd.f32 0.0, %v1284
    %1286 = vdwg.mxu0
    %1287 = vmatpush.bf16.msra.mxu0 0
    %1288 = vmatpush.bf16.msra.mxu0 0
    %1289 = vmatpush.bf16.msra.mxu0 0
    %1290 = vmatpush.bf16.msra.mxu0 0
    %1291 = vmatpush.bf16.msra.mxu0 0
    %1292 = vmatpush.bf16.msra.mxu0 0
    %1293 = vmatpush.bf16.msra.mxu0 0
    %1294 = vmatpush.bf16.msra.mxu0 %v1128
    %1295 = vmatmul.bf16.gmra.mxu0 %v1149
    %v1296 = vpop.f32.mrf.mxu0
    %v1297 = vadd.f32 %v1278, %v1296
    %v1298 = vpop.f32.mrf.mxu0
    %v1299 = vadd.f32 %v1280, %v1298
    %1300 = vmatmul.bf16.gmra.mxu0 %v1152
    %v1301 = vpop.f32.mrf.mxu0
    %v1302 = vadd.f32 %v1283, %v1301
    %v1303 = vpop.f32.mrf.mxu0
    %v1304 = vadd.f32 %v1285, %v1303
    %1305 = vdwg.mxu0
    %v1306 = vmax.f32 %v1183, %v1221
    %v1307 = vmax.f32 %v1185, %v1223
    %v1308 = vmax.f32 %v1188, %v1226
    %v1309 = vmax.f32 %v1190, %v1228
    %v1310 = vmax.f32 %v1259, %v1297
    %v1311 = vmax.f32 %v1261, %v1299
    %v1312 = vmax.f32 %v1264, %v1302
    %v1313 = vmax.f32 %v1266, %v1304
    %v1314 = vmax.f32 %v1306, %v1310
    %v1315 = vmax.f32 %v1307, %v1311
    %v1316 = vmax.f32 %v1308, %v1312
    %v1317 = vmax.f32 %v1309, %v1313
    %1319 = vset.pattern.permute.xlu0 0
    %1320 = vperm.xlu0 %1319, %v53
    %v1321 = vpop.permute.xlu0 %1320
    %1324 = vset.pattern.permute.xlu0 0
    %1325 = vperm.xlu0 %1324, %v54
    %v1326 = vpop.permute.xlu0 %1325
    %1329 = vset.pattern.permute.xlu0 0
    %1330 = vperm.xlu0 %1329, %v55
    %v1331 = vpop.permute.xlu0 %1330
    %1334 = vset.pattern.permute.xlu0 0
    %1335 = vperm.xlu0 %1334, %v56
    %v1336 = vpop.permute.xlu0 %1335
    %v1338 = vadd.f32 %v1314, %v1321
    %v1339 = vadd.f32 %v1315, %v1326
    %v1340 = vadd.f32 %v1316, %v1331
    %v1341 = vadd.f32 %v1317, %v1336
    %v1342 = vmax.f32 %v1338, 0.0
    %v1343 = vmax.f32 %v1339, 0.0
    %v1344 = vmax.f32 %v1340, 0.0
    %v1345 = vmax.f32 %v1341, 0.0
    %v1346 = vpack.c.bf16 %v1342, %v1342
    %v1347 = vpack.c.bf16 %v1343, %v1343
    %v1348 = vpack.c.bf16 %v1344, %v1344
    %v1349 = vpack.c.bf16 %v1345, %v1345
    %s1350 = smul.u32 %s58, 4
    %s1351 = smul.addr %s1350, 4
    %s1352 = scalar_lea.vmem [#allocation2], %s1351
    %1353 = vst [vmem:[%s1352] sm:$0xf] %v1346
    %1354 = vst [vmem:[%s1352 + $0x4] sm:$0xf] %v1347
    %1355 = vst [vmem:[%s1352 + $0x8] sm:$0xf] %v1348
    %1356 = vst [vmem:[%s1352 + $0xc] sm:$0xf] %v1349
  $region50: #{mnist_addition_cnn.1} parent=0 // loop_footer
    %s62 = sadd.s32 1, %s58
  $region51: #{mnist_addition_cnn.1} parent=0 // loop_footer_branch
    %57 = sbr.rel target = $region47
  $region52: #{mnist_addition_cnn.1} parent=0 // loop_exit
    _
  %v1357 = vld [vmem:[#allocation2] sm:$0xf]
  %v1358 = vld [vmem:[#allocation2 + $0x4] sm:$0xf]
  %v1359 = vld [vmem:[#allocation2 + $0x8] sm:$0xf]
  %v1360 = vld [vmem:[#allocation2 + $0xc] sm:$0xf]
  %v1361 = vld [vmem:[#allocation2 + $0x10] sm:$0xf]
  %v1362 = vld [vmem:[#allocation2 + $0x14] sm:$0xf]
  %v1363 = vld [vmem:[#allocation2 + $0x18] sm:$0xf]
  %v1364 = vld [vmem:[#allocation2 + $0x1c] sm:$0xf]
  %v1365 = vld [vmem:[#allocation2 + $0x20] sm:$0xf]
  %v1366 = vld [vmem:[#allocation2 + $0x24] sm:$0xf]
  %v1367 = vld [vmem:[#allocation2 + $0x28] sm:$0xf]
  %v1368 = vld [vmem:[#allocation2 + $0x2c] sm:$0xf]
  %v1369 = vld [vmem:[#allocation2 + $0x30] sm:$0xf]
  %v1370 = vld [vmem:[#allocation2 + $0x34] sm:$0xf]
  %v1371 = vld [vmem:[#allocation2 + $0x38] sm:$0xf]
  %v1372 = vld [vmem:[#allocation2 + $0x3c] sm:$0xf]
  %v1373 = vld [vmem:[#allocation2 + $0x40] sm:$0xf]
  %v1374 = vld [vmem:[#allocation2 + $0x44] sm:$0xf]
  %v1375 = vld [vmem:[#allocation2 + $0x48] sm:$0xf]
  %v1376 = vld [vmem:[#allocation2 + $0x4c] sm:$0xf]
  %v1377 = vld [vmem:[#allocation2 + $0x50] sm:$0xf]
  %v1378 = vld [vmem:[#allocation2 + $0x54] sm:$0xf]
  %v1379 = vld [vmem:[#allocation2 + $0x58] sm:$0xf]
  %v1380 = vld [vmem:[#allocation2 + $0x5c] sm:$0xf]
  %v1381 = vld [vmem:[#allocation2 + $0x60] sm:$0xf]
  %v1382 = vld [vmem:[#allocation2 + $0x64] sm:$0xf]
  %v1383 = vld [vmem:[#allocation2 + $0x68] sm:$0xf]
  %v1384 = vld [vmem:[#allocation2 + $0x6c] sm:$0xf]
  %v1385 = vld [vmem:[#allocation2 + $0x70] sm:$0xf]
  %v1386 = vld [vmem:[#allocation2 + $0x74] sm:$0xf]
  %v1387 = vld [vmem:[#allocation2 + $0x78] sm:$0xf]
  %v1388 = vld [vmem:[#allocation2 + $0x7c] sm:$0xf]
  %v1389 = vld [vmem:[%s5] sm:$0xf]
  %v1390 = vld [vmem:[%s5 + $0x4] sm:$0xf]
  %v1391 = vld [vmem:[%s5 + $0x8] sm:$0xf]
  %v1392 = vld [vmem:[%s5 + $0xc] sm:$0xf]
  %v1393 = vld [vmem:[%s5 + $0x10] sm:$0xf]
  %v1394 = vld [vmem:[%s5 + $0x14] sm:$0xf]
  %v1395 = vld [vmem:[%s5 + $0x18] sm:$0xf]
  %v1396 = vld [vmem:[%s5 + $0x1c] sm:$0xf]
  %v1397 = vld [vmem:[%s5 + $0x20] sm:$0xf]
  %v1398 = vld [vmem:[%s5 + $0x24] sm:$0xf]
  %v1399 = vld [vmem:[%s5 + $0x28] sm:$0xf]
  %v1400 = vld [vmem:[%s5 + $0x2c] sm:$0xf]
  %v1401 = vld [vmem:[%s5 + $0x30] sm:$0xf]
  %v1402 = vld [vmem:[%s5 + $0x34] sm:$0xf]
  %v1403 = vld [vmem:[%s5 + $0x38] sm:$0xf]
  %v1404 = vld [vmem:[%s5 + $0x3c] sm:$0xf]
  %s1405 = scalar_lea.vmem %s5, 64
  %v1406 = vld [vmem:[%s1405] sm:$0xf]
  %v1407 = vld [vmem:[%s1405 + $0x4] sm:$0xf]
  %v1408 = vld [vmem:[%s1405 + $0x8] sm:$0xf]
  %v1409 = vld [vmem:[%s1405 + $0xc] sm:$0xf]
  %v1410 = vld [vmem:[%s1405 + $0x10] sm:$0xf]
  %v1411 = vld [vmem:[%s1405 + $0x14] sm:$0xf]
  %v1412 = vld [vmem:[%s1405 + $0x18] sm:$0xf]
  %v1413 = vld [vmem:[%s1405 + $0x1c] sm:$0xf]
  %v1414 = vld [vmem:[%s1405 + $0x20] sm:$0xf]
  %v1415 = vld [vmem:[%s1405 + $0x24] sm:$0xf]
  %v1416 = vld [vmem:[%s1405 + $0x28] sm:$0xf]
  %v1417 = vld [vmem:[%s1405 + $0x2c] sm:$0xf]
  %v1418 = vld [vmem:[%s1405 + $0x30] sm:$0xf]
  %v1419 = vld [vmem:[%s1405 + $0x34] sm:$0xf]
  %v1420 = vld [vmem:[%s1405 + $0x38] sm:$0xf]
  %v1421 = vld [vmem:[%s1405 + $0x3c] sm:$0xf]
  %v1430 = vunpack.c.l.b16 %v1357
  %v1431 = vunpack.c.l.b16 %v1361
  %v1432 = vunpack.c.l.b16 %v1365
  %v1433 = vunpack.c.l.b16 %v1369
  %v1434 = vunpack.c.l.b16 %v1373
  %v1435 = vunpack.c.l.b16 %v1377
  %v1436 = vunpack.c.l.b16 %v1381
  %v1437 = vunpack.c.l.b16 %v1385
  %v1438 = vpack.c.b16 %v1430, %v1430
  %v1439 = vpack.c.b16 %v1431, %v1431
  %v1440 = vpack.c.b16 %v1432, %v1432
  %v1441 = vpack.c.b16 %v1433, %v1433
  %v1442 = vpack.c.b16 %v1434, %v1434
  %v1443 = vpack.c.b16 %v1435, %v1435
  %v1444 = vpack.c.b16 %v1436, %v1436
  %v1445 = vpack.c.b16 %v1437, %v1437
  %v1446 = vunpack.c.l.b16 %v1438
  %v1447 = vunpack.c.l.b16 %v1439
  %v1448 = vunpack.c.l.b16 %v1440
  %v1449 = vunpack.c.l.b16 %v1441
  %v1450 = vunpack.c.l.b16 %v1442
  %v1451 = vunpack.c.l.b16 %v1443
  %v1452 = vunpack.c.l.b16 %v1444
  %v1453 = vunpack.c.l.b16 %v1445
  %v1454 = vrot.slane %v1446, 1
  %vm1455 = vcmask 1041409
  %v1456 = vsel %vm1455, %v1447, %v1454
  %v1457 = vrot.slane %v1448, 7
  %vm1458 = vcmask 1042434
  %v1459 = vsel %vm1458, %v1457, %v1456
  %v1460 = vrot.slane %v1449, 6
  %vm1461 = vcmask 1043459
  %v1462 = vsel %vm1461, %v1460, %v1459
  %v1463 = vrot.slane %v1450, 5
  %vm1464 = vcmask 1044484
  %v1465 = vsel %vm1464, %v1463, %v1462
  %v1466 = vrot.slane %v1451, 4
  %vm1467 = vcmask 1045509
  %v1468 = vsel %vm1467, %v1466, %v1465
  %v1469 = vrot.slane %v1452, 3
  %vm1470 = vcmask 1046534
  %v1471 = vsel %vm1470, %v1469, %v1468
  %v1472 = vrot.slane %v1453, 2
  %vm1473 = vcmask 1047559
  %v1474 = vsel %vm1473, %v1472, %v1471
  %v1475 = vpack.c.b16 %v1474, %v1474
  %v1493 = vunpack.c.l.b16 %v1406
  %v1494 = vunpack.c.l.b16 %v1407
  %v1495 = vunpack.c.l.b16 %v1408
  %v1496 = vunpack.c.l.b16 %v1409
  %v1497 = vunpack.c.l.b16 %v1410
  %v1498 = vunpack.c.l.b16 %v1411
  %v1499 = vunpack.c.l.b16 %v1412
  %v1500 = vunpack.c.l.b16 %v1413
  %v1501 = vunpack.c.l.b16 %v1414
  %v1502 = vunpack.c.l.b16 %v1415
  %v1503 = vunpack.c.l.b16 %v1416
  %v1504 = vunpack.c.l.b16 %v1417
  %v1505 = vunpack.c.l.b16 %v1418
  %v1506 = vunpack.c.l.b16 %v1419
  %v1507 = vunpack.c.l.b16 %v1420
  %v1508 = vunpack.c.l.b16 %v1421
  %v1509 = vpack.c.b16 %v1494, %v1493
  %v1510 = vpack.c.b16 %v1496, %v1495
  %v1511 = vpack.c.b16 %v1498, %v1497
  %v1512 = vpack.c.b16 %v1500, %v1499
  %v1513 = vpack.c.b16 %v1502, %v1501
  %v1514 = vpack.c.b16 %v1504, %v1503
  %v1515 = vpack.c.b16 %v1506, %v1505
  %v1516 = vpack.c.b16 %v1508, %v1507
  %1525 = vmatpush.bf16.msra.mxu0 %v1516
  %1526 = vmatpush.bf16.msra.mxu0 %v1515
  %1527 = vmatpush.bf16.msra.mxu0 %v1514
  %1528 = vmatpush.bf16.msra.mxu0 %v1513
  %1529 = vmatpush.bf16.msra.mxu0 %v1512
  %1530 = vmatpush.bf16.msra.mxu0 %v1511
  %1531 = vmatpush.bf16.msra.mxu0 %v1510
  %1532 = vmatpush.bf16.msra.mxu0 %v1509
  %1533 = vmatmul.bf16.gmra.mxu0 %v1475
  %v1534 = vpop.f32.mrf.mxu0
  %v1535 = vadd.f32 0.0, %v1534
  %v1536 = vpop.f32.mrf.mxu0
  %1537 = vdwg.mxu0
  %v1538 = vrot.slane %v1447, 7
  %v1539 = vsel %vm1455, %v1538, %v1446
  %v1540 = vrot.slane %v1448, 6
  %v1541 = vsel %vm1458, %v1540, %v1539
  %v1542 = vrot.slane %v1449, 5
  %v1543 = vsel %vm1461, %v1542, %v1541
  %v1544 = vrot.slane %v1450, 4
  %v1545 = vsel %vm1464, %v1544, %v1543
  %v1546 = vrot.slane %v1451, 3
  %v1547 = vsel %vm1467, %v1546, %v1545
  %v1548 = vrot.slane %v1452, 2
  %v1549 = vsel %vm1470, %v1548, %v1547
  %v1550 = vrot.slane %v1453, 1
  %v1551 = vsel %vm1473, %v1550, %v1549
  %v1552 = vpack.c.b16 %v1551, %v1551
  %v1570 = vunpack.c.l.b16 %v1389
  %v1571 = vunpack.c.l.b16 %v1390
  %v1572 = vunpack.c.l.b16 %v1391
  %v1573 = vunpack.c.l.b16 %v1392
  %v1574 = vunpack.c.l.b16 %v1393
  %v1575 = vunpack.c.l.b16 %v1394
  %v1576 = vunpack.c.l.b16 %v1395
  %v1577 = vunpack.c.l.b16 %v1396
  %v1578 = vunpack.c.l.b16 %v1397
  %v1579 = vunpack.c.l.b16 %v1398
  %v1580 = vunpack.c.l.b16 %v1399
  %v1581 = vunpack.c.l.b16 %v1400
  %v1582 = vunpack.c.l.b16 %v1401
  %v1583 = vunpack.c.l.b16 %v1402
  %v1584 = vunpack.c.l.b16 %v1403
  %v1585 = vunpack.c.l.b16 %v1404
  %v1586 = vpack.c.b16 %v1571, %v1570
  %v1587 = vpack.c.b16 %v1573, %v1572
  %v1588 = vpack.c.b16 %v1575, %v1574
  %v1589 = vpack.c.b16 %v1577, %v1576
  %v1590 = vpack.c.b16 %v1579, %v1578
  %v1591 = vpack.c.b16 %v1581, %v1580
  %v1592 = vpack.c.b16 %v1583, %v1582
  %v1593 = vpack.c.b16 %v1585, %v1584
  %1602 = vmatpush.bf16.msra.mxu0 %v1593
  %1603 = vmatpush.bf16.msra.mxu0 %v1592
  %1604 = vmatpush.bf16.msra.mxu0 %v1591
  %1605 = vmatpush.bf16.msra.mxu0 %v1590
  %1606 = vmatpush.bf16.msra.mxu0 %v1589
  %1607 = vmatpush.bf16.msra.mxu0 %v1588
  %1608 = vmatpush.bf16.msra.mxu0 %v1587
  %1609 = vmatpush.bf16.msra.mxu0 %v1586
  %1610 = vmatmul.bf16.gmra.mxu0 %v1552
  %v1611 = vpop.f32.mrf.mxu0
  %v1612 = vadd.f32 %v1535, %v1611
  %v1613 = vpop.f32.mrf.mxu0
  %1614 = vdwg.mxu0
  %s1615 = scalar_lea.vmem %s5, 128
  %v1616 = vld [vmem:[%s1615] sm:$0xf]
  %v1617 = vld [vmem:[%s1615 + $0x4] sm:$0xf]
  %v1618 = vld [vmem:[%s1615 + $0x8] sm:$0xf]
  %v1619 = vld [vmem:[%s1615 + $0xc] sm:$0xf]
  %v1620 = vld [vmem:[%s1615 + $0x10] sm:$0xf]
  %v1621 = vld [vmem:[%s1615 + $0x14] sm:$0xf]
  %v1622 = vld [vmem:[%s1615 + $0x18] sm:$0xf]
  %v1623 = vld [vmem:[%s1615 + $0x1c] sm:$0xf]
  %v1624 = vld [vmem:[%s1615 + $0x20] sm:$0xf]
  %v1625 = vld [vmem:[%s1615 + $0x24] sm:$0xf]
  %v1626 = vld [vmem:[%s1615 + $0x28] sm:$0xf]
  %v1627 = vld [vmem:[%s1615 + $0x2c] sm:$0xf]
  %v1628 = vld [vmem:[%s1615 + $0x30] sm:$0xf]
  %v1629 = vld [vmem:[%s1615 + $0x34] sm:$0xf]
  %v1630 = vld [vmem:[%s1615 + $0x38] sm:$0xf]
  %v1631 = vld [vmem:[%s1615 + $0x3c] sm:$0xf]
  %v1632 = vrot.slane %v1446, 2
  %v1633 = vrot.slane %v1447, 1
  %v1634 = vsel %vm1455, %v1633, %v1632
  %v1635 = vsel %vm1458, %v1448, %v1634
  %v1636 = vrot.slane %v1449, 7
  %v1637 = vsel %vm1461, %v1636, %v1635
  %v1638 = vrot.slane %v1450, 6
  %v1639 = vsel %vm1464, %v1638, %v1637
  %v1640 = vrot.slane %v1451, 5
  %v1641 = vsel %vm1467, %v1640, %v1639
  %v1642 = vrot.slane %v1452, 4
  %v1643 = vsel %vm1470, %v1642, %v1641
  %v1644 = vrot.slane %v1453, 3
  %v1645 = vsel %vm1473, %v1644, %v1643
  %v1646 = vpack.c.b16 %v1645, %v1645
  %v1664 = vunpack.c.l.b16 %v1616
  %v1665 = vunpack.c.l.b16 %v1617
  %v1666 = vunpack.c.l.b16 %v1618
  %v1667 = vunpack.c.l.b16 %v1619
  %v1668 = vunpack.c.l.b16 %v1620
  %v1669 = vunpack.c.l.b16 %v1621
  %v1670 = vunpack.c.l.b16 %v1622
  %v1671 = vunpack.c.l.b16 %v1623
  %v1672 = vunpack.c.l.b16 %v1624
  %v1673 = vunpack.c.l.b16 %v1625
  %v1674 = vunpack.c.l.b16 %v1626
  %v1675 = vunpack.c.l.b16 %v1627
  %v1676 = vunpack.c.l.b16 %v1628
  %v1677 = vunpack.c.l.b16 %v1629
  %v1678 = vunpack.c.l.b16 %v1630
  %v1679 = vunpack.c.l.b16 %v1631
  %v1680 = vpack.c.b16 %v1665, %v1664
  %v1681 = vpack.c.b16 %v1667, %v1666
  %v1682 = vpack.c.b16 %v1669, %v1668
  %v1683 = vpack.c.b16 %v1671, %v1670
  %v1684 = vpack.c.b16 %v1673, %v1672
  %v1685 = vpack.c.b16 %v1675, %v1674
  %v1686 = vpack.c.b16 %v1677, %v1676
  %v1687 = vpack.c.b16 %v1679, %v1678
  %1696 = vmatpush.bf16.msra.mxu0 %v1687
  %1697 = vmatpush.bf16.msra.mxu0 %v1686
  %1698 = vmatpush.bf16.msra.mxu0 %v1685
  %1699 = vmatpush.bf16.msra.mxu0 %v1684
  %1700 = vmatpush.bf16.msra.mxu0 %v1683
  %1701 = vmatpush.bf16.msra.mxu0 %v1682
  %1702 = vmatpush.bf16.msra.mxu0 %v1681
  %1703 = vmatpush.bf16.msra.mxu0 %v1680
  %1704 = vmatmul.bf16.gmra.mxu0 %v1646
  %v1705 = vpop.f32.mrf.mxu0
  %v1706 = vadd.f32 0.0, %v1705
  %v1707 = vpop.f32.mrf.mxu0
  %1708 = vdwg.mxu0
  %v1709 = vadd.f32 %v1612, %v1706
  %s1710 = scalar_lea.vmem %s5, 192
  %v1711 = vld [vmem:[%s1710] sm:$0xf]
  %v1712 = vld [vmem:[%s1710 + $0x4] sm:$0xf]
  %v1713 = vld [vmem:[%s1710 + $0x8] sm:$0xf]
  %v1714 = vld [vmem:[%s1710 + $0xc] sm:$0xf]
  %v1715 = vld [vmem:[%s1710 + $0x10] sm:$0xf]
  %v1716 = vld [vmem:[%s1710 + $0x14] sm:$0xf]
  %v1717 = vld [vmem:[%s1710 + $0x18] sm:$0xf]
  %v1718 = vld [vmem:[%s1710 + $0x1c] sm:$0xf]
  %v1719 = vld [vmem:[%s1710 + $0x20] sm:$0xf]
  %v1720 = vld [vmem:[%s1710 + $0x24] sm:$0xf]
  %v1721 = vld [vmem:[%s1710 + $0x28] sm:$0xf]
  %v1722 = vld [vmem:[%s1710 + $0x2c] sm:$0xf]
  %v1723 = vld [vmem:[%s1710 + $0x30] sm:$0xf]
  %v1724 = vld [vmem:[%s1710 + $0x34] sm:$0xf]
  %v1725 = vld [vmem:[%s1710 + $0x38] sm:$0xf]
  %v1726 = vld [vmem:[%s1710 + $0x3c] sm:$0xf]
  %v1727 = vrot.slane %v1446, 3
  %v1728 = vrot.slane %v1447, 2
  %v1729 = vsel %vm1455, %v1728, %v1727
  %v1730 = vrot.slane %v1448, 1
  %v1731 = vsel %vm1458, %v1730, %v1729
  %v1732 = vsel %vm1461, %v1449, %v1731
  %v1733 = vrot.slane %v1450, 7
  %v1734 = vsel %vm1464, %v1733, %v1732
  %v1735 = vrot.slane %v1451, 6
  %v1736 = vsel %vm1467, %v1735, %v1734
  %v1737 = vrot.slane %v1452, 5
  %v1738 = vsel %vm1470, %v1737, %v1736
  %v1739 = vrot.slane %v1453, 4
  %v1740 = vsel %vm1473, %v1739, %v1738
  %v1741 = vpack.c.b16 %v1740, %v1740
  %v1759 = vunpack.c.l.b16 %v1711
  %v1760 = vunpack.c.l.b16 %v1712
  %v1761 = vunpack.c.l.b16 %v1713
  %v1762 = vunpack.c.l.b16 %v1714
  %v1763 = vunpack.c.l.b16 %v1715
  %v1764 = vunpack.c.l.b16 %v1716
  %v1765 = vunpack.c.l.b16 %v1717
  %v1766 = vunpack.c.l.b16 %v1718
  %v1767 = vunpack.c.l.b16 %v1719
  %v1768 = vunpack.c.l.b16 %v1720
  %v1769 = vunpack.c.l.b16 %v1721
  %v1770 = vunpack.c.l.b16 %v1722
  %v1771 = vunpack.c.l.b16 %v1723
  %v1772 = vunpack.c.l.b16 %v1724
  %v1773 = vunpack.c.l.b16 %v1725
  %v1774 = vunpack.c.l.b16 %v1726
  %v1775 = vpack.c.b16 %v1760, %v1759
  %v1776 = vpack.c.b16 %v1762, %v1761
  %v1777 = vpack.c.b16 %v1764, %v1763
  %v1778 = vpack.c.b16 %v1766, %v1765
  %v1779 = vpack.c.b16 %v1768, %v1767
  %v1780 = vpack.c.b16 %v1770, %v1769
  %v1781 = vpack.c.b16 %v1772, %v1771
  %v1782 = vpack.c.b16 %v1774, %v1773
  %1791 = vmatpush.bf16.msra.mxu0 %v1782
  %1792 = vmatpush.bf16.msra.mxu0 %v1781
  %1793 = vmatpush.bf16.msra.mxu0 %v1780
  %1794 = vmatpush.bf16.msra.mxu0 %v1779
  %1795 = vmatpush.bf16.msra.mxu0 %v1778
  %1796 = vmatpush.bf16.msra.mxu0 %v1777
  %1797 = vmatpush.bf16.msra.mxu0 %v1776
  %1798 = vmatpush.bf16.msra.mxu0 %v1775
  %1799 = vmatmul.bf16.gmra.mxu0 %v1741
  %v1800 = vpop.f32.mrf.mxu0
  %v1801 = vadd.f32 0.0, %v1800
  %v1802 = vpop.f32.mrf.mxu0
  %1803 = vdwg.mxu0
  %v1804 = vadd.f32 %v1709, %v1801
  %s1805 = scalar_lea.vmem %s5, 256
  %v1806 = vld [vmem:[%s1805] sm:$0xf]
  %v1807 = vld [vmem:[%s1805 + $0x4] sm:$0xf]
  %v1808 = vld [vmem:[%s1805 + $0x8] sm:$0xf]
  %v1809 = vld [vmem:[%s1805 + $0xc] sm:$0xf]
  %v1810 = vld [vmem:[%s1805 + $0x10] sm:$0xf]
  %v1811 = vld [vmem:[%s1805 + $0x14] sm:$0xf]
  %v1812 = vld [vmem:[%s1805 + $0x18] sm:$0xf]
  %v1813 = vld [vmem:[%s1805 + $0x1c] sm:$0xf]
  %v1814 = vld [vmem:[%s1805 + $0x20] sm:$0xf]
  %v1815 = vld [vmem:[%s1805 + $0x24] sm:$0xf]
  %v1816 = vld [vmem:[%s1805 + $0x28] sm:$0xf]
  %v1817 = vld [vmem:[%s1805 + $0x2c] sm:$0xf]
  %v1818 = vld [vmem:[%s1805 + $0x30] sm:$0xf]
  %v1819 = vld [vmem:[%s1805 + $0x34] sm:$0xf]
  %v1820 = vld [vmem:[%s1805 + $0x38] sm:$0xf]
  %v1821 = vld [vmem:[%s1805 + $0x3c] sm:$0xf]
  %v1822 = vrot.slane %v1446, 4
  %v1823 = vrot.slane %v1447, 3
  %v1824 = vsel %vm1455, %v1823, %v1822
  %v1825 = vrot.slane %v1448, 2
  %v1826 = vsel %vm1458, %v1825, %v1824
  %v1827 = vrot.slane %v1449, 1
  %v1828 = vsel %vm1461, %v1827, %v1826
  %v1829 = vsel %vm1464, %v1450, %v1828
  %v1830 = vrot.slane %v1451, 7
  %v1831 = vsel %vm1467, %v1830, %v1829
  %v1832 = vrot.slane %v1452, 6
  %v1833 = vsel %vm1470, %v1832, %v1831
  %v1834 = vrot.slane %v1453, 5
  %v1835 = vsel %vm1473, %v1834, %v1833
  %v1836 = vpack.c.b16 %v1835, %v1835
  %v1854 = vunpack.c.l.b16 %v1806
  %v1855 = vunpack.c.l.b16 %v1807
  %v1856 = vunpack.c.l.b16 %v1808
  %v1857 = vunpack.c.l.b16 %v1809
  %v1858 = vunpack.c.l.b16 %v1810
  %v1859 = vunpack.c.l.b16 %v1811
  %v1860 = vunpack.c.l.b16 %v1812
  %v1861 = vunpack.c.l.b16 %v1813
  %v1862 = vunpack.c.l.b16 %v1814
  %v1863 = vunpack.c.l.b16 %v1815
  %v1864 = vunpack.c.l.b16 %v1816
  %v1865 = vunpack.c.l.b16 %v1817
  %v1866 = vunpack.c.l.b16 %v1818
  %v1867 = vunpack.c.l.b16 %v1819
  %v1868 = vunpack.c.l.b16 %v1820
  %v1869 = vunpack.c.l.b16 %v1821
  %v1870 = vpack.c.b16 %v1855, %v1854
  %v1871 = vpack.c.b16 %v1857, %v1856
  %v1872 = vpack.c.b16 %v1859, %v1858
  %v1873 = vpack.c.b16 %v1861, %v1860
  %v1874 = vpack.c.b16 %v1863, %v1862
  %v1875 = vpack.c.b16 %v1865, %v1864
  %v1876 = vpack.c.b16 %v1867, %v1866
  %v1877 = vpack.c.b16 %v1869, %v1868
  %1886 = vmatpush.bf16.msra.mxu0 %v1877
  %1887 = vmatpush.bf16.msra.mxu0 %v1876
  %1888 = vmatpush.bf16.msra.mxu0 %v1875
  %1889 = vmatpush.bf16.msra.mxu0 %v1874
  %1890 = vmatpush.bf16.msra.mxu0 %v1873
  %1891 = vmatpush.bf16.msra.mxu0 %v1872
  %1892 = vmatpush.bf16.msra.mxu0 %v1871
  %1893 = vmatpush.bf16.msra.mxu0 %v1870
  %1894 = vmatmul.bf16.gmra.mxu0 %v1836
  %v1895 = vpop.f32.mrf.mxu0
  %v1896 = vadd.f32 0.0, %v1895
  %v1897 = vpop.f32.mrf.mxu0
  %1898 = vdwg.mxu0
  %v1899 = vadd.f32 %v1804, %v1896
  %s1900 = scalar_lea.vmem %s5, 320
  %v1901 = vld [vmem:[%s1900] sm:$0xf]
  %v1902 = vld [vmem:[%s1900 + $0x4] sm:$0xf]
  %v1903 = vld [vmem:[%s1900 + $0x8] sm:$0xf]
  %v1904 = vld [vmem:[%s1900 + $0xc] sm:$0xf]
  %v1905 = vld [vmem:[%s1900 + $0x10] sm:$0xf]
  %v1906 = vld [vmem:[%s1900 + $0x14] sm:$0xf]
  %v1907 = vld [vmem:[%s1900 + $0x18] sm:$0xf]
  %v1908 = vld [vmem:[%s1900 + $0x1c] sm:$0xf]
  %v1909 = vld [vmem:[%s1900 + $0x20] sm:$0xf]
  %v1910 = vld [vmem:[%s1900 + $0x24] sm:$0xf]
  %v1911 = vld [vmem:[%s1900 + $0x28] sm:$0xf]
  %v1912 = vld [vmem:[%s1900 + $0x2c] sm:$0xf]
  %v1913 = vld [vmem:[%s1900 + $0x30] sm:$0xf]
  %v1914 = vld [vmem:[%s1900 + $0x34] sm:$0xf]
  %v1915 = vld [vmem:[%s1900 + $0x38] sm:$0xf]
  %v1916 = vld [vmem:[%s1900 + $0x3c] sm:$0xf]
  %v1917 = vrot.slane %v1446, 5
  %v1918 = vrot.slane %v1447, 4
  %v1919 = vsel %vm1455, %v1918, %v1917
  %v1920 = vrot.slane %v1448, 3
  %v1921 = vsel %vm1458, %v1920, %v1919
  %v1922 = vrot.slane %v1449, 2
  %v1923 = vsel %vm1461, %v1922, %v1921
  %v1924 = vrot.slane %v1450, 1
  %v1925 = vsel %vm1464, %v1924, %v1923
  %v1926 = vsel %vm1467, %v1451, %v1925
  %v1927 = vrot.slane %v1452, 7
  %v1928 = vsel %vm1470, %v1927, %v1926
  %v1929 = vrot.slane %v1453, 6
  %v1930 = vsel %vm1473, %v1929, %v1928
  %v1931 = vpack.c.b16 %v1930, %v1930
  %v1949 = vunpack.c.l.b16 %v1901
  %v1950 = vunpack.c.l.b16 %v1902
  %v1951 = vunpack.c.l.b16 %v1903
  %v1952 = vunpack.c.l.b16 %v1904
  %v1953 = vunpack.c.l.b16 %v1905
  %v1954 = vunpack.c.l.b16 %v1906
  %v1955 = vunpack.c.l.b16 %v1907
  %v1956 = vunpack.c.l.b16 %v1908
  %v1957 = vunpack.c.l.b16 %v1909
  %v1958 = vunpack.c.l.b16 %v1910
  %v1959 = vunpack.c.l.b16 %v1911
  %v1960 = vunpack.c.l.b16 %v1912
  %v1961 = vunpack.c.l.b16 %v1913
  %v1962 = vunpack.c.l.b16 %v1914
  %v1963 = vunpack.c.l.b16 %v1915
  %v1964 = vunpack.c.l.b16 %v1916
  %v1965 = vpack.c.b16 %v1950, %v1949
  %v1966 = vpack.c.b16 %v1952, %v1951
  %v1967 = vpack.c.b16 %v1954, %v1953
  %v1968 = vpack.c.b16 %v1956, %v1955
  %v1969 = vpack.c.b16 %v1958, %v1957
  %v1970 = vpack.c.b16 %v1960, %v1959
  %v1971 = vpack.c.b16 %v1962, %v1961
  %v1972 = vpack.c.b16 %v1964, %v1963
  %1981 = vmatpush.bf16.msra.mxu0 %v1972
  %1982 = vmatpush.bf16.msra.mxu0 %v1971
  %1983 = vmatpush.bf16.msra.mxu0 %v1970
  %1984 = vmatpush.bf16.msra.mxu0 %v1969
  %1985 = vmatpush.bf16.msra.mxu0 %v1968
  %1986 = vmatpush.bf16.msra.mxu0 %v1967
  %1987 = vmatpush.bf16.msra.mxu0 %v1966
  %1988 = vmatpush.bf16.msra.mxu0 %v1965
  %1989 = vmatmul.bf16.gmra.mxu0 %v1931
  %v1990 = vpop.f32.mrf.mxu0
  %v1991 = vadd.f32 0.0, %v1990
  %v1992 = vpop.f32.mrf.mxu0
  %1993 = vdwg.mxu0
  %v1994 = vadd.f32 %v1899, %v1991
  %s1995 = scalar_lea.vmem %s5, 384
  %v1996 = vld [vmem:[%s1995] sm:$0xf]
  %v1997 = vld [vmem:[%s1995 + $0x4] sm:$0xf]
  %v1998 = vld [vmem:[%s1995 + $0x8] sm:$0xf]
  %v1999 = vld [vmem:[%s1995 + $0xc] sm:$0xf]
  %v2000 = vld [vmem:[%s1995 + $0x10] sm:$0xf]
  %v2001 = vld [vmem:[%s1995 + $0x14] sm:$0xf]
  %v2002 = vld [vmem:[%s1995 + $0x18] sm:$0xf]
  %v2003 = vld [vmem:[%s1995 + $0x1c] sm:$0xf]
  %v2004 = vld [vmem:[%s1995 + $0x20] sm:$0xf]
  %v2005 = vld [vmem:[%s1995 + $0x24] sm:$0xf]
  %v2006 = vld [vmem:[%s1995 + $0x28] sm:$0xf]
  %v2007 = vld [vmem:[%s1995 + $0x2c] sm:$0xf]
  %v2008 = vld [vmem:[%s1995 + $0x30] sm:$0xf]
  %v2009 = vld [vmem:[%s1995 + $0x34] sm:$0xf]
  %v2010 = vld [vmem:[%s1995 + $0x38] sm:$0xf]
  %v2011 = vld [vmem:[%s1995 + $0x3c] sm:$0xf]
  %v2012 = vrot.slane %v1446, 6
  %v2013 = vrot.slane %v1447, 5
  %v2014 = vsel %vm1455, %v2013, %v2012
  %v2015 = vrot.slane %v1448, 4
  %v2016 = vsel %vm1458, %v2015, %v2014
  %v2017 = vrot.slane %v1449, 3
  %v2018 = vsel %vm1461, %v2017, %v2016
  %v2019 = vrot.slane %v1450, 2
  %v2020 = vsel %vm1464, %v2019, %v2018
  %v2021 = vrot.slane %v1451, 1
  %v2022 = vsel %vm1467, %v2021, %v2020
  %v2023 = vsel %vm1470, %v1452, %v2022
  %v2024 = vrot.slane %v1453, 7
  %v2025 = vsel %vm1473, %v2024, %v2023
  %v2026 = vpack.c.b16 %v2025, %v2025
  %v2044 = vunpack.c.l.b16 %v1996
  %v2045 = vunpack.c.l.b16 %v1997
  %v2046 = vunpack.c.l.b16 %v1998
  %v2047 = vunpack.c.l.b16 %v1999
  %v2048 = vunpack.c.l.b16 %v2000
  %v2049 = vunpack.c.l.b16 %v2001
  %v2050 = vunpack.c.l.b16 %v2002
  %v2051 = vunpack.c.l.b16 %v2003
  %v2052 = vunpack.c.l.b16 %v2004
  %v2053 = vunpack.c.l.b16 %v2005
  %v2054 = vunpack.c.l.b16 %v2006
  %v2055 = vunpack.c.l.b16 %v2007
  %v2056 = vunpack.c.l.b16 %v2008
  %v2057 = vunpack.c.l.b16 %v2009
  %v2058 = vunpack.c.l.b16 %v2010
  %v2059 = vunpack.c.l.b16 %v2011
  %v2060 = vpack.c.b16 %v2045, %v2044
  %v2061 = vpack.c.b16 %v2047, %v2046
  %v2062 = vpack.c.b16 %v2049, %v2048
  %v2063 = vpack.c.b16 %v2051, %v2050
  %v2064 = vpack.c.b16 %v2053, %v2052
  %v2065 = vpack.c.b16 %v2055, %v2054
  %v2066 = vpack.c.b16 %v2057, %v2056
  %v2067 = vpack.c.b16 %v2059, %v2058
  %2076 = vmatpush.bf16.msra.mxu0 %v2067
  %2077 = vmatpush.bf16.msra.mxu0 %v2066
  %2078 = vmatpush.bf16.msra.mxu0 %v2065
  %2079 = vmatpush.bf16.msra.mxu0 %v2064
  %2080 = vmatpush.bf16.msra.mxu0 %v2063
  %2081 = vmatpush.bf16.msra.mxu0 %v2062
  %2082 = vmatpush.bf16.msra.mxu0 %v2061
  %2083 = vmatpush.bf16.msra.mxu0 %v2060
  %2084 = vmatmul.bf16.gmra.mxu0 %v2026
  %v2085 = vpop.f32.mrf.mxu0
  %v2086 = vadd.f32 0.0, %v2085
  %v2087 = vpop.f32.mrf.mxu0
  %2088 = vdwg.mxu0
  %v2089 = vadd.f32 %v1994, %v2086
  %s2090 = scalar_lea.vmem %s5, 448
  %v2091 = vld [vmem:[%s2090] sm:$0xf]
  %v2092 = vld [vmem:[%s2090 + $0x4] sm:$0xf]
  %v2093 = vld [vmem:[%s2090 + $0x8] sm:$0xf]
  %v2094 = vld [vmem:[%s2090 + $0xc] sm:$0xf]
  %v2095 = vld [vmem:[%s2090 + $0x10] sm:$0xf]
  %v2096 = vld [vmem:[%s2090 + $0x14] sm:$0xf]
  %v2097 = vld [vmem:[%s2090 + $0x18] sm:$0xf]
  %v2098 = vld [vmem:[%s2090 + $0x1c] sm:$0xf]
  %v2099 = vld [vmem:[%s2090 + $0x20] sm:$0xf]
  %v2100 = vld [vmem:[%s2090 + $0x24] sm:$0xf]
  %v2101 = vld [vmem:[%s2090 + $0x28] sm:$0xf]
  %v2102 = vld [vmem:[%s2090 + $0x2c] sm:$0xf]
  %v2103 = vld [vmem:[%s2090 + $0x30] sm:$0xf]
  %v2104 = vld [vmem:[%s2090 + $0x34] sm:$0xf]
  %v2105 = vld [vmem:[%s2090 + $0x38] sm:$0xf]
  %v2106 = vld [vmem:[%s2090 + $0x3c] sm:$0xf]
  %v2107 = vrot.slane %v1446, 7
  %v2108 = vrot.slane %v1447, 6
  %v2109 = vsel %vm1455, %v2108, %v2107
  %v2110 = vrot.slane %v1448, 5
  %v2111 = vsel %vm1458, %v2110, %v2109
  %v2112 = vrot.slane %v1449, 4
  %v2113 = vsel %vm1461, %v2112, %v2111
  %v2114 = vrot.slane %v1450, 3
  %v2115 = vsel %vm1464, %v2114, %v2113
  %v2116 = vrot.slane %v1451, 2
  %v2117 = vsel %vm1467, %v2116, %v2115
  %v2118 = vrot.slane %v1452, 1
  %v2119 = vsel %vm1470, %v2118, %v2117
  %v2120 = vsel %vm1473, %v1453, %v2119
  %v2121 = vpack.c.b16 %v2120, %v2120
  %v2139 = vunpack.c.l.b16 %v2091
  %v2140 = vunpack.c.l.b16 %v2092
  %v2141 = vunpack.c.l.b16 %v2093
  %v2142 = vunpack.c.l.b16 %v2094
  %v2143 = vunpack.c.l.b16 %v2095
  %v2144 = vunpack.c.l.b16 %v2096
  %v2145 = vunpack.c.l.b16 %v2097
  %v2146 = vunpack.c.l.b16 %v2098
  %v2147 = vunpack.c.l.b16 %v2099
  %v2148 = vunpack.c.l.b16 %v2100
  %v2149 = vunpack.c.l.b16 %v2101
  %v2150 = vunpack.c.l.b16 %v2102
  %v2151 = vunpack.c.l.b16 %v2103
  %v2152 = vunpack.c.l.b16 %v2104
  %v2153 = vunpack.c.l.b16 %v2105
  %v2154 = vunpack.c.l.b16 %v2106
  %v2155 = vpack.c.b16 %v2140, %v2139
  %v2156 = vpack.c.b16 %v2142, %v2141
  %v2157 = vpack.c.b16 %v2144, %v2143
  %v2158 = vpack.c.b16 %v2146, %v2145
  %v2159 = vpack.c.b16 %v2148, %v2147
  %v2160 = vpack.c.b16 %v2150, %v2149
  %v2161 = vpack.c.b16 %v2152, %v2151
  %v2162 = vpack.c.b16 %v2154, %v2153
  %2171 = vmatpush.bf16.msra.mxu0 %v2162
  %2172 = vmatpush.bf16.msra.mxu0 %v2161
  %2173 = vmatpush.bf16.msra.mxu0 %v2160
  %2174 = vmatpush.bf16.msra.mxu0 %v2159
  %2175 = vmatpush.bf16.msra.mxu0 %v2158
  %2176 = vmatpush.bf16.msra.mxu0 %v2157
  %2177 = vmatpush.bf16.msra.mxu0 %v2156
  %2178 = vmatpush.bf16.msra.mxu0 %v2155
  %2179 = vmatmul.bf16.gmra.mxu0 %v2121
  %v2180 = vpop.f32.mrf.mxu0
  %v2181 = vadd.f32 0.0, %v2180
  %v2182 = vpop.f32.mrf.mxu0
  %2183 = vdwg.mxu0
  %v2184 = vadd.f32 %v2089, %v2181
  %s2185 = scalar_lea.vmem %s5, 512
  %v2186 = vld [vmem:[%s2185] sm:$0xf]
  %v2187 = vld [vmem:[%s2185 + $0x4] sm:$0xf]
  %v2188 = vld [vmem:[%s2185 + $0x8] sm:$0xf]
  %v2189 = vld [vmem:[%s2185 + $0xc] sm:$0xf]
  %v2190 = vld [vmem:[%s2185 + $0x10] sm:$0xf]
  %v2191 = vld [vmem:[%s2185 + $0x14] sm:$0xf]
  %v2192 = vld [vmem:[%s2185 + $0x18] sm:$0xf]
  %v2193 = vld [vmem:[%s2185 + $0x1c] sm:$0xf]
  %v2194 = vld [vmem:[%s2185 + $0x20] sm:$0xf]
  %v2195 = vld [vmem:[%s2185 + $0x24] sm:$0xf]
  %v2196 = vld [vmem:[%s2185 + $0x28] sm:$0xf]
  %v2197 = vld [vmem:[%s2185 + $0x2c] sm:$0xf]
  %v2198 = vld [vmem:[%s2185 + $0x30] sm:$0xf]
  %v2199 = vld [vmem:[%s2185 + $0x34] sm:$0xf]
  %v2200 = vld [vmem:[%s2185 + $0x38] sm:$0xf]
  %v2201 = vld [vmem:[%s2185 + $0x3c] sm:$0xf]
  %v2210 = vunpack.c.l.b16 %v1358
  %v2211 = vunpack.c.l.b16 %v1362
  %v2212 = vunpack.c.l.b16 %v1366
  %v2213 = vunpack.c.l.b16 %v1370
  %v2214 = vunpack.c.l.b16 %v1374
  %v2215 = vunpack.c.l.b16 %v1378
  %v2216 = vunpack.c.l.b16 %v1382
  %v2217 = vunpack.c.l.b16 %v1386
  %v2218 = vpack.c.b16 %v2210, %v2210
  %v2219 = vpack.c.b16 %v2211, %v2211
  %v2220 = vpack.c.b16 %v2212, %v2212
  %v2221 = vpack.c.b16 %v2213, %v2213
  %v2222 = vpack.c.b16 %v2214, %v2214
  %v2223 = vpack.c.b16 %v2215, %v2215
  %v2224 = vpack.c.b16 %v2216, %v2216
  %v2225 = vpack.c.b16 %v2217, %v2217
  %v2226 = vunpack.c.l.b16 %v2218
  %v2227 = vunpack.c.l.b16 %v2219
  %v2228 = vunpack.c.l.b16 %v2220
  %v2229 = vunpack.c.l.b16 %v2221
  %v2230 = vunpack.c.l.b16 %v2222
  %v2231 = vunpack.c.l.b16 %v2223
  %v2232 = vunpack.c.l.b16 %v2224
  %v2233 = vunpack.c.l.b16 %v2225
  %v2234 = vrot.slane %v2227, 7
  %v2235 = vsel %vm1455, %v2234, %v2226
  %v2236 = vrot.slane %v2228, 6
  %v2237 = vsel %vm1458, %v2236, %v2235
  %v2238 = vrot.slane %v2229, 5
  %v2239 = vsel %vm1461, %v2238, %v2237
  %v2240 = vrot.slane %v2230, 4
  %v2241 = vsel %vm1464, %v2240, %v2239
  %v2242 = vrot.slane %v2231, 3
  %v2243 = vsel %vm1467, %v2242, %v2241
  %v2244 = vrot.slane %v2232, 2
  %v2245 = vsel %vm1470, %v2244, %v2243
  %v2246 = vrot.slane %v2233, 1
  %v2247 = vsel %vm1473, %v2246, %v2245
  %v2248 = vpack.c.b16 %v2247, %v2247
  %v2266 = vunpack.c.l.b16 %v2186
  %v2267 = vunpack.c.l.b16 %v2187
  %v2268 = vunpack.c.l.b16 %v2188
  %v2269 = vunpack.c.l.b16 %v2189
  %v2270 = vunpack.c.l.b16 %v2190
  %v2271 = vunpack.c.l.b16 %v2191
  %v2272 = vunpack.c.l.b16 %v2192
  %v2273 = vunpack.c.l.b16 %v2193
  %v2274 = vunpack.c.l.b16 %v2194
  %v2275 = vunpack.c.l.b16 %v2195
  %v2276 = vunpack.c.l.b16 %v2196
  %v2277 = vunpack.c.l.b16 %v2197
  %v2278 = vunpack.c.l.b16 %v2198
  %v2279 = vunpack.c.l.b16 %v2199
  %v2280 = vunpack.c.l.b16 %v2200
  %v2281 = vunpack.c.l.b16 %v2201
  %v2282 = vpack.c.b16 %v2267, %v2266
  %v2283 = vpack.c.b16 %v2269, %v2268
  %v2284 = vpack.c.b16 %v2271, %v2270
  %v2285 = vpack.c.b16 %v2273, %v2272
  %v2286 = vpack.c.b16 %v2275, %v2274
  %v2287 = vpack.c.b16 %v2277, %v2276
  %v2288 = vpack.c.b16 %v2279, %v2278
  %v2289 = vpack.c.b16 %v2281, %v2280
  %2298 = vmatpush.bf16.msra.mxu0 %v2289
  %2299 = vmatpush.bf16.msra.mxu0 %v2288
  %2300 = vmatpush.bf16.msra.mxu0 %v2287
  %2301 = vmatpush.bf16.msra.mxu0 %v2286
  %2302 = vmatpush.bf16.msra.mxu0 %v2285
  %2303 = vmatpush.bf16.msra.mxu0 %v2284
  %2304 = vmatpush.bf16.msra.mxu0 %v2283
  %2305 = vmatpush.bf16.msra.mxu0 %v2282
  %2306 = vmatmul.bf16.gmra.mxu0 %v2248
  %v2307 = vpop.f32.mrf.mxu0
  %v2308 = vadd.f32 0.0, %v2307
  %v2309 = vpop.f32.mrf.mxu0
  %2310 = vdwg.mxu0
  %v2311 = vadd.f32 %v2184, %v2308
  %s2312 = scalar_lea.vmem %s5, 576
  %v2313 = vld [vmem:[%s2312] sm:$0xf]
  %v2314 = vld [vmem:[%s2312 + $0x4] sm:$0xf]
  %v2315 = vld [vmem:[%s2312 + $0x8] sm:$0xf]
  %v2316 = vld [vmem:[%s2312 + $0xc] sm:$0xf]
  %v2317 = vld [vmem:[%s2312 + $0x10] sm:$0xf]
  %v2318 = vld [vmem:[%s2312 + $0x14] sm:$0xf]
  %v2319 = vld [vmem:[%s2312 + $0x18] sm:$0xf]
  %v2320 = vld [vmem:[%s2312 + $0x1c] sm:$0xf]
  %v2321 = vld [vmem:[%s2312 + $0x20] sm:$0xf]
  %v2322 = vld [vmem:[%s2312 + $0x24] sm:$0xf]
  %v2323 = vld [vmem:[%s2312 + $0x28] sm:$0xf]
  %v2324 = vld [vmem:[%s2312 + $0x2c] sm:$0xf]
  %v2325 = vld [vmem:[%s2312 + $0x30] sm:$0xf]
  %v2326 = vld [vmem:[%s2312 + $0x34] sm:$0xf]
  %v2327 = vld [vmem:[%s2312 + $0x38] sm:$0xf]
  %v2328 = vld [vmem:[%s2312 + $0x3c] sm:$0xf]
  %v2329 = vrot.slane %v2226, 1
  %v2330 = vsel %vm1455, %v2227, %v2329
  %v2331 = vrot.slane %v2228, 7
  %v2332 = vsel %vm1458, %v2331, %v2330
  %v2333 = vrot.slane %v2229, 6
  %v2334 = vsel %vm1461, %v2333, %v2332
  %v2335 = vrot.slane %v2230, 5
  %v2336 = vsel %vm1464, %v2335, %v2334
  %v2337 = vrot.slane %v2231, 4
  %v2338 = vsel %vm1467, %v2337, %v2336
  %v2339 = vrot.slane %v2232, 3
  %v2340 = vsel %vm1470, %v2339, %v2338
  %v2341 = vrot.slane %v2233, 2
  %v2342 = vsel %vm1473, %v2341, %v2340
  %v2343 = vpack.c.b16 %v2342, %v2342
  %v2361 = vunpack.c.l.b16 %v2313
  %v2362 = vunpack.c.l.b16 %v2314
  %v2363 = vunpack.c.l.b16 %v2315
  %v2364 = vunpack.c.l.b16 %v2316
  %v2365 = vunpack.c.l.b16 %v2317
  %v2366 = vunpack.c.l.b16 %v2318
  %v2367 = vunpack.c.l.b16 %v2319
  %v2368 = vunpack.c.l.b16 %v2320
  %v2369 = vunpack.c.l.b16 %v2321
  %v2370 = vunpack.c.l.b16 %v2322
  %v2371 = vunpack.c.l.b16 %v2323
  %v2372 = vunpack.c.l.b16 %v2324
  %v2373 = vunpack.c.l.b16 %v2325
  %v2374 = vunpack.c.l.b16 %v2326
  %v2375 = vunpack.c.l.b16 %v2327
  %v2376 = vunpack.c.l.b16 %v2328
  %v2377 = vpack.c.b16 %v2362, %v2361
  %v2378 = vpack.c.b16 %v2364, %v2363
  %v2379 = vpack.c.b16 %v2366, %v2365
  %v2380 = vpack.c.b16 %v2368, %v2367
  %v2381 = vpack.c.b16 %v2370, %v2369
  %v2382 = vpack.c.b16 %v2372, %v2371
  %v2383 = vpack.c.b16 %v2374, %v2373
  %v2384 = vpack.c.b16 %v2376, %v2375
  %2393 = vmatpush.bf16.msra.mxu0 %v2384
  %2394 = vmatpush.bf16.msra.mxu0 %v2383
  %2395 = vmatpush.bf16.msra.mxu0 %v2382
  %2396 = vmatpush.bf16.msra.mxu0 %v2381
  %2397 = vmatpush.bf16.msra.mxu0 %v2380
  %2398 = vmatpush.bf16.msra.mxu0 %v2379
  %2399 = vmatpush.bf16.msra.mxu0 %v2378
  %2400 = vmatpush.bf16.msra.mxu0 %v2377
  %2401 = vmatmul.bf16.gmra.mxu0 %v2343
  %v2402 = vpop.f32.mrf.mxu0
  %v2403 = vadd.f32 0.0, %v2402
  %v2404 = vpop.f32.mrf.mxu0
  %2405 = vdwg.mxu0
  %v2406 = vadd.f32 %v2311, %v2403
  %s2407 = scalar_lea.vmem %s5, 640
  %v2408 = vld [vmem:[%s2407] sm:$0xf]
  %v2409 = vld [vmem:[%s2407 + $0x4] sm:$0xf]
  %v2410 = vld [vmem:[%s2407 + $0x8] sm:$0xf]
  %v2411 = vld [vmem:[%s2407 + $0xc] sm:$0xf]
  %v2412 = vld [vmem:[%s2407 + $0x10] sm:$0xf]
  %v2413 = vld [vmem:[%s2407 + $0x14] sm:$0xf]
  %v2414 = vld [vmem:[%s2407 + $0x18] sm:$0xf]
  %v2415 = vld [vmem:[%s2407 + $0x1c] sm:$0xf]
  %v2416 = vld [vmem:[%s2407 + $0x20] sm:$0xf]
  %v2417 = vld [vmem:[%s2407 + $0x24] sm:$0xf]
  %v2418 = vld [vmem:[%s2407 + $0x28] sm:$0xf]
  %v2419 = vld [vmem:[%s2407 + $0x2c] sm:$0xf]
  %v2420 = vld [vmem:[%s2407 + $0x30] sm:$0xf]
  %v2421 = vld [vmem:[%s2407 + $0x34] sm:$0xf]
  %v2422 = vld [vmem:[%s2407 + $0x38] sm:$0xf]
  %v2423 = vld [vmem:[%s2407 + $0x3c] sm:$0xf]
  %v2424 = vrot.slane %v2226, 2
  %v2425 = vrot.slane %v2227, 1
  %v2426 = vsel %vm1455, %v2425, %v2424
  %v2427 = vsel %vm1458, %v2228, %v2426
  %v2428 = vrot.slane %v2229, 7
  %v2429 = vsel %vm1461, %v2428, %v2427
  %v2430 = vrot.slane %v2230, 6
  %v2431 = vsel %vm1464, %v2430, %v2429
  %v2432 = vrot.slane %v2231, 5
  %v2433 = vsel %vm1467, %v2432, %v2431
  %v2434 = vrot.slane %v2232, 4
  %v2435 = vsel %vm1470, %v2434, %v2433
  %v2436 = vrot.slane %v2233, 3
  %v2437 = vsel %vm1473, %v2436, %v2435
  %v2438 = vpack.c.b16 %v2437, %v2437
  %v2456 = vunpack.c.l.b16 %v2408
  %v2457 = vunpack.c.l.b16 %v2409
  %v2458 = vunpack.c.l.b16 %v2410
  %v2459 = vunpack.c.l.b16 %v2411
  %v2460 = vunpack.c.l.b16 %v2412
  %v2461 = vunpack.c.l.b16 %v2413
  %v2462 = vunpack.c.l.b16 %v2414
  %v2463 = vunpack.c.l.b16 %v2415
  %v2464 = vunpack.c.l.b16 %v2416
  %v2465 = vunpack.c.l.b16 %v2417
  %v2466 = vunpack.c.l.b16 %v2418
  %v2467 = vunpack.c.l.b16 %v2419
  %v2468 = vunpack.c.l.b16 %v2420
  %v2469 = vunpack.c.l.b16 %v2421
  %v2470 = vunpack.c.l.b16 %v2422
  %v2471 = vunpack.c.l.b16 %v2423
  %v2472 = vpack.c.b16 %v2457, %v2456
  %v2473 = vpack.c.b16 %v2459, %v2458
  %v2474 = vpack.c.b16 %v2461, %v2460
  %v2475 = vpack.c.b16 %v2463, %v2462
  %v2476 = vpack.c.b16 %v2465, %v2464
  %v2477 = vpack.c.b16 %v2467, %v2466
  %v2478 = vpack.c.b16 %v2469, %v2468
  %v2479 = vpack.c.b16 %v2471, %v2470
  %2488 = vmatpush.bf16.msra.mxu0 %v2479
  %2489 = vmatpush.bf16.msra.mxu0 %v2478
  %2490 = vmatpush.bf16.msra.mxu0 %v2477
  %2491 = vmatpush.bf16.msra.mxu0 %v2476
  %2492 = vmatpush.bf16.msra.mxu0 %v2475
  %2493 = vmatpush.bf16.msra.mxu0 %v2474
  %2494 = vmatpush.bf16.msra.mxu0 %v2473
  %2495 = vmatpush.bf16.msra.mxu0 %v2472
  %2496 = vmatmul.bf16.gmra.mxu0 %v2438
  %v2497 = vpop.f32.mrf.mxu0
  %v2498 = vadd.f32 0.0, %v2497
  %v2499 = vpop.f32.mrf.mxu0
  %2500 = vdwg.mxu0
  %v2501 = vadd.f32 %v2406, %v2498
  %s2502 = scalar_lea.vmem %s5, 704
  %v2503 = vld [vmem:[%s2502] sm:$0xf]
  %v2504 = vld [vmem:[%s2502 + $0x4] sm:$0xf]
  %v2505 = vld [vmem:[%s2502 + $0x8] sm:$0xf]
  %v2506 = vld [vmem:[%s2502 + $0xc] sm:$0xf]
  %v2507 = vld [vmem:[%s2502 + $0x10] sm:$0xf]
  %v2508 = vld [vmem:[%s2502 + $0x14] sm:$0xf]
  %v2509 = vld [vmem:[%s2502 + $0x18] sm:$0xf]
  %v2510 = vld [vmem:[%s2502 + $0x1c] sm:$0xf]
  %v2511 = vld [vmem:[%s2502 + $0x20] sm:$0xf]
  %v2512 = vld [vmem:[%s2502 + $0x24] sm:$0xf]
  %v2513 = vld [vmem:[%s2502 + $0x28] sm:$0xf]
  %v2514 = vld [vmem:[%s2502 + $0x2c] sm:$0xf]
  %v2515 = vld [vmem:[%s2502 + $0x30] sm:$0xf]
  %v2516 = vld [vmem:[%s2502 + $0x34] sm:$0xf]
  %v2517 = vld [vmem:[%s2502 + $0x38] sm:$0xf]
  %v2518 = vld [vmem:[%s2502 + $0x3c] sm:$0xf]
  %v2519 = vrot.slane %v2226, 3
  %v2520 = vrot.slane %v2227, 2
  %v2521 = vsel %vm1455, %v2520, %v2519
  %v2522 = vrot.slane %v2228, 1
  %v2523 = vsel %vm1458, %v2522, %v2521
  %v2524 = vsel %vm1461, %v2229, %v2523
  %v2525 = vrot.slane %v2230, 7
  %v2526 = vsel %vm1464, %v2525, %v2524
  %v2527 = vrot.slane %v2231, 6
  %v2528 = vsel %vm1467, %v2527, %v2526
  %v2529 = vrot.slane %v2232, 5
  %v2530 = vsel %vm1470, %v2529, %v2528
  %v2531 = vrot.slane %v2233, 4
  %v2532 = vsel %vm1473, %v2531, %v2530
  %v2533 = vpack.c.b16 %v2532, %v2532
  %v2551 = vunpack.c.l.b16 %v2503
  %v2552 = vunpack.c.l.b16 %v2504
  %v2553 = vunpack.c.l.b16 %v2505
  %v2554 = vunpack.c.l.b16 %v2506
  %v2555 = vunpack.c.l.b16 %v2507
  %v2556 = vunpack.c.l.b16 %v2508
  %v2557 = vunpack.c.l.b16 %v2509
  %v2558 = vunpack.c.l.b16 %v2510
  %v2559 = vunpack.c.l.b16 %v2511
  %v2560 = vunpack.c.l.b16 %v2512
  %v2561 = vunpack.c.l.b16 %v2513
  %v2562 = vunpack.c.l.b16 %v2514
  %v2563 = vunpack.c.l.b16 %v2515
  %v2564 = vunpack.c.l.b16 %v2516
  %v2565 = vunpack.c.l.b16 %v2517
  %v2566 = vunpack.c.l.b16 %v2518
  %v2567 = vpack.c.b16 %v2552, %v2551
  %v2568 = vpack.c.b16 %v2554, %v2553
  %v2569 = vpack.c.b16 %v2556, %v2555
  %v2570 = vpack.c.b16 %v2558, %v2557
  %v2571 = vpack.c.b16 %v2560, %v2559
  %v2572 = vpack.c.b16 %v2562, %v2561
  %v2573 = vpack.c.b16 %v2564, %v2563
  %v2574 = vpack.c.b16 %v2566, %v2565
  %2583 = vmatpush.bf16.msra.mxu0 %v2574
  %2584 = vmatpush.bf16.msra.mxu0 %v2573
  %2585 = vmatpush.bf16.msra.mxu0 %v2572
  %2586 = vmatpush.bf16.msra.mxu0 %v2571
  %2587 = vmatpush.bf16.msra.mxu0 %v2570
  %2588 = vmatpush.bf16.msra.mxu0 %v2569
  %2589 = vmatpush.bf16.msra.mxu0 %v2568
  %2590 = vmatpush.bf16.msra.mxu0 %v2567
  %2591 = vmatmul.bf16.gmra.mxu0 %v2533
  %v2592 = vpop.f32.mrf.mxu0
  %v2593 = vadd.f32 0.0, %v2592
  %v2594 = vpop.f32.mrf.mxu0
  %2595 = vdwg.mxu0
  %v2596 = vadd.f32 %v2501, %v2593
  %s2597 = scalar_lea.vmem %s5, 768
  %v2598 = vld [vmem:[%s2597] sm:$0xf]
  %v2599 = vld [vmem:[%s2597 + $0x4] sm:$0xf]
  %v2600 = vld [vmem:[%s2597 + $0x8] sm:$0xf]
  %v2601 = vld [vmem:[%s2597 + $0xc] sm:$0xf]
  %v2602 = vld [vmem:[%s2597 + $0x10] sm:$0xf]
  %v2603 = vld [vmem:[%s2597 + $0x14] sm:$0xf]
  %v2604 = vld [vmem:[%s2597 + $0x18] sm:$0xf]
  %v2605 = vld [vmem:[%s2597 + $0x1c] sm:$0xf]
  %v2606 = vld [vmem:[%s2597 + $0x20] sm:$0xf]
  %v2607 = vld [vmem:[%s2597 + $0x24] sm:$0xf]
  %v2608 = vld [vmem:[%s2597 + $0x28] sm:$0xf]
  %v2609 = vld [vmem:[%s2597 + $0x2c] sm:$0xf]
  %v2610 = vld [vmem:[%s2597 + $0x30] sm:$0xf]
  %v2611 = vld [vmem:[%s2597 + $0x34] sm:$0xf]
  %v2612 = vld [vmem:[%s2597 + $0x38] sm:$0xf]
  %v2613 = vld [vmem:[%s2597 + $0x3c] sm:$0xf]
  %v2614 = vrot.slane %v2226, 4
  %v2615 = vrot.slane %v2227, 3
  %v2616 = vsel %vm1455, %v2615, %v2614
  %v2617 = vrot.slane %v2228, 2
  %v2618 = vsel %vm1458, %v2617, %v2616
  %v2619 = vrot.slane %v2229, 1
  %v2620 = vsel %vm1461, %v2619, %v2618
  %v2621 = vsel %vm1464, %v2230, %v2620
  %v2622 = vrot.slane %v2231, 7
  %v2623 = vsel %vm1467, %v2622, %v2621
  %v2624 = vrot.slane %v2232, 6
  %v2625 = vsel %vm1470, %v2624, %v2623
  %v2626 = vrot.slane %v2233, 5
  %v2627 = vsel %vm1473, %v2626, %v2625
  %v2628 = vpack.c.b16 %v2627, %v2627
  %v2646 = vunpack.c.l.b16 %v2598
  %v2647 = vunpack.c.l.b16 %v2599
  %v2648 = vunpack.c.l.b16 %v2600
  %v2649 = vunpack.c.l.b16 %v2601
  %v2650 = vunpack.c.l.b16 %v2602
  %v2651 = vunpack.c.l.b16 %v2603
  %v2652 = vunpack.c.l.b16 %v2604
  %v2653 = vunpack.c.l.b16 %v2605
  %v2654 = vunpack.c.l.b16 %v2606
  %v2655 = vunpack.c.l.b16 %v2607
  %v2656 = vunpack.c.l.b16 %v2608
  %v2657 = vunpack.c.l.b16 %v2609
  %v2658 = vunpack.c.l.b16 %v2610
  %v2659 = vunpack.c.l.b16 %v2611
  %v2660 = vunpack.c.l.b16 %v2612
  %v2661 = vunpack.c.l.b16 %v2613
  %v2662 = vpack.c.b16 %v2647, %v2646
  %v2663 = vpack.c.b16 %v2649, %v2648
  %v2664 = vpack.c.b16 %v2651, %v2650
  %v2665 = vpack.c.b16 %v2653, %v2652
  %v2666 = vpack.c.b16 %v2655, %v2654
  %v2667 = vpack.c.b16 %v2657, %v2656
  %v2668 = vpack.c.b16 %v2659, %v2658
  %v2669 = vpack.c.b16 %v2661, %v2660
  %2678 = vmatpush.bf16.msra.mxu0 %v2669
  %2679 = vmatpush.bf16.msra.mxu0 %v2668
  %2680 = vmatpush.bf16.msra.mxu0 %v2667
  %2681 = vmatpush.bf16.msra.mxu0 %v2666
  %2682 = vmatpush.bf16.msra.mxu0 %v2665
  %2683 = vmatpush.bf16.msra.mxu0 %v2664
  %2684 = vmatpush.bf16.msra.mxu0 %v2663
  %2685 = vmatpush.bf16.msra.mxu0 %v2662
  %2686 = vmatmul.bf16.gmra.mxu0 %v2628
  %v2687 = vpop.f32.mrf.mxu0
  %v2688 = vadd.f32 0.0, %v2687
  %v2689 = vpop.f32.mrf.mxu0
  %2690 = vdwg.mxu0
  %v2691 = vadd.f32 %v2596, %v2688
  %s2692 = scalar_lea.vmem %s5, 832
  %v2693 = vld [vmem:[%s2692] sm:$0xf]
  %v2694 = vld [vmem:[%s2692 + $0x4] sm:$0xf]
  %v2695 = vld [vmem:[%s2692 + $0x8] sm:$0xf]
  %v2696 = vld [vmem:[%s2692 + $0xc] sm:$0xf]
  %v2697 = vld [vmem:[%s2692 + $0x10] sm:$0xf]
  %v2698 = vld [vmem:[%s2692 + $0x14] sm:$0xf]
  %v2699 = vld [vmem:[%s2692 + $0x18] sm:$0xf]
  %v2700 = vld [vmem:[%s2692 + $0x1c] sm:$0xf]
  %v2701 = vld [vmem:[%s2692 + $0x20] sm:$0xf]
  %v2702 = vld [vmem:[%s2692 + $0x24] sm:$0xf]
  %v2703 = vld [vmem:[%s2692 + $0x28] sm:$0xf]
  %v2704 = vld [vmem:[%s2692 + $0x2c] sm:$0xf]
  %v2705 = vld [vmem:[%s2692 + $0x30] sm:$0xf]
  %v2706 = vld [vmem:[%s2692 + $0x34] sm:$0xf]
  %v2707 = vld [vmem:[%s2692 + $0x38] sm:$0xf]
  %v2708 = vld [vmem:[%s2692 + $0x3c] sm:$0xf]
  %v2709 = vrot.slane %v2226, 5
  %v2710 = vrot.slane %v2227, 4
  %v2711 = vsel %vm1455, %v2710, %v2709
  %v2712 = vrot.slane %v2228, 3
  %v2713 = vsel %vm1458, %v2712, %v2711
  %v2714 = vrot.slane %v2229, 2
  %v2715 = vsel %vm1461, %v2714, %v2713
  %v2716 = vrot.slane %v2230, 1
  %v2717 = vsel %vm1464, %v2716, %v2715
  %v2718 = vsel %vm1467, %v2231, %v2717
  %v2719 = vrot.slane %v2232, 7
  %v2720 = vsel %vm1470, %v2719, %v2718
  %v2721 = vrot.slane %v2233, 6
  %v2722 = vsel %vm1473, %v2721, %v2720
  %v2723 = vpack.c.b16 %v2722, %v2722
  %v2741 = vunpack.c.l.b16 %v2693
  %v2742 = vunpack.c.l.b16 %v2694
  %v2743 = vunpack.c.l.b16 %v2695
  %v2744 = vunpack.c.l.b16 %v2696
  %v2745 = vunpack.c.l.b16 %v2697
  %v2746 = vunpack.c.l.b16 %v2698
  %v2747 = vunpack.c.l.b16 %v2699
  %v2748 = vunpack.c.l.b16 %v2700
  %v2749 = vunpack.c.l.b16 %v2701
  %v2750 = vunpack.c.l.b16 %v2702
  %v2751 = vunpack.c.l.b16 %v2703
  %v2752 = vunpack.c.l.b16 %v2704
  %v2753 = vunpack.c.l.b16 %v2705
  %v2754 = vunpack.c.l.b16 %v2706
  %v2755 = vunpack.c.l.b16 %v2707
  %v2756 = vunpack.c.l.b16 %v2708
  %v2757 = vpack.c.b16 %v2742, %v2741
  %v2758 = vpack.c.b16 %v2744, %v2743
  %v2759 = vpack.c.b16 %v2746, %v2745
  %v2760 = vpack.c.b16 %v2748, %v2747
  %v2761 = vpack.c.b16 %v2750, %v2749
  %v2762 = vpack.c.b16 %v2752, %v2751
  %v2763 = vpack.c.b16 %v2754, %v2753
  %v2764 = vpack.c.b16 %v2756, %v2755
  %2773 = vmatpush.bf16.msra.mxu0 %v2764
  %2774 = vmatpush.bf16.msra.mxu0 %v2763
  %2775 = vmatpush.bf16.msra.mxu0 %v2762
  %2776 = vmatpush.bf16.msra.mxu0 %v2761
  %2777 = vmatpush.bf16.msra.mxu0 %v2760
  %2778 = vmatpush.bf16.msra.mxu0 %v2759
  %2779 = vmatpush.bf16.msra.mxu0 %v2758
  %2780 = vmatpush.bf16.msra.mxu0 %v2757
  %2781 = vmatmul.bf16.gmra.mxu0 %v2723
  %v2782 = vpop.f32.mrf.mxu0
  %v2783 = vadd.f32 0.0, %v2782
  %v2784 = vpop.f32.mrf.mxu0
  %2785 = vdwg.mxu0
  %v2786 = vadd.f32 %v2691, %v2783
  %s2787 = scalar_lea.vmem %s5, 896
  %v2788 = vld [vmem:[%s2787] sm:$0xf]
  %v2789 = vld [vmem:[%s2787 + $0x4] sm:$0xf]
  %v2790 = vld [vmem:[%s2787 + $0x8] sm:$0xf]
  %v2791 = vld [vmem:[%s2787 + $0xc] sm:$0xf]
  %v2792 = vld [vmem:[%s2787 + $0x10] sm:$0xf]
  %v2793 = vld [vmem:[%s2787 + $0x14] sm:$0xf]
  %v2794 = vld [vmem:[%s2787 + $0x18] sm:$0xf]
  %v2795 = vld [vmem:[%s2787 + $0x1c] sm:$0xf]
  %v2796 = vld [vmem:[%s2787 + $0x20] sm:$0xf]
  %v2797 = vld [vmem:[%s2787 + $0x24] sm:$0xf]
  %v2798 = vld [vmem:[%s2787 + $0x28] sm:$0xf]
  %v2799 = vld [vmem:[%s2787 + $0x2c] sm:$0xf]
  %v2800 = vld [vmem:[%s2787 + $0x30] sm:$0xf]
  %v2801 = vld [vmem:[%s2787 + $0x34] sm:$0xf]
  %v2802 = vld [vmem:[%s2787 + $0x38] sm:$0xf]
  %v2803 = vld [vmem:[%s2787 + $0x3c] sm:$0xf]
  %v2804 = vrot.slane %v2226, 6
  %v2805 = vrot.slane %v2227, 5
  %v2806 = vsel %vm1455, %v2805, %v2804
  %v2807 = vrot.slane %v2228, 4
  %v2808 = vsel %vm1458, %v2807, %v2806
  %v2809 = vrot.slane %v2229, 3
  %v2810 = vsel %vm1461, %v2809, %v2808
  %v2811 = vrot.slane %v2230, 2
  %v2812 = vsel %vm1464, %v2811, %v2810
  %v2813 = vrot.slane %v2231, 1
  %v2814 = vsel %vm1467, %v2813, %v2812
  %v2815 = vsel %vm1470, %v2232, %v2814
  %v2816 = vrot.slane %v2233, 7
  %v2817 = vsel %vm1473, %v2816, %v2815
  %v2818 = vpack.c.b16 %v2817, %v2817
  %v2836 = vunpack.c.l.b16 %v2788
  %v2837 = vunpack.c.l.b16 %v2789
  %v2838 = vunpack.c.l.b16 %v2790
  %v2839 = vunpack.c.l.b16 %v2791
  %v2840 = vunpack.c.l.b16 %v2792
  %v2841 = vunpack.c.l.b16 %v2793
  %v2842 = vunpack.c.l.b16 %v2794
  %v2843 = vunpack.c.l.b16 %v2795
  %v2844 = vunpack.c.l.b16 %v2796
  %v2845 = vunpack.c.l.b16 %v2797
  %v2846 = vunpack.c.l.b16 %v2798
  %v2847 = vunpack.c.l.b16 %v2799
  %v2848 = vunpack.c.l.b16 %v2800
  %v2849 = vunpack.c.l.b16 %v2801
  %v2850 = vunpack.c.l.b16 %v2802
  %v2851 = vunpack.c.l.b16 %v2803
  %v2852 = vpack.c.b16 %v2837, %v2836
  %v2853 = vpack.c.b16 %v2839, %v2838
  %v2854 = vpack.c.b16 %v2841, %v2840
  %v2855 = vpack.c.b16 %v2843, %v2842
  %v2856 = vpack.c.b16 %v2845, %v2844
  %v2857 = vpack.c.b16 %v2847, %v2846
  %v2858 = vpack.c.b16 %v2849, %v2848
  %v2859 = vpack.c.b16 %v2851, %v2850
  %2868 = vmatpush.bf16.msra.mxu0 %v2859
  %2869 = vmatpush.bf16.msra.mxu0 %v2858
  %2870 = vmatpush.bf16.msra.mxu0 %v2857
  %2871 = vmatpush.bf16.msra.mxu0 %v2856
  %2872 = vmatpush.bf16.msra.mxu0 %v2855
  %2873 = vmatpush.bf16.msra.mxu0 %v2854
  %2874 = vmatpush.bf16.msra.mxu0 %v2853
  %2875 = vmatpush.bf16.msra.mxu0 %v2852
  %2876 = vmatmul.bf16.gmra.mxu0 %v2818
  %v2877 = vpop.f32.mrf.mxu0
  %v2878 = vadd.f32 0.0, %v2877
  %v2879 = vpop.f32.mrf.mxu0
  %2880 = vdwg.mxu0
  %v2881 = vadd.f32 %v2786, %v2878
  %s2882 = scalar_lea.vmem %s5, 960
  %v2883 = vld [vmem:[%s2882] sm:$0xf]
  %v2884 = vld [vmem:[%s2882 + $0x4] sm:$0xf]
  %v2885 = vld [vmem:[%s2882 + $0x8] sm:$0xf]
  %v2886 = vld [vmem:[%s2882 + $0xc] sm:$0xf]
  %v2887 = vld [vmem:[%s2882 + $0x10] sm:$0xf]
  %v2888 = vld [vmem:[%s2882 + $0x14] sm:$0xf]
  %v2889 = vld [vmem:[%s2882 + $0x18] sm:$0xf]
  %v2890 = vld [vmem:[%s2882 + $0x1c] sm:$0xf]
  %v2891 = vld [vmem:[%s2882 + $0x20] sm:$0xf]
  %v2892 = vld [vmem:[%s2882 + $0x24] sm:$0xf]
  %v2893 = vld [vmem:[%s2882 + $0x28] sm:$0xf]
  %v2894 = vld [vmem:[%s2882 + $0x2c] sm:$0xf]
  %v2895 = vld [vmem:[%s2882 + $0x30] sm:$0xf]
  %v2896 = vld [vmem:[%s2882 + $0x34] sm:$0xf]
  %v2897 = vld [vmem:[%s2882 + $0x38] sm:$0xf]
  %v2898 = vld [vmem:[%s2882 + $0x3c] sm:$0xf]
  %v2899 = vrot.slane %v2226, 7
  %v2900 = vrot.slane %v2227, 6
  %v2901 = vsel %vm1455, %v2900, %v2899
  %v2902 = vrot.slane %v2228, 5
  %v2903 = vsel %vm1458, %v2902, %v2901
  %v2904 = vrot.slane %v2229, 4
  %v2905 = vsel %vm1461, %v2904, %v2903
  %v2906 = vrot.slane %v2230, 3
  %v2907 = vsel %vm1464, %v2906, %v2905
  %v2908 = vrot.slane %v2231, 2
  %v2909 = vsel %vm1467, %v2908, %v2907
  %v2910 = vrot.slane %v2232, 1
  %v2911 = vsel %vm1470, %v2910, %v2909
  %v2912 = vsel %vm1473, %v2233, %v2911
  %v2913 = vpack.c.b16 %v2912, %v2912
  %v2931 = vunpack.c.l.b16 %v2883
  %v2932 = vunpack.c.l.b16 %v2884
  %v2933 = vunpack.c.l.b16 %v2885
  %v2934 = vunpack.c.l.b16 %v2886
  %v2935 = vunpack.c.l.b16 %v2887
  %v2936 = vunpack.c.l.b16 %v2888
  %v2937 = vunpack.c.l.b16 %v2889
  %v2938 = vunpack.c.l.b16 %v2890
  %v2939 = vunpack.c.l.b16 %v2891
  %v2940 = vunpack.c.l.b16 %v2892
  %v2941 = vunpack.c.l.b16 %v2893
  %v2942 = vunpack.c.l.b16 %v2894
  %v2943 = vunpack.c.l.b16 %v2895
  %v2944 = vunpack.c.l.b16 %v2896
  %v2945 = vunpack.c.l.b16 %v2897
  %v2946 = vunpack.c.l.b16 %v2898
  %v2947 = vpack.c.b16 %v2932, %v2931
  %v2948 = vpack.c.b16 %v2934, %v2933
  %v2949 = vpack.c.b16 %v2936, %v2935
  %v2950 = vpack.c.b16 %v2938, %v2937
  %v2951 = vpack.c.b16 %v2940, %v2939
  %v2952 = vpack.c.b16 %v2942, %v2941
  %v2953 = vpack.c.b16 %v2944, %v2943
  %v2954 = vpack.c.b16 %v2946, %v2945
  %2963 = vmatpush.bf16.msra.mxu0 %v2954
  %2964 = vmatpush.bf16.msra.mxu0 %v2953
  %2965 = vmatpush.bf16.msra.mxu0 %v2952
  %2966 = vmatpush.bf16.msra.mxu0 %v2951
  %2967 = vmatpush.bf16.msra.mxu0 %v2950
  %2968 = vmatpush.bf16.msra.mxu0 %v2949
  %2969 = vmatpush.bf16.msra.mxu0 %v2948
  %2970 = vmatpush.bf16.msra.mxu0 %v2947
  %2971 = vmatmul.bf16.gmra.mxu0 %v2913
  %v2972 = vpop.f32.mrf.mxu0
  %v2973 = vadd.f32 0.0, %v2972
  %v2974 = vpop.f32.mrf.mxu0
  %2975 = vdwg.mxu0
  %v2976 = vadd.f32 %v2881, %v2973
  %s2977 = scalar_lea.vmem %s5, 1024
  %v2978 = vld [vmem:[%s2977] sm:$0xf]
  %v2979 = vld [vmem:[%s2977 + $0x4] sm:$0xf]
  %v2980 = vld [vmem:[%s2977 + $0x8] sm:$0xf]
  %v2981 = vld [vmem:[%s2977 + $0xc] sm:$0xf]
  %v2982 = vld [vmem:[%s2977 + $0x10] sm:$0xf]
  %v2983 = vld [vmem:[%s2977 + $0x14] sm:$0xf]
  %v2984 = vld [vmem:[%s2977 + $0x18] sm:$0xf]
  %v2985 = vld [vmem:[%s2977 + $0x1c] sm:$0xf]
  %v2986 = vld [vmem:[%s2977 + $0x20] sm:$0xf]
  %v2987 = vld [vmem:[%s2977 + $0x24] sm:$0xf]
  %v2988 = vld [vmem:[%s2977 + $0x28] sm:$0xf]
  %v2989 = vld [vmem:[%s2977 + $0x2c] sm:$0xf]
  %v2990 = vld [vmem:[%s2977 + $0x30] sm:$0xf]
  %v2991 = vld [vmem:[%s2977 + $0x34] sm:$0xf]
  %v2992 = vld [vmem:[%s2977 + $0x38] sm:$0xf]
  %v2993 = vld [vmem:[%s2977 + $0x3c] sm:$0xf]
  %v3002 = vunpack.c.l.b16 %v1359
  %v3003 = vunpack.c.l.b16 %v1363
  %v3004 = vunpack.c.l.b16 %v1367
  %v3005 = vunpack.c.l.b16 %v1371
  %v3006 = vunpack.c.l.b16 %v1375
  %v3007 = vunpack.c.l.b16 %v1379
  %v3008 = vunpack.c.l.b16 %v1383
  %v3009 = vunpack.c.l.b16 %v1387
  %v3010 = vpack.c.b16 %v3002, %v3002
  %v3011 = vpack.c.b16 %v3003, %v3003
  %v3012 = vpack.c.b16 %v3004, %v3004
  %v3013 = vpack.c.b16 %v3005, %v3005
  %v3014 = vpack.c.b16 %v3006, %v3006
  %v3015 = vpack.c.b16 %v3007, %v3007
  %v3016 = vpack.c.b16 %v3008, %v3008
  %v3017 = vpack.c.b16 %v3009, %v3009
  %v3018 = vunpack.c.l.b16 %v3010
  %v3019 = vunpack.c.l.b16 %v3011
  %v3020 = vunpack.c.l.b16 %v3012
  %v3021 = vunpack.c.l.b16 %v3013
  %v3022 = vunpack.c.l.b16 %v3014
  %v3023 = vunpack.c.l.b16 %v3015
  %v3024 = vunpack.c.l.b16 %v3016
  %v3025 = vunpack.c.l.b16 %v3017
  %v3026 = vrot.slane %v3019, 7
  %v3027 = vsel %vm1455, %v3026, %v3018
  %v3028 = vrot.slane %v3020, 6
  %v3029 = vsel %vm1458, %v3028, %v3027
  %v3030 = vrot.slane %v3021, 5
  %v3031 = vsel %vm1461, %v3030, %v3029
  %v3032 = vrot.slane %v3022, 4
  %v3033 = vsel %vm1464, %v3032, %v3031
  %v3034 = vrot.slane %v3023, 3
  %v3035 = vsel %vm1467, %v3034, %v3033
  %v3036 = vrot.slane %v3024, 2
  %v3037 = vsel %vm1470, %v3036, %v3035
  %v3038 = vrot.slane %v3025, 1
  %v3039 = vsel %vm1473, %v3038, %v3037
  %v3040 = vpack.c.b16 %v3039, %v3039
  %v3058 = vunpack.c.l.b16 %v2978
  %v3059 = vunpack.c.l.b16 %v2979
  %v3060 = vunpack.c.l.b16 %v2980
  %v3061 = vunpack.c.l.b16 %v2981
  %v3062 = vunpack.c.l.b16 %v2982
  %v3063 = vunpack.c.l.b16 %v2983
  %v3064 = vunpack.c.l.b16 %v2984
  %v3065 = vunpack.c.l.b16 %v2985
  %v3066 = vunpack.c.l.b16 %v2986
  %v3067 = vunpack.c.l.b16 %v2987
  %v3068 = vunpack.c.l.b16 %v2988
  %v3069 = vunpack.c.l.b16 %v2989
  %v3070 = vunpack.c.l.b16 %v2990
  %v3071 = vunpack.c.l.b16 %v2991
  %v3072 = vunpack.c.l.b16 %v2992
  %v3073 = vunpack.c.l.b16 %v2993
  %v3074 = vpack.c.b16 %v3059, %v3058
  %v3075 = vpack.c.b16 %v3061, %v3060
  %v3076 = vpack.c.b16 %v3063, %v3062
  %v3077 = vpack.c.b16 %v3065, %v3064
  %v3078 = vpack.c.b16 %v3067, %v3066
  %v3079 = vpack.c.b16 %v3069, %v3068
  %v3080 = vpack.c.b16 %v3071, %v3070
  %v3081 = vpack.c.b16 %v3073, %v3072
  %3090 = vmatpush.bf16.msra.mxu0 %v3081
  %3091 = vmatpush.bf16.msra.mxu0 %v3080
  %3092 = vmatpush.bf16.msra.mxu0 %v3079
  %3093 = vmatpush.bf16.msra.mxu0 %v3078
  %3094 = vmatpush.bf16.msra.mxu0 %v3077
  %3095 = vmatpush.bf16.msra.mxu0 %v3076
  %3096 = vmatpush.bf16.msra.mxu0 %v3075
  %3097 = vmatpush.bf16.msra.mxu0 %v3074
  %3098 = vmatmul.bf16.gmra.mxu0 %v3040
  %v3099 = vpop.f32.mrf.mxu0
  %v3100 = vadd.f32 0.0, %v3099
  %v3101 = vpop.f32.mrf.mxu0
  %3102 = vdwg.mxu0
  %v3103 = vadd.f32 %v2976, %v3100
  %s3104 = scalar_lea.vmem %s5, 1088
  %v3105 = vld [vmem:[%s3104] sm:$0xf]
  %v3106 = vld [vmem:[%s3104 + $0x4] sm:$0xf]
  %v3107 = vld [vmem:[%s3104 + $0x8] sm:$0xf]
  %v3108 = vld [vmem:[%s3104 + $0xc] sm:$0xf]
  %v3109 = vld [vmem:[%s3104 + $0x10] sm:$0xf]
  %v3110 = vld [vmem:[%s3104 + $0x14] sm:$0xf]
  %v3111 = vld [vmem:[%s3104 + $0x18] sm:$0xf]
  %v3112 = vld [vmem:[%s3104 + $0x1c] sm:$0xf]
  %v3113 = vld [vmem:[%s3104 + $0x20] sm:$0xf]
  %v3114 = vld [vmem:[%s3104 + $0x24] sm:$0xf]
  %v3115 = vld [vmem:[%s3104 + $0x28] sm:$0xf]
  %v3116 = vld [vmem:[%s3104 + $0x2c] sm:$0xf]
  %v3117 = vld [vmem:[%s3104 + $0x30] sm:$0xf]
  %v3118 = vld [vmem:[%s3104 + $0x34] sm:$0xf]
  %v3119 = vld [vmem:[%s3104 + $0x38] sm:$0xf]
  %v3120 = vld [vmem:[%s3104 + $0x3c] sm:$0xf]
  %v3121 = vrot.slane %v3018, 1
  %v3122 = vsel %vm1455, %v3019, %v3121
  %v3123 = vrot.slane %v3020, 7
  %v3124 = vsel %vm1458, %v3123, %v3122
  %v3125 = vrot.slane %v3021, 6
  %v3126 = vsel %vm1461, %v3125, %v3124
  %v3127 = vrot.slane %v3022, 5
  %v3128 = vsel %vm1464, %v3127, %v3126
  %v3129 = vrot.slane %v3023, 4
  %v3130 = vsel %vm1467, %v3129, %v3128
  %v3131 = vrot.slane %v3024, 3
  %v3132 = vsel %vm1470, %v3131, %v3130
  %v3133 = vrot.slane %v3025, 2
  %v3134 = vsel %vm1473, %v3133, %v3132
  %v3135 = vpack.c.b16 %v3134, %v3134
  %v3153 = vunpack.c.l.b16 %v3105
  %v3154 = vunpack.c.l.b16 %v3106
  %v3155 = vunpack.c.l.b16 %v3107
  %v3156 = vunpack.c.l.b16 %v3108
  %v3157 = vunpack.c.l.b16 %v3109
  %v3158 = vunpack.c.l.b16 %v3110
  %v3159 = vunpack.c.l.b16 %v3111
  %v3160 = vunpack.c.l.b16 %v3112
  %v3161 = vunpack.c.l.b16 %v3113
  %v3162 = vunpack.c.l.b16 %v3114
  %v3163 = vunpack.c.l.b16 %v3115
  %v3164 = vunpack.c.l.b16 %v3116
  %v3165 = vunpack.c.l.b16 %v3117
  %v3166 = vunpack.c.l.b16 %v3118
  %v3167 = vunpack.c.l.b16 %v3119
  %v3168 = vunpack.c.l.b16 %v3120
  %v3169 = vpack.c.b16 %v3154, %v3153
  %v3170 = vpack.c.b16 %v3156, %v3155
  %v3171 = vpack.c.b16 %v3158, %v3157
  %v3172 = vpack.c.b16 %v3160, %v3159
  %v3173 = vpack.c.b16 %v3162, %v3161
  %v3174 = vpack.c.b16 %v3164, %v3163
  %v3175 = vpack.c.b16 %v3166, %v3165
  %v3176 = vpack.c.b16 %v3168, %v3167
  %3185 = vmatpush.bf16.msra.mxu0 %v3176
  %3186 = vmatpush.bf16.msra.mxu0 %v3175
  %3187 = vmatpush.bf16.msra.mxu0 %v3174
  %3188 = vmatpush.bf16.msra.mxu0 %v3173
  %3189 = vmatpush.bf16.msra.mxu0 %v3172
  %3190 = vmatpush.bf16.msra.mxu0 %v3171
  %3191 = vmatpush.bf16.msra.mxu0 %v3170
  %3192 = vmatpush.bf16.msra.mxu0 %v3169
  %3193 = vmatmul.bf16.gmra.mxu0 %v3135
  %v3194 = vpop.f32.mrf.mxu0
  %v3195 = vadd.f32 0.0, %v3194
  %v3196 = vpop.f32.mrf.mxu0
  %3197 = vdwg.mxu0
  %v3198 = vadd.f32 %v3103, %v3195
  %s3199 = scalar_lea.vmem %s5, 1152
  %v3200 = vld [vmem:[%s3199] sm:$0xf]
  %v3201 = vld [vmem:[%s3199 + $0x4] sm:$0xf]
  %v3202 = vld [vmem:[%s3199 + $0x8] sm:$0xf]
  %v3203 = vld [vmem:[%s3199 + $0xc] sm:$0xf]
  %v3204 = vld [vmem:[%s3199 + $0x10] sm:$0xf]
  %v3205 = vld [vmem:[%s3199 + $0x14] sm:$0xf]
  %v3206 = vld [vmem:[%s3199 + $0x18] sm:$0xf]
  %v3207 = vld [vmem:[%s3199 + $0x1c] sm:$0xf]
  %v3208 = vld [vmem:[%s3199 + $0x20] sm:$0xf]
  %v3209 = vld [vmem:[%s3199 + $0x24] sm:$0xf]
  %v3210 = vld [vmem:[%s3199 + $0x28] sm:$0xf]
  %v3211 = vld [vmem:[%s3199 + $0x2c] sm:$0xf]
  %v3212 = vld [vmem:[%s3199 + $0x30] sm:$0xf]
  %v3213 = vld [vmem:[%s3199 + $0x34] sm:$0xf]
  %v3214 = vld [vmem:[%s3199 + $0x38] sm:$0xf]
  %v3215 = vld [vmem:[%s3199 + $0x3c] sm:$0xf]
  %v3216 = vrot.slane %v3018, 2
  %v3217 = vrot.slane %v3019, 1
  %v3218 = vsel %vm1455, %v3217, %v3216
  %v3219 = vsel %vm1458, %v3020, %v3218
  %v3220 = vrot.slane %v3021, 7
  %v3221 = vsel %vm1461, %v3220, %v3219
  %v3222 = vrot.slane %v3022, 6
  %v3223 = vsel %vm1464, %v3222, %v3221
  %v3224 = vrot.slane %v3023, 5
  %v3225 = vsel %vm1467, %v3224, %v3223
  %v3226 = vrot.slane %v3024, 4
  %v3227 = vsel %vm1470, %v3226, %v3225
  %v3228 = vrot.slane %v3025, 3
  %v3229 = vsel %vm1473, %v3228, %v3227
  %v3230 = vpack.c.b16 %v3229, %v3229
  %v3248 = vunpack.c.l.b16 %v3200
  %v3249 = vunpack.c.l.b16 %v3201
  %v3250 = vunpack.c.l.b16 %v3202
  %v3251 = vunpack.c.l.b16 %v3203
  %v3252 = vunpack.c.l.b16 %v3204
  %v3253 = vunpack.c.l.b16 %v3205
  %v3254 = vunpack.c.l.b16 %v3206
  %v3255 = vunpack.c.l.b16 %v3207
  %v3256 = vunpack.c.l.b16 %v3208
  %v3257 = vunpack.c.l.b16 %v3209
  %v3258 = vunpack.c.l.b16 %v3210
  %v3259 = vunpack.c.l.b16 %v3211
  %v3260 = vunpack.c.l.b16 %v3212
  %v3261 = vunpack.c.l.b16 %v3213
  %v3262 = vunpack.c.l.b16 %v3214
  %v3263 = vunpack.c.l.b16 %v3215
  %v3264 = vpack.c.b16 %v3249, %v3248
  %v3265 = vpack.c.b16 %v3251, %v3250
  %v3266 = vpack.c.b16 %v3253, %v3252
  %v3267 = vpack.c.b16 %v3255, %v3254
  %v3268 = vpack.c.b16 %v3257, %v3256
  %v3269 = vpack.c.b16 %v3259, %v3258
  %v3270 = vpack.c.b16 %v3261, %v3260
  %v3271 = vpack.c.b16 %v3263, %v3262
  %3280 = vmatpush.bf16.msra.mxu0 %v3271
  %3281 = vmatpush.bf16.msra.mxu0 %v3270
  %3282 = vmatpush.bf16.msra.mxu0 %v3269
  %3283 = vmatpush.bf16.msra.mxu0 %v3268
  %3284 = vmatpush.bf16.msra.mxu0 %v3267
  %3285 = vmatpush.bf16.msra.mxu0 %v3266
  %3286 = vmatpush.bf16.msra.mxu0 %v3265
  %3287 = vmatpush.bf16.msra.mxu0 %v3264
  %3288 = vmatmul.bf16.gmra.mxu0 %v3230
  %v3289 = vpop.f32.mrf.mxu0
  %v3290 = vadd.f32 0.0, %v3289
  %v3291 = vpop.f32.mrf.mxu0
  %3292 = vdwg.mxu0
  %v3293 = vadd.f32 %v3198, %v3290
  %s3294 = scalar_lea.vmem %s5, 1216
  %v3295 = vld [vmem:[%s3294] sm:$0xf]
  %v3296 = vld [vmem:[%s3294 + $0x4] sm:$0xf]
  %v3297 = vld [vmem:[%s3294 + $0x8] sm:$0xf]
  %v3298 = vld [vmem:[%s3294 + $0xc] sm:$0xf]
  %v3299 = vld [vmem:[%s3294 + $0x10] sm:$0xf]
  %v3300 = vld [vmem:[%s3294 + $0x14] sm:$0xf]
  %v3301 = vld [vmem:[%s3294 + $0x18] sm:$0xf]
  %v3302 = vld [vmem:[%s3294 + $0x1c] sm:$0xf]
  %v3303 = vld [vmem:[%s3294 + $0x20] sm:$0xf]
  %v3304 = vld [vmem:[%s3294 + $0x24] sm:$0xf]
  %v3305 = vld [vmem:[%s3294 + $0x28] sm:$0xf]
  %v3306 = vld [vmem:[%s3294 + $0x2c] sm:$0xf]
  %v3307 = vld [vmem:[%s3294 + $0x30] sm:$0xf]
  %v3308 = vld [vmem:[%s3294 + $0x34] sm:$0xf]
  %v3309 = vld [vmem:[%s3294 + $0x38] sm:$0xf]
  %v3310 = vld [vmem:[%s3294 + $0x3c] sm:$0xf]
  %v3311 = vrot.slane %v3018, 3
  %v3312 = vrot.slane %v3019, 2
  %v3313 = vsel %vm1455, %v3312, %v3311
  %v3314 = vrot.slane %v3020, 1
  %v3315 = vsel %vm1458, %v3314, %v3313
  %v3316 = vsel %vm1461, %v3021, %v3315
  %v3317 = vrot.slane %v3022, 7
  %v3318 = vsel %vm1464, %v3317, %v3316
  %v3319 = vrot.slane %v3023, 6
  %v3320 = vsel %vm1467, %v3319, %v3318
  %v3321 = vrot.slane %v3024, 5
  %v3322 = vsel %vm1470, %v3321, %v3320
  %v3323 = vrot.slane %v3025, 4
  %v3324 = vsel %vm1473, %v3323, %v3322
  %v3325 = vpack.c.b16 %v3324, %v3324
  %v3343 = vunpack.c.l.b16 %v3295
  %v3344 = vunpack.c.l.b16 %v3296
  %v3345 = vunpack.c.l.b16 %v3297
  %v3346 = vunpack.c.l.b16 %v3298
  %v3347 = vunpack.c.l.b16 %v3299
  %v3348 = vunpack.c.l.b16 %v3300
  %v3349 = vunpack.c.l.b16 %v3301
  %v3350 = vunpack.c.l.b16 %v3302
  %v3351 = vunpack.c.l.b16 %v3303
  %v3352 = vunpack.c.l.b16 %v3304
  %v3353 = vunpack.c.l.b16 %v3305
  %v3354 = vunpack.c.l.b16 %v3306
  %v3355 = vunpack.c.l.b16 %v3307
  %v3356 = vunpack.c.l.b16 %v3308
  %v3357 = vunpack.c.l.b16 %v3309
  %v3358 = vunpack.c.l.b16 %v3310
  %v3359 = vpack.c.b16 %v3344, %v3343
  %v3360 = vpack.c.b16 %v3346, %v3345
  %v3361 = vpack.c.b16 %v3348, %v3347
  %v3362 = vpack.c.b16 %v3350, %v3349
  %v3363 = vpack.c.b16 %v3352, %v3351
  %v3364 = vpack.c.b16 %v3354, %v3353
  %v3365 = vpack.c.b16 %v3356, %v3355
  %v3366 = vpack.c.b16 %v3358, %v3357
  %3375 = vmatpush.bf16.msra.mxu0 %v3366
  %3376 = vmatpush.bf16.msra.mxu0 %v3365
  %3377 = vmatpush.bf16.msra.mxu0 %v3364
  %3378 = vmatpush.bf16.msra.mxu0 %v3363
  %3379 = vmatpush.bf16.msra.mxu0 %v3362
  %3380 = vmatpush.bf16.msra.mxu0 %v3361
  %3381 = vmatpush.bf16.msra.mxu0 %v3360
  %3382 = vmatpush.bf16.msra.mxu0 %v3359
  %3383 = vmatmul.bf16.gmra.mxu0 %v3325
  %v3384 = vpop.f32.mrf.mxu0
  %v3385 = vadd.f32 0.0, %v3384
  %v3386 = vpop.f32.mrf.mxu0
  %3387 = vdwg.mxu0
  %v3388 = vadd.f32 %v3293, %v3385
  %s3389 = scalar_lea.vmem %s5, 1280
  %v3390 = vld [vmem:[%s3389] sm:$0xf]
  %v3391 = vld [vmem:[%s3389 + $0x4] sm:$0xf]
  %v3392 = vld [vmem:[%s3389 + $0x8] sm:$0xf]
  %v3393 = vld [vmem:[%s3389 + $0xc] sm:$0xf]
  %v3394 = vld [vmem:[%s3389 + $0x10] sm:$0xf]
  %v3395 = vld [vmem:[%s3389 + $0x14] sm:$0xf]
  %v3396 = vld [vmem:[%s3389 + $0x18] sm:$0xf]
  %v3397 = vld [vmem:[%s3389 + $0x1c] sm:$0xf]
  %v3398 = vld [vmem:[%s3389 + $0x20] sm:$0xf]
  %v3399 = vld [vmem:[%s3389 + $0x24] sm:$0xf]
  %v3400 = vld [vmem:[%s3389 + $0x28] sm:$0xf]
  %v3401 = vld [vmem:[%s3389 + $0x2c] sm:$0xf]
  %v3402 = vld [vmem:[%s3389 + $0x30] sm:$0xf]
  %v3403 = vld [vmem:[%s3389 + $0x34] sm:$0xf]
  %v3404 = vld [vmem:[%s3389 + $0x38] sm:$0xf]
  %v3405 = vld [vmem:[%s3389 + $0x3c] sm:$0xf]
  %v3406 = vrot.slane %v3018, 4
  %v3407 = vrot.slane %v3019, 3
  %v3408 = vsel %vm1455, %v3407, %v3406
  %v3409 = vrot.slane %v3020, 2
  %v3410 = vsel %vm1458, %v3409, %v3408
  %v3411 = vrot.slane %v3021, 1
  %v3412 = vsel %vm1461, %v3411, %v3410
  %v3413 = vsel %vm1464, %v3022, %v3412
  %v3414 = vrot.slane %v3023, 7
  %v3415 = vsel %vm1467, %v3414, %v3413
  %v3416 = vrot.slane %v3024, 6
  %v3417 = vsel %vm1470, %v3416, %v3415
  %v3418 = vrot.slane %v3025, 5
  %v3419 = vsel %vm1473, %v3418, %v3417
  %v3420 = vpack.c.b16 %v3419, %v3419
  %v3438 = vunpack.c.l.b16 %v3390
  %v3439 = vunpack.c.l.b16 %v3391
  %v3440 = vunpack.c.l.b16 %v3392
  %v3441 = vunpack.c.l.b16 %v3393
  %v3442 = vunpack.c.l.b16 %v3394
  %v3443 = vunpack.c.l.b16 %v3395
  %v3444 = vunpack.c.l.b16 %v3396
  %v3445 = vunpack.c.l.b16 %v3397
  %v3446 = vunpack.c.l.b16 %v3398
  %v3447 = vunpack.c.l.b16 %v3399
  %v3448 = vunpack.c.l.b16 %v3400
  %v3449 = vunpack.c.l.b16 %v3401
  %v3450 = vunpack.c.l.b16 %v3402
  %v3451 = vunpack.c.l.b16 %v3403
  %v3452 = vunpack.c.l.b16 %v3404
  %v3453 = vunpack.c.l.b16 %v3405
  %v3454 = vpack.c.b16 %v3439, %v3438
  %v3455 = vpack.c.b16 %v3441, %v3440
  %v3456 = vpack.c.b16 %v3443, %v3442
  %v3457 = vpack.c.b16 %v3445, %v3444
  %v3458 = vpack.c.b16 %v3447, %v3446
  %v3459 = vpack.c.b16 %v3449, %v3448
  %v3460 = vpack.c.b16 %v3451, %v3450
  %v3461 = vpack.c.b16 %v3453, %v3452
  %3470 = vmatpush.bf16.msra.mxu0 %v3461
  %3471 = vmatpush.bf16.msra.mxu0 %v3460
  %3472 = vmatpush.bf16.msra.mxu0 %v3459
  %3473 = vmatpush.bf16.msra.mxu0 %v3458
  %3474 = vmatpush.bf16.msra.mxu0 %v3457
  %3475 = vmatpush.bf16.msra.mxu0 %v3456
  %3476 = vmatpush.bf16.msra.mxu0 %v3455
  %3477 = vmatpush.bf16.msra.mxu0 %v3454
  %3478 = vmatmul.bf16.gmra.mxu0 %v3420
  %v3479 = vpop.f32.mrf.mxu0
  %v3480 = vadd.f32 0.0, %v3479
  %v3481 = vpop.f32.mrf.mxu0
  %3482 = vdwg.mxu0
  %v3483 = vadd.f32 %v3388, %v3480
  %s3484 = scalar_lea.vmem %s5, 1344
  %v3485 = vld [vmem:[%s3484] sm:$0xf]
  %v3486 = vld [vmem:[%s3484 + $0x4] sm:$0xf]
  %v3487 = vld [vmem:[%s3484 + $0x8] sm:$0xf]
  %v3488 = vld [vmem:[%s3484 + $0xc] sm:$0xf]
  %v3489 = vld [vmem:[%s3484 + $0x10] sm:$0xf]
  %v3490 = vld [vmem:[%s3484 + $0x14] sm:$0xf]
  %v3491 = vld [vmem:[%s3484 + $0x18] sm:$0xf]
  %v3492 = vld [vmem:[%s3484 + $0x1c] sm:$0xf]
  %v3493 = vld [vmem:[%s3484 + $0x20] sm:$0xf]
  %v3494 = vld [vmem:[%s3484 + $0x24] sm:$0xf]
  %v3495 = vld [vmem:[%s3484 + $0x28] sm:$0xf]
  %v3496 = vld [vmem:[%s3484 + $0x2c] sm:$0xf]
  %v3497 = vld [vmem:[%s3484 + $0x30] sm:$0xf]
  %v3498 = vld [vmem:[%s3484 + $0x34] sm:$0xf]
  %v3499 = vld [vmem:[%s3484 + $0x38] sm:$0xf]
  %v3500 = vld [vmem:[%s3484 + $0x3c] sm:$0xf]
  %v3501 = vrot.slane %v3018, 5
  %v3502 = vrot.slane %v3019, 4
  %v3503 = vsel %vm1455, %v3502, %v3501
  %v3504 = vrot.slane %v3020, 3
  %v3505 = vsel %vm1458, %v3504, %v3503
  %v3506 = vrot.slane %v3021, 2
  %v3507 = vsel %vm1461, %v3506, %v3505
  %v3508 = vrot.slane %v3022, 1
  %v3509 = vsel %vm1464, %v3508, %v3507
  %v3510 = vsel %vm1467, %v3023, %v3509
  %v3511 = vrot.slane %v3024, 7
  %v3512 = vsel %vm1470, %v3511, %v3510
  %v3513 = vrot.slane %v3025, 6
  %v3514 = vsel %vm1473, %v3513, %v3512
  %v3515 = vpack.c.b16 %v3514, %v3514
  %v3533 = vunpack.c.l.b16 %v3485
  %v3534 = vunpack.c.l.b16 %v3486
  %v3535 = vunpack.c.l.b16 %v3487
  %v3536 = vunpack.c.l.b16 %v3488
  %v3537 = vunpack.c.l.b16 %v3489
  %v3538 = vunpack.c.l.b16 %v3490
  %v3539 = vunpack.c.l.b16 %v3491
  %v3540 = vunpack.c.l.b16 %v3492
  %v3541 = vunpack.c.l.b16 %v3493
  %v3542 = vunpack.c.l.b16 %v3494
  %v3543 = vunpack.c.l.b16 %v3495
  %v3544 = vunpack.c.l.b16 %v3496
  %v3545 = vunpack.c.l.b16 %v3497
  %v3546 = vunpack.c.l.b16 %v3498
  %v3547 = vunpack.c.l.b16 %v3499
  %v3548 = vunpack.c.l.b16 %v3500
  %v3549 = vpack.c.b16 %v3534, %v3533
  %v3550 = vpack.c.b16 %v3536, %v3535
  %v3551 = vpack.c.b16 %v3538, %v3537
  %v3552 = vpack.c.b16 %v3540, %v3539
  %v3553 = vpack.c.b16 %v3542, %v3541
  %v3554 = vpack.c.b16 %v3544, %v3543
  %v3555 = vpack.c.b16 %v3546, %v3545
  %v3556 = vpack.c.b16 %v3548, %v3547
  %3565 = vmatpush.bf16.msra.mxu0 %v3556
  %3566 = vmatpush.bf16.msra.mxu0 %v3555
  %3567 = vmatpush.bf16.msra.mxu0 %v3554
  %3568 = vmatpush.bf16.msra.mxu0 %v3553
  %3569 = vmatpush.bf16.msra.mxu0 %v3552
  %3570 = vmatpush.bf16.msra.mxu0 %v3551
  %3571 = vmatpush.bf16.msra.mxu0 %v3550
  %3572 = vmatpush.bf16.msra.mxu0 %v3549
  %3573 = vmatmul.bf16.gmra.mxu0 %v3515
  %v3574 = vpop.f32.mrf.mxu0
  %v3575 = vadd.f32 0.0, %v3574
  %v3576 = vpop.f32.mrf.mxu0
  %3577 = vdwg.mxu0
  %v3578 = vadd.f32 %v3483, %v3575
  %s3579 = scalar_lea.vmem %s5, 1408
  %v3580 = vld [vmem:[%s3579] sm:$0xf]
  %v3581 = vld [vmem:[%s3579 + $0x4] sm:$0xf]
  %v3582 = vld [vmem:[%s3579 + $0x8] sm:$0xf]
  %v3583 = vld [vmem:[%s3579 + $0xc] sm:$0xf]
  %v3584 = vld [vmem:[%s3579 + $0x10] sm:$0xf]
  %v3585 = vld [vmem:[%s3579 + $0x14] sm:$0xf]
  %v3586 = vld [vmem:[%s3579 + $0x18] sm:$0xf]
  %v3587 = vld [vmem:[%s3579 + $0x1c] sm:$0xf]
  %v3588 = vld [vmem:[%s3579 + $0x20] sm:$0xf]
  %v3589 = vld [vmem:[%s3579 + $0x24] sm:$0xf]
  %v3590 = vld [vmem:[%s3579 + $0x28] sm:$0xf]
  %v3591 = vld [vmem:[%s3579 + $0x2c] sm:$0xf]
  %v3592 = vld [vmem:[%s3579 + $0x30] sm:$0xf]
  %v3593 = vld [vmem:[%s3579 + $0x34] sm:$0xf]
  %v3594 = vld [vmem:[%s3579 + $0x38] sm:$0xf]
  %v3595 = vld [vmem:[%s3579 + $0x3c] sm:$0xf]
  %v3596 = vrot.slane %v3018, 6
  %v3597 = vrot.slane %v3019, 5
  %v3598 = vsel %vm1455, %v3597, %v3596
  %v3599 = vrot.slane %v3020, 4
  %v3600 = vsel %vm1458, %v3599, %v3598
  %v3601 = vrot.slane %v3021, 3
  %v3602 = vsel %vm1461, %v3601, %v3600
  %v3603 = vrot.slane %v3022, 2
  %v3604 = vsel %vm1464, %v3603, %v3602
  %v3605 = vrot.slane %v3023, 1
  %v3606 = vsel %vm1467, %v3605, %v3604
  %v3607 = vsel %vm1470, %v3024, %v3606
  %v3608 = vrot.slane %v3025, 7
  %v3609 = vsel %vm1473, %v3608, %v3607
  %v3610 = vpack.c.b16 %v3609, %v3609
  %v3628 = vunpack.c.l.b16 %v3580
  %v3629 = vunpack.c.l.b16 %v3581
  %v3630 = vunpack.c.l.b16 %v3582
  %v3631 = vunpack.c.l.b16 %v3583
  %v3632 = vunpack.c.l.b16 %v3584
  %v3633 = vunpack.c.l.b16 %v3585
  %v3634 = vunpack.c.l.b16 %v3586
  %v3635 = vunpack.c.l.b16 %v3587
  %v3636 = vunpack.c.l.b16 %v3588
  %v3637 = vunpack.c.l.b16 %v3589
  %v3638 = vunpack.c.l.b16 %v3590
  %v3639 = vunpack.c.l.b16 %v3591
  %v3640 = vunpack.c.l.b16 %v3592
  %v3641 = vunpack.c.l.b16 %v3593
  %v3642 = vunpack.c.l.b16 %v3594
  %v3643 = vunpack.c.l.b16 %v3595
  %v3644 = vpack.c.b16 %v3629, %v3628
  %v3645 = vpack.c.b16 %v3631, %v3630
  %v3646 = vpack.c.b16 %v3633, %v3632
  %v3647 = vpack.c.b16 %v3635, %v3634
  %v3648 = vpack.c.b16 %v3637, %v3636
  %v3649 = vpack.c.b16 %v3639, %v3638
  %v3650 = vpack.c.b16 %v3641, %v3640
  %v3651 = vpack.c.b16 %v3643, %v3642
  %3660 = vmatpush.bf16.msra.mxu0 %v3651
  %3661 = vmatpush.bf16.msra.mxu0 %v3650
  %3662 = vmatpush.bf16.msra.mxu0 %v3649
  %3663 = vmatpush.bf16.msra.mxu0 %v3648
  %3664 = vmatpush.bf16.msra.mxu0 %v3647
  %3665 = vmatpush.bf16.msra.mxu0 %v3646
  %3666 = vmatpush.bf16.msra.mxu0 %v3645
  %3667 = vmatpush.bf16.msra.mxu0 %v3644
  %3668 = vmatmul.bf16.gmra.mxu0 %v3610
  %v3669 = vpop.f32.mrf.mxu0
  %v3670 = vadd.f32 0.0, %v3669
  %v3671 = vpop.f32.mrf.mxu0
  %3672 = vdwg.mxu0
  %v3673 = vadd.f32 %v3578, %v3670
  %s3674 = scalar_lea.vmem %s5, 1472
  %v3675 = vld [vmem:[%s3674] sm:$0xf]
  %v3676 = vld [vmem:[%s3674 + $0x4] sm:$0xf]
  %v3677 = vld [vmem:[%s3674 + $0x8] sm:$0xf]
  %v3678 = vld [vmem:[%s3674 + $0xc] sm:$0xf]
  %v3679 = vld [vmem:[%s3674 + $0x10] sm:$0xf]
  %v3680 = vld [vmem:[%s3674 + $0x14] sm:$0xf]
  %v3681 = vld [vmem:[%s3674 + $0x18] sm:$0xf]
  %v3682 = vld [vmem:[%s3674 + $0x1c] sm:$0xf]
  %v3683 = vld [vmem:[%s3674 + $0x20] sm:$0xf]
  %v3684 = vld [vmem:[%s3674 + $0x24] sm:$0xf]
  %v3685 = vld [vmem:[%s3674 + $0x28] sm:$0xf]
  %v3686 = vld [vmem:[%s3674 + $0x2c] sm:$0xf]
  %v3687 = vld [vmem:[%s3674 + $0x30] sm:$0xf]
  %v3688 = vld [vmem:[%s3674 + $0x34] sm:$0xf]
  %v3689 = vld [vmem:[%s3674 + $0x38] sm:$0xf]
  %v3690 = vld [vmem:[%s3674 + $0x3c] sm:$0xf]
  %v3691 = vrot.slane %v3018, 7
  %v3692 = vrot.slane %v3019, 6
  %v3693 = vsel %vm1455, %v3692, %v3691
  %v3694 = vrot.slane %v3020, 5
  %v3695 = vsel %vm1458, %v3694, %v3693
  %v3696 = vrot.slane %v3021, 4
  %v3697 = vsel %vm1461, %v3696, %v3695
  %v3698 = vrot.slane %v3022, 3
  %v3699 = vsel %vm1464, %v3698, %v3697
  %v3700 = vrot.slane %v3023, 2
  %v3701 = vsel %vm1467, %v3700, %v3699
  %v3702 = vrot.slane %v3024, 1
  %v3703 = vsel %vm1470, %v3702, %v3701
  %v3704 = vsel %vm1473, %v3025, %v3703
  %v3705 = vpack.c.b16 %v3704, %v3704
  %v3723 = vunpack.c.l.b16 %v3675
  %v3724 = vunpack.c.l.b16 %v3676
  %v3725 = vunpack.c.l.b16 %v3677
  %v3726 = vunpack.c.l.b16 %v3678
  %v3727 = vunpack.c.l.b16 %v3679
  %v3728 = vunpack.c.l.b16 %v3680
  %v3729 = vunpack.c.l.b16 %v3681
  %v3730 = vunpack.c.l.b16 %v3682
  %v3731 = vunpack.c.l.b16 %v3683
  %v3732 = vunpack.c.l.b16 %v3684
  %v3733 = vunpack.c.l.b16 %v3685
  %v3734 = vunpack.c.l.b16 %v3686
  %v3735 = vunpack.c.l.b16 %v3687
  %v3736 = vunpack.c.l.b16 %v3688
  %v3737 = vunpack.c.l.b16 %v3689
  %v3738 = vunpack.c.l.b16 %v3690
  %v3739 = vpack.c.b16 %v3724, %v3723
  %v3740 = vpack.c.b16 %v3726, %v3725
  %v3741 = vpack.c.b16 %v3728, %v3727
  %v3742 = vpack.c.b16 %v3730, %v3729
  %v3743 = vpack.c.b16 %v3732, %v3731
  %v3744 = vpack.c.b16 %v3734, %v3733
  %v3745 = vpack.c.b16 %v3736, %v3735
  %v3746 = vpack.c.b16 %v3738, %v3737
  %3755 = vmatpush.bf16.msra.mxu0 %v3746
  %3756 = vmatpush.bf16.msra.mxu0 %v3745
  %3757 = vmatpush.bf16.msra.mxu0 %v3744
  %3758 = vmatpush.bf16.msra.mxu0 %v3743
  %3759 = vmatpush.bf16.msra.mxu0 %v3742
  %3760 = vmatpush.bf16.msra.mxu0 %v3741
  %3761 = vmatpush.bf16.msra.mxu0 %v3740
  %3762 = vmatpush.bf16.msra.mxu0 %v3739
  %3763 = vmatmul.bf16.gmra.mxu0 %v3705
  %v3764 = vpop.f32.mrf.mxu0
  %v3765 = vadd.f32 0.0, %v3764
  %v3766 = vpop.f32.mrf.mxu0
  %3767 = vdwg.mxu0
  %v3768 = vadd.f32 %v3673, %v3765
  %s3769 = scalar_lea.vmem %s5, 1536
  %v3770 = vld [vmem:[%s3769] sm:$0xf]
  %v3771 = vld [vmem:[%s3769 + $0x4] sm:$0xf]
  %v3772 = vld [vmem:[%s3769 + $0x8] sm:$0xf]
  %v3773 = vld [vmem:[%s3769 + $0xc] sm:$0xf]
  %v3774 = vld [vmem:[%s3769 + $0x10] sm:$0xf]
  %v3775 = vld [vmem:[%s3769 + $0x14] sm:$0xf]
  %v3776 = vld [vmem:[%s3769 + $0x18] sm:$0xf]
  %v3777 = vld [vmem:[%s3769 + $0x1c] sm:$0xf]
  %v3778 = vld [vmem:[%s3769 + $0x20] sm:$0xf]
  %v3779 = vld [vmem:[%s3769 + $0x24] sm:$0xf]
  %v3780 = vld [vmem:[%s3769 + $0x28] sm:$0xf]
  %v3781 = vld [vmem:[%s3769 + $0x2c] sm:$0xf]
  %v3782 = vld [vmem:[%s3769 + $0x30] sm:$0xf]
  %v3783 = vld [vmem:[%s3769 + $0x34] sm:$0xf]
  %v3784 = vld [vmem:[%s3769 + $0x38] sm:$0xf]
  %v3785 = vld [vmem:[%s3769 + $0x3c] sm:$0xf]
  %v3794 = vunpack.c.l.b16 %v1360
  %v3795 = vunpack.c.l.b16 %v1364
  %v3796 = vunpack.c.l.b16 %v1368
  %v3797 = vunpack.c.l.b16 %v1372
  %v3798 = vunpack.c.l.b16 %v1376
  %v3799 = vunpack.c.l.b16 %v1380
  %v3800 = vunpack.c.l.b16 %v1384
  %v3801 = vunpack.c.l.b16 %v1388
  %v3802 = vpack.c.b16 %v3794, %v3794
  %v3803 = vpack.c.b16 %v3795, %v3795
  %v3804 = vpack.c.b16 %v3796, %v3796
  %v3805 = vpack.c.b16 %v3797, %v3797
  %v3806 = vpack.c.b16 %v3798, %v3798
  %v3807 = vpack.c.b16 %v3799, %v3799
  %v3808 = vpack.c.b16 %v3800, %v3800
  %v3809 = vpack.c.b16 %v3801, %v3801
  %v3810 = vunpack.c.l.b16 %v3802
  %v3811 = vunpack.c.l.b16 %v3803
  %v3812 = vunpack.c.l.b16 %v3804
  %v3813 = vunpack.c.l.b16 %v3805
  %v3814 = vunpack.c.l.b16 %v3806
  %v3815 = vunpack.c.l.b16 %v3807
  %v3816 = vunpack.c.l.b16 %v3808
  %v3817 = vunpack.c.l.b16 %v3809
  %v3818 = vrot.slane %v3811, 7
  %v3819 = vsel %vm1455, %v3818, %v3810
  %v3820 = vrot.slane %v3812, 6
  %v3821 = vsel %vm1458, %v3820, %v3819
  %v3822 = vrot.slane %v3813, 5
  %v3823 = vsel %vm1461, %v3822, %v3821
  %v3824 = vrot.slane %v3814, 4
  %v3825 = vsel %vm1464, %v3824, %v3823
  %v3826 = vrot.slane %v3815, 3
  %v3827 = vsel %vm1467, %v3826, %v3825
  %v3828 = vrot.slane %v3816, 2
  %v3829 = vsel %vm1470, %v3828, %v3827
  %v3830 = vrot.slane %v3817, 1
  %v3831 = vsel %vm1473, %v3830, %v3829
  %v3832 = vpack.c.b16 %v3831, %v3831
  %v3850 = vunpack.c.l.b16 %v3770
  %v3851 = vunpack.c.l.b16 %v3771
  %v3852 = vunpack.c.l.b16 %v3772
  %v3853 = vunpack.c.l.b16 %v3773
  %v3854 = vunpack.c.l.b16 %v3774
  %v3855 = vunpack.c.l.b16 %v3775
  %v3856 = vunpack.c.l.b16 %v3776
  %v3857 = vunpack.c.l.b16 %v3777
  %v3858 = vunpack.c.l.b16 %v3778
  %v3859 = vunpack.c.l.b16 %v3779
  %v3860 = vunpack.c.l.b16 %v3780
  %v3861 = vunpack.c.l.b16 %v3781
  %v3862 = vunpack.c.l.b16 %v3782
  %v3863 = vunpack.c.l.b16 %v3783
  %v3864 = vunpack.c.l.b16 %v3784
  %v3865 = vunpack.c.l.b16 %v3785
  %v3866 = vpack.c.b16 %v3851, %v3850
  %v3867 = vpack.c.b16 %v3853, %v3852
  %v3868 = vpack.c.b16 %v3855, %v3854
  %v3869 = vpack.c.b16 %v3857, %v3856
  %v3870 = vpack.c.b16 %v3859, %v3858
  %v3871 = vpack.c.b16 %v3861, %v3860
  %v3872 = vpack.c.b16 %v3863, %v3862
  %v3873 = vpack.c.b16 %v3865, %v3864
  %3882 = vmatpush.bf16.msra.mxu0 %v3873
  %3883 = vmatpush.bf16.msra.mxu0 %v3872
  %3884 = vmatpush.bf16.msra.mxu0 %v3871
  %3885 = vmatpush.bf16.msra.mxu0 %v3870
  %3886 = vmatpush.bf16.msra.mxu0 %v3869
  %3887 = vmatpush.bf16.msra.mxu0 %v3868
  %3888 = vmatpush.bf16.msra.mxu0 %v3867
  %3889 = vmatpush.bf16.msra.mxu0 %v3866
  %3890 = vmatmul.bf16.gmra.mxu0 %v3832
  %v3891 = vpop.f32.mrf.mxu0
  %v3892 = vadd.f32 0.0, %v3891
  %v3893 = vpop.f32.mrf.mxu0
  %3894 = vdwg.mxu0
  %v3895 = vadd.f32 %v3768, %v3892
  %s3896 = scalar_lea.vmem %s5, 1600
  %v3897 = vld [vmem:[%s3896] sm:$0xf]
  %v3898 = vld [vmem:[%s3896 + $0x4] sm:$0xf]
  %v3899 = vld [vmem:[%s3896 + $0x8] sm:$0xf]
  %v3900 = vld [vmem:[%s3896 + $0xc] sm:$0xf]
  %v3901 = vld [vmem:[%s3896 + $0x10] sm:$0xf]
  %v3902 = vld [vmem:[%s3896 + $0x14] sm:$0xf]
  %v3903 = vld [vmem:[%s3896 + $0x18] sm:$0xf]
  %v3904 = vld [vmem:[%s3896 + $0x1c] sm:$0xf]
  %v3905 = vld [vmem:[%s3896 + $0x20] sm:$0xf]
  %v3906 = vld [vmem:[%s3896 + $0x24] sm:$0xf]
  %v3907 = vld [vmem:[%s3896 + $0x28] sm:$0xf]
  %v3908 = vld [vmem:[%s3896 + $0x2c] sm:$0xf]
  %v3909 = vld [vmem:[%s3896 + $0x30] sm:$0xf]
  %v3910 = vld [vmem:[%s3896 + $0x34] sm:$0xf]
  %v3911 = vld [vmem:[%s3896 + $0x38] sm:$0xf]
  %v3912 = vld [vmem:[%s3896 + $0x3c] sm:$0xf]
  %v3913 = vrot.slane %v3810, 1
  %v3914 = vsel %vm1455, %v3811, %v3913
  %v3915 = vrot.slane %v3812, 7
  %v3916 = vsel %vm1458, %v3915, %v3914
  %v3917 = vrot.slane %v3813, 6
  %v3918 = vsel %vm1461, %v3917, %v3916
  %v3919 = vrot.slane %v3814, 5
  %v3920 = vsel %vm1464, %v3919, %v3918
  %v3921 = vrot.slane %v3815, 4
  %v3922 = vsel %vm1467, %v3921, %v3920
  %v3923 = vrot.slane %v3816, 3
  %v3924 = vsel %vm1470, %v3923, %v3922
  %v3925 = vrot.slane %v3817, 2
  %v3926 = vsel %vm1473, %v3925, %v3924
  %v3927 = vpack.c.b16 %v3926, %v3926
  %v3945 = vunpack.c.l.b16 %v3897
  %v3946 = vunpack.c.l.b16 %v3898
  %v3947 = vunpack.c.l.b16 %v3899
  %v3948 = vunpack.c.l.b16 %v3900
  %v3949 = vunpack.c.l.b16 %v3901
  %v3950 = vunpack.c.l.b16 %v3902
  %v3951 = vunpack.c.l.b16 %v3903
  %v3952 = vunpack.c.l.b16 %v3904
  %v3953 = vunpack.c.l.b16 %v3905
  %v3954 = vunpack.c.l.b16 %v3906
  %v3955 = vunpack.c.l.b16 %v3907
  %v3956 = vunpack.c.l.b16 %v3908
  %v3957 = vunpack.c.l.b16 %v3909
  %v3958 = vunpack.c.l.b16 %v3910
  %v3959 = vunpack.c.l.b16 %v3911
  %v3960 = vunpack.c.l.b16 %v3912
  %v3961 = vpack.c.b16 %v3946, %v3945
  %v3962 = vpack.c.b16 %v3948, %v3947
  %v3963 = vpack.c.b16 %v3950, %v3949
  %v3964 = vpack.c.b16 %v3952, %v3951
  %v3965 = vpack.c.b16 %v3954, %v3953
  %v3966 = vpack.c.b16 %v3956, %v3955
  %v3967 = vpack.c.b16 %v3958, %v3957
  %v3968 = vpack.c.b16 %v3960, %v3959
  %3977 = vmatpush.bf16.msra.mxu0 %v3968
  %3978 = vmatpush.bf16.msra.mxu0 %v3967
  %3979 = vmatpush.bf16.msra.mxu0 %v3966
  %3980 = vmatpush.bf16.msra.mxu0 %v3965
  %3981 = vmatpush.bf16.msra.mxu0 %v3964
  %3982 = vmatpush.bf16.msra.mxu0 %v3963
  %3983 = vmatpush.bf16.msra.mxu0 %v3962
  %3984 = vmatpush.bf16.msra.mxu0 %v3961
  %3985 = vmatmul.bf16.gmra.mxu0 %v3927
  %v3986 = vpop.f32.mrf.mxu0
  %v3987 = vadd.f32 0.0, %v3986
  %v3988 = vpop.f32.mrf.mxu0
  %3989 = vdwg.mxu0
  %v3990 = vadd.f32 %v3895, %v3987
  %s3991 = scalar_lea.vmem %s5, 1664
  %v3992 = vld [vmem:[%s3991] sm:$0xf]
  %v3993 = vld [vmem:[%s3991 + $0x4] sm:$0xf]
  %v3994 = vld [vmem:[%s3991 + $0x8] sm:$0xf]
  %v3995 = vld [vmem:[%s3991 + $0xc] sm:$0xf]
  %v3996 = vld [vmem:[%s3991 + $0x10] sm:$0xf]
  %v3997 = vld [vmem:[%s3991 + $0x14] sm:$0xf]
  %v3998 = vld [vmem:[%s3991 + $0x18] sm:$0xf]
  %v3999 = vld [vmem:[%s3991 + $0x1c] sm:$0xf]
  %v4000 = vld [vmem:[%s3991 + $0x20] sm:$0xf]
  %v4001 = vld [vmem:[%s3991 + $0x24] sm:$0xf]
  %v4002 = vld [vmem:[%s3991 + $0x28] sm:$0xf]
  %v4003 = vld [vmem:[%s3991 + $0x2c] sm:$0xf]
  %v4004 = vld [vmem:[%s3991 + $0x30] sm:$0xf]
  %v4005 = vld [vmem:[%s3991 + $0x34] sm:$0xf]
  %v4006 = vld [vmem:[%s3991 + $0x38] sm:$0xf]
  %v4007 = vld [vmem:[%s3991 + $0x3c] sm:$0xf]
  %v4008 = vrot.slane %v3810, 2
  %v4009 = vrot.slane %v3811, 1
  %v4010 = vsel %vm1455, %v4009, %v4008
  %v4011 = vsel %vm1458, %v3812, %v4010
  %v4012 = vrot.slane %v3813, 7
  %v4013 = vsel %vm1461, %v4012, %v4011
  %v4014 = vrot.slane %v3814, 6
  %v4015 = vsel %vm1464, %v4014, %v4013
  %v4016 = vrot.slane %v3815, 5
  %v4017 = vsel %vm1467, %v4016, %v4015
  %v4018 = vrot.slane %v3816, 4
  %v4019 = vsel %vm1470, %v4018, %v4017
  %v4020 = vrot.slane %v3817, 3
  %v4021 = vsel %vm1473, %v4020, %v4019
  %v4022 = vpack.c.b16 %v4021, %v4021
  %v4040 = vunpack.c.l.b16 %v3992
  %v4041 = vunpack.c.l.b16 %v3993
  %v4042 = vunpack.c.l.b16 %v3994
  %v4043 = vunpack.c.l.b16 %v3995
  %v4044 = vunpack.c.l.b16 %v3996
  %v4045 = vunpack.c.l.b16 %v3997
  %v4046 = vunpack.c.l.b16 %v3998
  %v4047 = vunpack.c.l.b16 %v3999
  %v4048 = vunpack.c.l.b16 %v4000
  %v4049 = vunpack.c.l.b16 %v4001
  %v4050 = vunpack.c.l.b16 %v4002
  %v4051 = vunpack.c.l.b16 %v4003
  %v4052 = vunpack.c.l.b16 %v4004
  %v4053 = vunpack.c.l.b16 %v4005
  %v4054 = vunpack.c.l.b16 %v4006
  %v4055 = vunpack.c.l.b16 %v4007
  %v4056 = vpack.c.b16 %v4041, %v4040
  %v4057 = vpack.c.b16 %v4043, %v4042
  %v4058 = vpack.c.b16 %v4045, %v4044
  %v4059 = vpack.c.b16 %v4047, %v4046
  %v4060 = vpack.c.b16 %v4049, %v4048
  %v4061 = vpack.c.b16 %v4051, %v4050
  %v4062 = vpack.c.b16 %v4053, %v4052
  %v4063 = vpack.c.b16 %v4055, %v4054
  %4072 = vmatpush.bf16.msra.mxu0 %v4063
  %4073 = vmatpush.bf16.msra.mxu0 %v4062
  %4074 = vmatpush.bf16.msra.mxu0 %v4061
  %4075 = vmatpush.bf16.msra.mxu0 %v4060
  %4076 = vmatpush.bf16.msra.mxu0 %v4059
  %4077 = vmatpush.bf16.msra.mxu0 %v4058
  %4078 = vmatpush.bf16.msra.mxu0 %v4057
  %4079 = vmatpush.bf16.msra.mxu0 %v4056
  %4080 = vmatmul.bf16.gmra.mxu0 %v4022
  %v4081 = vpop.f32.mrf.mxu0
  %v4082 = vadd.f32 0.0, %v4081
  %v4083 = vpop.f32.mrf.mxu0
  %4084 = vdwg.mxu0
  %v4085 = vadd.f32 %v3990, %v4082
  %s4086 = scalar_lea.vmem %s5, 1728
  %v4087 = vld [vmem:[%s4086] sm:$0xf]
  %v4088 = vld [vmem:[%s4086 + $0x4] sm:$0xf]
  %v4089 = vld [vmem:[%s4086 + $0x8] sm:$0xf]
  %v4090 = vld [vmem:[%s4086 + $0xc] sm:$0xf]
  %v4091 = vld [vmem:[%s4086 + $0x10] sm:$0xf]
  %v4092 = vld [vmem:[%s4086 + $0x14] sm:$0xf]
  %v4093 = vld [vmem:[%s4086 + $0x18] sm:$0xf]
  %v4094 = vld [vmem:[%s4086 + $0x1c] sm:$0xf]
  %v4095 = vld [vmem:[%s4086 + $0x20] sm:$0xf]
  %v4096 = vld [vmem:[%s4086 + $0x24] sm:$0xf]
  %v4097 = vld [vmem:[%s4086 + $0x28] sm:$0xf]
  %v4098 = vld [vmem:[%s4086 + $0x2c] sm:$0xf]
  %v4099 = vld [vmem:[%s4086 + $0x30] sm:$0xf]
  %v4100 = vld [vmem:[%s4086 + $0x34] sm:$0xf]
  %v4101 = vld [vmem:[%s4086 + $0x38] sm:$0xf]
  %v4102 = vld [vmem:[%s4086 + $0x3c] sm:$0xf]
  %v4103 = vrot.slane %v3810, 3
  %v4104 = vrot.slane %v3811, 2
  %v4105 = vsel %vm1455, %v4104, %v4103
  %v4106 = vrot.slane %v3812, 1
  %v4107 = vsel %vm1458, %v4106, %v4105
  %v4108 = vsel %vm1461, %v3813, %v4107
  %v4109 = vrot.slane %v3814, 7
  %v4110 = vsel %vm1464, %v4109, %v4108
  %v4111 = vrot.slane %v3815, 6
  %v4112 = vsel %vm1467, %v4111, %v4110
  %v4113 = vrot.slane %v3816, 5
  %v4114 = vsel %vm1470, %v4113, %v4112
  %v4115 = vrot.slane %v3817, 4
  %v4116 = vsel %vm1473, %v4115, %v4114
  %v4117 = vpack.c.b16 %v4116, %v4116
  %v4135 = vunpack.c.l.b16 %v4087
  %v4136 = vunpack.c.l.b16 %v4088
  %v4137 = vunpack.c.l.b16 %v4089
  %v4138 = vunpack.c.l.b16 %v4090
  %v4139 = vunpack.c.l.b16 %v4091
  %v4140 = vunpack.c.l.b16 %v4092
  %v4141 = vunpack.c.l.b16 %v4093
  %v4142 = vunpack.c.l.b16 %v4094
  %v4143 = vunpack.c.l.b16 %v4095
  %v4144 = vunpack.c.l.b16 %v4096
  %v4145 = vunpack.c.l.b16 %v4097
  %v4146 = vunpack.c.l.b16 %v4098
  %v4147 = vunpack.c.l.b16 %v4099
  %v4148 = vunpack.c.l.b16 %v4100
  %v4149 = vunpack.c.l.b16 %v4101
  %v4150 = vunpack.c.l.b16 %v4102
  %v4151 = vpack.c.b16 %v4136, %v4135
  %v4152 = vpack.c.b16 %v4138, %v4137
  %v4153 = vpack.c.b16 %v4140, %v4139
  %v4154 = vpack.c.b16 %v4142, %v4141
  %v4155 = vpack.c.b16 %v4144, %v4143
  %v4156 = vpack.c.b16 %v4146, %v4145
  %v4157 = vpack.c.b16 %v4148, %v4147
  %v4158 = vpack.c.b16 %v4150, %v4149
  %4167 = vmatpush.bf16.msra.mxu0 %v4158
  %4168 = vmatpush.bf16.msra.mxu0 %v4157
  %4169 = vmatpush.bf16.msra.mxu0 %v4156
  %4170 = vmatpush.bf16.msra.mxu0 %v4155
  %4171 = vmatpush.bf16.msra.mxu0 %v4154
  %4172 = vmatpush.bf16.msra.mxu0 %v4153
  %4173 = vmatpush.bf16.msra.mxu0 %v4152
  %4174 = vmatpush.bf16.msra.mxu0 %v4151
  %4175 = vmatmul.bf16.gmra.mxu0 %v4117
  %v4176 = vpop.f32.mrf.mxu0
  %v4177 = vadd.f32 0.0, %v4176
  %v4178 = vpop.f32.mrf.mxu0
  %4179 = vdwg.mxu0
  %v4180 = vadd.f32 %v4085, %v4177
  %s4181 = scalar_lea.vmem %s5, 1792
  %v4182 = vld [vmem:[%s4181] sm:$0xf]
  %v4183 = vld [vmem:[%s4181 + $0x4] sm:$0xf]
  %v4184 = vld [vmem:[%s4181 + $0x8] sm:$0xf]
  %v4185 = vld [vmem:[%s4181 + $0xc] sm:$0xf]
  %v4186 = vld [vmem:[%s4181 + $0x10] sm:$0xf]
  %v4187 = vld [vmem:[%s4181 + $0x14] sm:$0xf]
  %v4188 = vld [vmem:[%s4181 + $0x18] sm:$0xf]
  %v4189 = vld [vmem:[%s4181 + $0x1c] sm:$0xf]
  %v4190 = vld [vmem:[%s4181 + $0x20] sm:$0xf]
  %v4191 = vld [vmem:[%s4181 + $0x24] sm:$0xf]
  %v4192 = vld [vmem:[%s4181 + $0x28] sm:$0xf]
  %v4193 = vld [vmem:[%s4181 + $0x2c] sm:$0xf]
  %v4194 = vld [vmem:[%s4181 + $0x30] sm:$0xf]
  %v4195 = vld [vmem:[%s4181 + $0x34] sm:$0xf]
  %v4196 = vld [vmem:[%s4181 + $0x38] sm:$0xf]
  %v4197 = vld [vmem:[%s4181 + $0x3c] sm:$0xf]
  %v4198 = vrot.slane %v3810, 4
  %v4199 = vrot.slane %v3811, 3
  %v4200 = vsel %vm1455, %v4199, %v4198
  %v4201 = vrot.slane %v3812, 2
  %v4202 = vsel %vm1458, %v4201, %v4200
  %v4203 = vrot.slane %v3813, 1
  %v4204 = vsel %vm1461, %v4203, %v4202
  %v4205 = vsel %vm1464, %v3814, %v4204
  %v4206 = vrot.slane %v3815, 7
  %v4207 = vsel %vm1467, %v4206, %v4205
  %v4208 = vrot.slane %v3816, 6
  %v4209 = vsel %vm1470, %v4208, %v4207
  %v4210 = vrot.slane %v3817, 5
  %v4211 = vsel %vm1473, %v4210, %v4209
  %v4212 = vpack.c.b16 %v4211, %v4211
  %v4230 = vunpack.c.l.b16 %v4182
  %v4231 = vunpack.c.l.b16 %v4183
  %v4232 = vunpack.c.l.b16 %v4184
  %v4233 = vunpack.c.l.b16 %v4185
  %v4234 = vunpack.c.l.b16 %v4186
  %v4235 = vunpack.c.l.b16 %v4187
  %v4236 = vunpack.c.l.b16 %v4188
  %v4237 = vunpack.c.l.b16 %v4189
  %v4238 = vunpack.c.l.b16 %v4190
  %v4239 = vunpack.c.l.b16 %v4191
  %v4240 = vunpack.c.l.b16 %v4192
  %v4241 = vunpack.c.l.b16 %v4193
  %v4242 = vunpack.c.l.b16 %v4194
  %v4243 = vunpack.c.l.b16 %v4195
  %v4244 = vunpack.c.l.b16 %v4196
  %v4245 = vunpack.c.l.b16 %v4197
  %v4246 = vpack.c.b16 %v4231, %v4230
  %v4247 = vpack.c.b16 %v4233, %v4232
  %v4248 = vpack.c.b16 %v4235, %v4234
  %v4249 = vpack.c.b16 %v4237, %v4236
  %v4250 = vpack.c.b16 %v4239, %v4238
  %v4251 = vpack.c.b16 %v4241, %v4240
  %v4252 = vpack.c.b16 %v4243, %v4242
  %v4253 = vpack.c.b16 %v4245, %v4244
  %4262 = vmatpush.bf16.msra.mxu0 %v4253
  %4263 = vmatpush.bf16.msra.mxu0 %v4252
  %4264 = vmatpush.bf16.msra.mxu0 %v4251
  %4265 = vmatpush.bf16.msra.mxu0 %v4250
  %4266 = vmatpush.bf16.msra.mxu0 %v4249
  %4267 = vmatpush.bf16.msra.mxu0 %v4248
  %4268 = vmatpush.bf16.msra.mxu0 %v4247
  %4269 = vmatpush.bf16.msra.mxu0 %v4246
  %4270 = vmatmul.bf16.gmra.mxu0 %v4212
  %v4271 = vpop.f32.mrf.mxu0
  %v4272 = vadd.f32 0.0, %v4271
  %v4273 = vpop.f32.mrf.mxu0
  %4274 = vdwg.mxu0
  %v4275 = vadd.f32 %v4180, %v4272
  %s4276 = scalar_lea.vmem %s5, 1856
  %v4277 = vld [vmem:[%s4276] sm:$0xf]
  %v4278 = vld [vmem:[%s4276 + $0x4] sm:$0xf]
  %v4279 = vld [vmem:[%s4276 + $0x8] sm:$0xf]
  %v4280 = vld [vmem:[%s4276 + $0xc] sm:$0xf]
  %v4281 = vld [vmem:[%s4276 + $0x10] sm:$0xf]
  %v4282 = vld [vmem:[%s4276 + $0x14] sm:$0xf]
  %v4283 = vld [vmem:[%s4276 + $0x18] sm:$0xf]
  %v4284 = vld [vmem:[%s4276 + $0x1c] sm:$0xf]
  %v4285 = vld [vmem:[%s4276 + $0x20] sm:$0xf]
  %v4286 = vld [vmem:[%s4276 + $0x24] sm:$0xf]
  %v4287 = vld [vmem:[%s4276 + $0x28] sm:$0xf]
  %v4288 = vld [vmem:[%s4276 + $0x2c] sm:$0xf]
  %v4289 = vld [vmem:[%s4276 + $0x30] sm:$0xf]
  %v4290 = vld [vmem:[%s4276 + $0x34] sm:$0xf]
  %v4291 = vld [vmem:[%s4276 + $0x38] sm:$0xf]
  %v4292 = vld [vmem:[%s4276 + $0x3c] sm:$0xf]
  %v4293 = vrot.slane %v3810, 5
  %v4294 = vrot.slane %v3811, 4
  %v4295 = vsel %vm1455, %v4294, %v4293
  %v4296 = vrot.slane %v3812, 3
  %v4297 = vsel %vm1458, %v4296, %v4295
  %v4298 = vrot.slane %v3813, 2
  %v4299 = vsel %vm1461, %v4298, %v4297
  %v4300 = vrot.slane %v3814, 1
  %v4301 = vsel %vm1464, %v4300, %v4299
  %v4302 = vsel %vm1467, %v3815, %v4301
  %v4303 = vrot.slane %v3816, 7
  %v4304 = vsel %vm1470, %v4303, %v4302
  %v4305 = vrot.slane %v3817, 6
  %v4306 = vsel %vm1473, %v4305, %v4304
  %v4307 = vpack.c.b16 %v4306, %v4306
  %v4325 = vunpack.c.l.b16 %v4277
  %v4326 = vunpack.c.l.b16 %v4278
  %v4327 = vunpack.c.l.b16 %v4279
  %v4328 = vunpack.c.l.b16 %v4280
  %v4329 = vunpack.c.l.b16 %v4281
  %v4330 = vunpack.c.l.b16 %v4282
  %v4331 = vunpack.c.l.b16 %v4283
  %v4332 = vunpack.c.l.b16 %v4284
  %v4333 = vunpack.c.l.b16 %v4285
  %v4334 = vunpack.c.l.b16 %v4286
  %v4335 = vunpack.c.l.b16 %v4287
  %v4336 = vunpack.c.l.b16 %v4288
  %v4337 = vunpack.c.l.b16 %v4289
  %v4338 = vunpack.c.l.b16 %v4290
  %v4339 = vunpack.c.l.b16 %v4291
  %v4340 = vunpack.c.l.b16 %v4292
  %v4341 = vpack.c.b16 %v4326, %v4325
  %v4342 = vpack.c.b16 %v4328, %v4327
  %v4343 = vpack.c.b16 %v4330, %v4329
  %v4344 = vpack.c.b16 %v4332, %v4331
  %v4345 = vpack.c.b16 %v4334, %v4333
  %v4346 = vpack.c.b16 %v4336, %v4335
  %v4347 = vpack.c.b16 %v4338, %v4337
  %v4348 = vpack.c.b16 %v4340, %v4339
  %4357 = vmatpush.bf16.msra.mxu0 %v4348
  %4358 = vmatpush.bf16.msra.mxu0 %v4347
  %4359 = vmatpush.bf16.msra.mxu0 %v4346
  %4360 = vmatpush.bf16.msra.mxu0 %v4345
  %4361 = vmatpush.bf16.msra.mxu0 %v4344
  %4362 = vmatpush.bf16.msra.mxu0 %v4343
  %4363 = vmatpush.bf16.msra.mxu0 %v4342
  %4364 = vmatpush.bf16.msra.mxu0 %v4341
  %4365 = vmatmul.bf16.gmra.mxu0 %v4307
  %v4366 = vpop.f32.mrf.mxu0
  %v4367 = vadd.f32 0.0, %v4366
  %v4368 = vpop.f32.mrf.mxu0
  %4369 = vdwg.mxu0
  %v4370 = vadd.f32 %v4275, %v4367
  %s4371 = scalar_lea.vmem %s5, 1920
  %v4372 = vld [vmem:[%s4371] sm:$0xf]
  %v4373 = vld [vmem:[%s4371 + $0x4] sm:$0xf]
  %v4374 = vld [vmem:[%s4371 + $0x8] sm:$0xf]
  %v4375 = vld [vmem:[%s4371 + $0xc] sm:$0xf]
  %v4376 = vld [vmem:[%s4371 + $0x10] sm:$0xf]
  %v4377 = vld [vmem:[%s4371 + $0x14] sm:$0xf]
  %v4378 = vld [vmem:[%s4371 + $0x18] sm:$0xf]
  %v4379 = vld [vmem:[%s4371 + $0x1c] sm:$0xf]
  %v4380 = vld [vmem:[%s4371 + $0x20] sm:$0xf]
  %v4381 = vld [vmem:[%s4371 + $0x24] sm:$0xf]
  %v4382 = vld [vmem:[%s4371 + $0x28] sm:$0xf]
  %v4383 = vld [vmem:[%s4371 + $0x2c] sm:$0xf]
  %v4384 = vld [vmem:[%s4371 + $0x30] sm:$0xf]
  %v4385 = vld [vmem:[%s4371 + $0x34] sm:$0xf]
  %v4386 = vld [vmem:[%s4371 + $0x38] sm:$0xf]
  %v4387 = vld [vmem:[%s4371 + $0x3c] sm:$0xf]
  %v4388 = vrot.slane %v3810, 6
  %v4389 = vrot.slane %v3811, 5
  %v4390 = vsel %vm1455, %v4389, %v4388
  %v4391 = vrot.slane %v3812, 4
  %v4392 = vsel %vm1458, %v4391, %v4390
  %v4393 = vrot.slane %v3813, 3
  %v4394 = vsel %vm1461, %v4393, %v4392
  %v4395 = vrot.slane %v3814, 2
  %v4396 = vsel %vm1464, %v4395, %v4394
  %v4397 = vrot.slane %v3815, 1
  %v4398 = vsel %vm1467, %v4397, %v4396
  %v4399 = vsel %vm1470, %v3816, %v4398
  %v4400 = vrot.slane %v3817, 7
  %v4401 = vsel %vm1473, %v4400, %v4399
  %v4402 = vpack.c.b16 %v4401, %v4401
  %v4420 = vunpack.c.l.b16 %v4372
  %v4421 = vunpack.c.l.b16 %v4373
  %v4422 = vunpack.c.l.b16 %v4374
  %v4423 = vunpack.c.l.b16 %v4375
  %v4424 = vunpack.c.l.b16 %v4376
  %v4425 = vunpack.c.l.b16 %v4377
  %v4426 = vunpack.c.l.b16 %v4378
  %v4427 = vunpack.c.l.b16 %v4379
  %v4428 = vunpack.c.l.b16 %v4380
  %v4429 = vunpack.c.l.b16 %v4381
  %v4430 = vunpack.c.l.b16 %v4382
  %v4431 = vunpack.c.l.b16 %v4383
  %v4432 = vunpack.c.l.b16 %v4384
  %v4433 = vunpack.c.l.b16 %v4385
  %v4434 = vunpack.c.l.b16 %v4386
  %v4435 = vunpack.c.l.b16 %v4387
  %v4436 = vpack.c.b16 %v4421, %v4420
  %v4437 = vpack.c.b16 %v4423, %v4422
  %v4438 = vpack.c.b16 %v4425, %v4424
  %v4439 = vpack.c.b16 %v4427, %v4426
  %v4440 = vpack.c.b16 %v4429, %v4428
  %v4441 = vpack.c.b16 %v4431, %v4430
  %v4442 = vpack.c.b16 %v4433, %v4432
  %v4443 = vpack.c.b16 %v4435, %v4434
  %4452 = vmatpush.bf16.msra.mxu0 %v4443
  %4453 = vmatpush.bf16.msra.mxu0 %v4442
  %4454 = vmatpush.bf16.msra.mxu0 %v4441
  %4455 = vmatpush.bf16.msra.mxu0 %v4440
  %4456 = vmatpush.bf16.msra.mxu0 %v4439
  %4457 = vmatpush.bf16.msra.mxu0 %v4438
  %4458 = vmatpush.bf16.msra.mxu0 %v4437
  %4459 = vmatpush.bf16.msra.mxu0 %v4436
  %4460 = vmatmul.bf16.gmra.mxu0 %v4402
  %v4461 = vpop.f32.mrf.mxu0
  %v4462 = vadd.f32 0.0, %v4461
  %v4463 = vpop.f32.mrf.mxu0
  %4464 = vdwg.mxu0
  %v4465 = vadd.f32 %v4370, %v4462
  %s4466 = scalar_lea.vmem %s5, 1984
  %v4467 = vld [vmem:[%s4466] sm:$0xf]
  %v4468 = vld [vmem:[%s4466 + $0x4] sm:$0xf]
  %v4469 = vld [vmem:[%s4466 + $0x8] sm:$0xf]
  %v4470 = vld [vmem:[%s4466 + $0xc] sm:$0xf]
  %v4471 = vld [vmem:[%s4466 + $0x10] sm:$0xf]
  %v4472 = vld [vmem:[%s4466 + $0x14] sm:$0xf]
  %v4473 = vld [vmem:[%s4466 + $0x18] sm:$0xf]
  %v4474 = vld [vmem:[%s4466 + $0x1c] sm:$0xf]
  %v4475 = vld [vmem:[%s4466 + $0x20] sm:$0xf]
  %v4476 = vld [vmem:[%s4466 + $0x24] sm:$0xf]
  %v4477 = vld [vmem:[%s4466 + $0x28] sm:$0xf]
  %v4478 = vld [vmem:[%s4466 + $0x2c] sm:$0xf]
  %v4479 = vld [vmem:[%s4466 + $0x30] sm:$0xf]
  %v4480 = vld [vmem:[%s4466 + $0x34] sm:$0xf]
  %v4481 = vld [vmem:[%s4466 + $0x38] sm:$0xf]
  %v4482 = vld [vmem:[%s4466 + $0x3c] sm:$0xf]
  %v4483 = vrot.slane %v3810, 7
  %v4484 = vrot.slane %v3811, 6
  %v4485 = vsel %vm1455, %v4484, %v4483
  %v4486 = vrot.slane %v3812, 5
  %v4487 = vsel %vm1458, %v4486, %v4485
  %v4488 = vrot.slane %v3813, 4
  %v4489 = vsel %vm1461, %v4488, %v4487
  %v4490 = vrot.slane %v3814, 3
  %v4491 = vsel %vm1464, %v4490, %v4489
  %v4492 = vrot.slane %v3815, 2
  %v4493 = vsel %vm1467, %v4492, %v4491
  %v4494 = vrot.slane %v3816, 1
  %v4495 = vsel %vm1470, %v4494, %v4493
  %v4496 = vsel %vm1473, %v3817, %v4495
  %v4497 = vpack.c.b16 %v4496, %v4496
  %v4515 = vunpack.c.l.b16 %v4467
  %v4516 = vunpack.c.l.b16 %v4468
  %v4517 = vunpack.c.l.b16 %v4469
  %v4518 = vunpack.c.l.b16 %v4470
  %v4519 = vunpack.c.l.b16 %v4471
  %v4520 = vunpack.c.l.b16 %v4472
  %v4521 = vunpack.c.l.b16 %v4473
  %v4522 = vunpack.c.l.b16 %v4474
  %v4523 = vunpack.c.l.b16 %v4475
  %v4524 = vunpack.c.l.b16 %v4476
  %v4525 = vunpack.c.l.b16 %v4477
  %v4526 = vunpack.c.l.b16 %v4478
  %v4527 = vunpack.c.l.b16 %v4479
  %v4528 = vunpack.c.l.b16 %v4480
  %v4529 = vunpack.c.l.b16 %v4481
  %v4530 = vunpack.c.l.b16 %v4482
  %v4531 = vpack.c.b16 %v4516, %v4515
  %v4532 = vpack.c.b16 %v4518, %v4517
  %v4533 = vpack.c.b16 %v4520, %v4519
  %v4534 = vpack.c.b16 %v4522, %v4521
  %v4535 = vpack.c.b16 %v4524, %v4523
  %v4536 = vpack.c.b16 %v4526, %v4525
  %v4537 = vpack.c.b16 %v4528, %v4527
  %v4538 = vpack.c.b16 %v4530, %v4529
  %4547 = vmatpush.bf16.msra.mxu0 %v4538
  %4548 = vmatpush.bf16.msra.mxu0 %v4537
  %4549 = vmatpush.bf16.msra.mxu0 %v4536
  %4550 = vmatpush.bf16.msra.mxu0 %v4535
  %4551 = vmatpush.bf16.msra.mxu0 %v4534
  %4552 = vmatpush.bf16.msra.mxu0 %v4533
  %4553 = vmatpush.bf16.msra.mxu0 %v4532
  %4554 = vmatpush.bf16.msra.mxu0 %v4531
  %4555 = vmatmul.bf16.gmra.mxu0 %v4497
  %v4556 = vpop.f32.mrf.mxu0
  %v4557 = vadd.f32 0.0, %v4556
  %v4558 = vpop.f32.mrf.mxu0
  %4559 = vdwg.mxu0
  %v4560 = vadd.f32 %v4465, %v4557
  %v4561 = vld [vmem:[%s6] sm:$0x1]
  %v4563 = vperm.slane %v4561, 0
  %v4565 = vadd.f32 %v4560, %v4563
  %v4566 = vmax.f32 %v4565, 0.0
  %v4567 = vpack.c.bf16 %v4566, %v4566
  %v4568 = vld [vmem:[%s7] sm:$0xf]
  %v4569 = vld [vmem:[%s7 + $0x4] sm:$0xf]
  %v4570 = vld [vmem:[%s7 + $0x8] sm:$0xf]
  %v4571 = vld [vmem:[%s7 + $0xc] sm:$0xf]
  %v4572 = vld [vmem:[%s7 + $0x10] sm:$0xf]
  %v4573 = vld [vmem:[%s7 + $0x14] sm:$0xf]
  %v4574 = vld [vmem:[%s7 + $0x18] sm:$0xf]
  %v4575 = vld [vmem:[%s7 + $0x1c] sm:$0xf]
  %v4576 = vld [vmem:[%s7 + $0x20] sm:$0xf]
  %v4577 = vld [vmem:[%s7 + $0x24] sm:$0xf]
  %v4578 = vld [vmem:[%s7 + $0x28] sm:$0xf]
  %v4579 = vld [vmem:[%s7 + $0x2c] sm:$0xf]
  %v4580 = vld [vmem:[%s7 + $0x30] sm:$0xf]
  %v4581 = vld [vmem:[%s7 + $0x34] sm:$0xf]
  %v4582 = vld [vmem:[%s7 + $0x38] sm:$0xf]
  %v4583 = vld [vmem:[%s7 + $0x3c] sm:$0xf]
  %v4584 = vld [vmem:[%s8] sm:$0x1]
  %v4586 = vperm.slane %v4584, 0
  %v4604 = vunpack.c.l.b16 %v4568
  %v4605 = vunpack.c.l.b16 %v4569
  %v4606 = vunpack.c.l.b16 %v4570
  %v4607 = vunpack.c.l.b16 %v4571
  %v4608 = vunpack.c.l.b16 %v4572
  %v4609 = vunpack.c.l.b16 %v4573
  %v4610 = vunpack.c.l.b16 %v4574
  %v4611 = vunpack.c.l.b16 %v4575
  %v4612 = vunpack.c.l.b16 %v4576
  %v4613 = vunpack.c.l.b16 %v4577
  %v4614 = vunpack.c.l.b16 %v4578
  %v4615 = vunpack.c.l.b16 %v4579
  %v4616 = vunpack.c.l.b16 %v4580
  %v4617 = vunpack.c.l.b16 %v4581
  %v4618 = vunpack.c.l.b16 %v4582
  %v4619 = vunpack.c.l.b16 %v4583
  %v4620 = vpack.c.b16 %v4605, %v4604
  %v4621 = vpack.c.b16 %v4607, %v4606
  %v4622 = vpack.c.b16 %v4609, %v4608
  %v4623 = vpack.c.b16 %v4611, %v4610
  %v4624 = vpack.c.b16 %v4613, %v4612
  %v4625 = vpack.c.b16 %v4615, %v4614
  %v4626 = vpack.c.b16 %v4617, %v4616
  %v4627 = vpack.c.b16 %v4619, %v4618
  %4636 = vmatpush.bf16.msra.mxu0 %v4627
  %4637 = vmatpush.bf16.msra.mxu0 %v4626
  %4638 = vmatpush.bf16.msra.mxu0 %v4625
  %4639 = vmatpush.bf16.msra.mxu0 %v4624
  %4640 = vmatpush.bf16.msra.mxu0 %v4623
  %4641 = vmatpush.bf16.msra.mxu0 %v4622
  %4642 = vmatpush.bf16.msra.mxu0 %v4621
  %4643 = vmatpush.bf16.msra.mxu0 %v4620
  %4644 = vmatmul.bf16.gmra.mxu0 %v4567
  %v4645 = vpop.f32.mrf.mxu0
  %v4646 = vadd.f32 %v4586, %v4645
  %v4647 = vpop.f32.mrf.mxu0
  %4648 = vdwg.mxu0
  %v4649 = vmax.f32 %v4646, 0.0
  %v4650 = vpack.c.bf16 %v4649, %v4649
  %v4651 = vld [vmem:[%s9] sm:$0xf]
  %v4652 = vld [vmem:[%s9 + $0x4] sm:$0xf]
  %v4653 = vld [vmem:[%s9 + $0x8] sm:$0xf]
  %v4654 = vld [vmem:[%s9 + $0xc] sm:$0xf]
  %v4655 = vld [vmem:[%s9 + $0x10] sm:$0xf]
  %v4656 = vld [vmem:[%s9 + $0x14] sm:$0xf]
  %v4657 = vld [vmem:[%s9 + $0x18] sm:$0xf]
  %v4658 = vld [vmem:[%s9 + $0x1c] sm:$0xf]
  %v4659 = vld [vmem:[%s10] sm:$0x1]
  %v4661 = vperm.slane %v4659, 0
  %v4671 = vunpack.c.l.b16 %v4651
  %v4672 = vunpack.c.l.b16 %v4652
  %v4673 = vunpack.c.l.b16 %v4653
  %v4674 = vunpack.c.l.b16 %v4654
  %v4675 = vunpack.c.l.b16 %v4655
  %v4676 = vunpack.c.l.b16 %v4656
  %v4677 = vunpack.c.l.b16 %v4657
  %v4678 = vunpack.c.l.b16 %v4658
  %v4679 = vpack.c.b16 %v4672, %v4671
  %v4680 = vpack.c.b16 %v4674, %v4673
  %v4681 = vpack.c.b16 %v4676, %v4675
  %v4682 = vpack.c.b16 %v4678, %v4677
  %vm4687 = vcmask 523264
  %v4689 = vsel %vm4687, %v4650, 0
  %4691 = vmatpush.bf16.msra.mxu0 0
  %4692 = vmatpush.bf16.msra.mxu0 0
  %4693 = vmatpush.bf16.msra.mxu0 0
  %4694 = vmatpush.bf16.msra.mxu0 0
  %4695 = vmatpush.bf16.msra.mxu0 %v4682
  %4696 = vmatpush.bf16.msra.mxu0 %v4681
  %4697 = vmatpush.bf16.msra.mxu0 %v4680
  %4698 = vmatpush.bf16.msra.mxu0 %v4679
  %4699 = vmatmul.bf16.gmra.mxu0 %v4689
  %v4700 = vpop.f32.mrf.mxu0
  %v4701 = vadd.f32 %v4661, %v4700
  %v4702 = vpop.f32.mrf.mxu0
  %4703 = vdwg.mxu0
  %vm4704 = vcmask 154624
  %v4705 = vsel %vm4704, %v4701, -inf
  %4706 = vmax.xlane.f32.xlu0 %v4705
  %v4707 = vpop.xlane.xlu0 %4706
  %v4708 = vsub.f32 %v4701, %v4707
  %v4709 = vmul.f32 %v4708, 1.442695
  %v4710 = vpow.pop %v4709
  %v4711 = vsel %vm4704, %v4710, 0.0
  %4712 = vadd.xlane.f32.xlu0 %v4711
  %v4713 = vpop.xlane.xlu0 %4712
  %v4714 = vrcp.pop %v4713
  %v4715 = vmul.f32 %v4713, %v4714
  %v4716 = vsub.f32 1.0, %v4715
  %v4717 = vmul.f32 %v4714, %v4716
  %v4718 = vadd.f32 %v4714, %v4717
  %vm4719 = vweird.f32 %v4713
  %vm4720 = vweird.f32 %v4714
  %vm4721 = vmor %vm4719, %vm4720
  %v4722 = vsel %vm4721, %v4714, %v4718
  %v4723 = vand.u32 2147483647, %v4713
  %vm4724 = vcmp.eq.f32.partialorder %v4723, 8.507059e+37
  %v4725 = vand.u32 %v4713, 2147483648
  %v4726 = vor.u32 1.1754944e-38, %v4725
  %v4727 = vsel %vm4724, %v4726, %v4722
  %v4728 = vmul.f32 %v4710, %v4727
  %4729 = vst.msk [vmem:[%s11] sm:$0xff] %vm4704, %v4728
  // Predicated region
  $region53: #{mnist_addition_cnn.1} parent=0 // pred_check
    _
  $region54: #{mnist_addition_cnn.1} parent=0 // pred_check_branch
    %4731 = sbr.rel (0) target = $region56
  $region55: #{mnist_addition_cnn.1} parent=0 // pred_region
    _
  $region56: #{mnist_addition_cnn.1} parent=0 // pred_fallthru
    _
  // Predicated region
  $region57: #{mnist_addition_cnn.1} parent=0 // pred_check
    _
  $region58: #{mnist_addition_cnn.1} parent=0 // pred_check_branch
    %4733 = sbr.rel (0) target = $region60
  $region59: #{mnist_addition_cnn.1} parent=0 // pred_region
    _
  $region60: #{mnist_addition_cnn.1} parent=0 // pred_fallthru
    _

</llo_original>
